<compile_context>
chip_gen: v7x
topology: tpu7x:2x2x1
jax: 0.10.0
libtpu: 0.0.40
codegen_flags: <defaults>
</compile_context>

<pallas_src>
import math
from functools import partial

import jax
import jax.numpy as jnp
from jax.experimental import pallas as pl
from jax.experimental.pallas import tpu as pltpu


# ---------------------------------------------------------------------------
# numerics helpers
# ---------------------------------------------------------------------------

def _fast_recip(x):
    """EUP approximate reciprocal + one Newton step (~f32 accurate, no VALU divide)."""
    r = pl.reciprocal(x, approx=True)
    return r * (2.0 - x * r)


def _erf(x):
    # Abramowitz & Stegun 7.1.26 (|err| ~ 1.5e-7); divide moved to the EUP slot.
    a1, a2, a3, a4, a5 = 0.254829592, -0.284496736, 1.421413741, -1.453152027, 1.061405429
    p = 0.3275911
    sgn = jnp.where(x < 0.0, -1.0, 1.0)
    ax = jnp.abs(x)
    t = _fast_recip(1.0 + p * ax)
    poly = ((((a5 * t + a4) * t + a3) * t + a2) * t + a1) * t
    return sgn * (1.0 - poly * jnp.exp(-ax * ax))


def _gelu_exact(x):
    return 0.5 * x * (1.0 + _erf(x * (1.0 / math.sqrt(2.0))))


# ---------------------------------------------------------------------------
# head-layout helpers (+ feature probes so the script always runs)
# ---------------------------------------------------------------------------

def _split_heads_einshape(x, g):
    # (N, g*hd) -> (g, N, hd): one lane-aware relayout, no per-head slices.
    return pltpu.einshape("n(gd)->gnd", x, g=g)


def _merge_heads_einshape(x):
    # (g, N, hd) -> (N, g*hd)
    return pltpu.einshape("gnd->n(gd)", x)


def _split_heads_slices(x, g):
    hd = x.shape[-1] // g
    return jnp.stack([x[:, i * hd:(i + 1) * hd] for i in range(g)], axis=0)


def _merge_heads_slices(x):
    return jnp.concatenate([x[i] for i in range(x.shape[0])], axis=-1)


def _probe_einshape(dtype):
    """True iff grouped pltpu.einshape lowers with the expected semantics for `dtype`."""
    n, g, hd = 16, 2, 32
    x = jnp.arange(n * g * hd, dtype=jnp.float32).reshape(n, g * hd).astype(dtype)

    def kern(x_ref, split_ref, merged_ref):
        h = pltpu.einshape("n(gd)->gnd", x_ref[...], g=g)
        split_ref[...] = h
        merged_ref[...] = pltpu.einshape("gnd->n(gd)", h)

    try:
        split, merged = pl.pallas_call(
            kern,
            out_shape=(jax.ShapeDtypeStruct((g, n, hd), dtype),
                       jax.ShapeDtypeStruct((n, g * hd), dtype)),
        )(x)
        want = x.reshape(n, g, hd).transpose(1, 0, 2)
        return bool(jnp.array_equal(split, want)) and bool(jnp.array_equal(merged, x))
    except Exception:
        return False


def _probe_buffered1():
    """True iff pipeline_mode=pl.Buffered(1) (single-buffered invariant operands) works."""
    try:
        spec = pl.BlockSpec((8, 128), lambda i: (0, 0), pipeline_mode=pl.Buffered(1))

        def kern(x_ref, o_ref):
            o_ref[...] = x_ref[...] * 2.0

        out = pl.pallas_call(
            kern,
            grid=(2,),
            in_specs=[spec],
            out_specs=pl.BlockSpec((8, 128), lambda i: (0, 0)),
            out_shape=jax.ShapeDtypeStruct((8, 128), jnp.float32),
        )(jnp.ones((8, 128), jnp.float32))
        return bool(jnp.array_equal(out, jnp.full((8, 128), 2.0, jnp.float32)))
    except Exception:
        return False


_FEATURES = None


def _features():
    global _FEATURES
    if _FEATURES is None:
        einshape_ok = _probe_einshape(jnp.float32) and _probe_einshape(jnp.bfloat16)
        _FEATURES = {"einshape": einshape_ok, "buffered1": _probe_buffered1()}
    return _FEATURES


# ---------------------------------------------------------------------------
# kernel
# ---------------------------------------------------------------------------

def _block_kernel(x_ref, enc_ref,
                  rms1_w, w_q1, w_kv1, w_o1, b_o1,
                  rms2_w, w_q2, w_kv2, w_o2, b_o2,
                  ln3_w, ln3_b,
                  w_ff1, b_ff1, w_ff2, b_ff2,
                  o_ref,
                  kv1_s, kv2_s,
                  *, TQ, H, HD, INNER, EPS, cdt, split_fn, merge_fn):
    f32 = jnp.float32
    qi = pl.program_id(1)

    def rmsnorm(z, w):
        return z * jax.lax.rsqrt(jnp.mean(z * z, axis=-1, keepdims=True) + EPS) * w

    # Per-batch-element K|V caches: built once at the first query tile, reused by the
    # remaining (sequential / 'arbitrary') query-tile steps of the same batch element.
    @pl.when(qi == 0)
    def _build_kv_caches():
        x_full = x_ref[...].astype(f32)                               # (S, D)
        n1_full = rmsnorm(x_full, rms1_w[...])
        kv1 = jnp.dot(n1_full.astype(cdt), w_kv1[...],
                      preferred_element_type=cdt)                     # (S, 2D)
        kv1_s[...] = split_fn(kv1, 2 * H)                             # (2H, S, HD)
        kv2 = jnp.dot(enc_ref[...].astype(cdt), w_kv2[...],
                      preferred_element_type=cdt)                     # (Se, 2D)
        kv2_s[...] = split_fn(kv2, 2 * H)                             # (2H, Se, HD)

    # Current query tile of the residual stream (f32 throughout).
    row0 = pl.multiple_of(qi * TQ, TQ)
    x = x_ref[pl.ds(row0, TQ), :].astype(f32)                         # (TQ, D)

    def attention(q_heads, kv_cache_ref):
        kv = kv_cache_ref[...]                                        # (2H, Sk, HD)
        kh, vh = kv[:H], kv[H:]
        # q is pre-scaled by 1/sqrt(HD) (folded into the packed query weights).
        s = jnp.einsum('hqd,hkd->hqk', q_heads, kh,
                       preferred_element_type=f32)                    # (H, TQ, Sk) f32
        m = jnp.max(s, axis=-1, keepdims=True)
        p = jnp.exp(s - m)
        r = _fast_recip(jnp.sum(p, axis=-1, keepdims=True))
        o = jnp.einsum('hqk,hkd->hqd', p.astype(cdt), vh,
                       preferred_element_type=f32)                    # (H, TQ, HD) f32
        return merge_fn(o * r)                                        # (TQ, D) f32

    # ---- norm1 (RMSNorm, affine) + self attention + residual -----------------------
    n1 = rmsnorm(x, rms1_w[...])
    q1 = jnp.dot(n1.astype(cdt), w_q1[...], preferred_element_type=cdt)   # (TQ, D)
    a1 = attention(split_fn(q1, H), kv1_s)
    x = x + jnp.dot(a1.astype(cdt), w_o1[...], preferred_element_type=f32) + b_o1[...]

    # ---- norm2 (RMSNorm, affine) + cross attention on encoder states + residual ----
    n2 = rmsnorm(x, rms2_w[...])
    q2 = jnp.dot(n2.astype(cdt), w_q2[...], preferred_element_type=cdt)
    a2 = attention(split_fn(q2, H), kv2_s)
    x = x + jnp.dot(a2.astype(cdt), w_o2[...], preferred_element_type=f32) + b_o2[...]

    # ---- norm3 (LayerNorm, affine) + GEGLU feed-forward + residual -----------------
    mean = jnp.mean(x, axis=-1, keepdims=True)
    var = jnp.mean((x - mean) ** 2, axis=-1, keepdims=True)
    n3 = (x - mean) * jax.lax.rsqrt(var + EPS) * ln3_w[...] + ln3_b[...]
    proj = jnp.dot(n3.astype(cdt), w_ff1[...], preferred_element_type=f32) + b_ff1[...]
    hidden, gate = proj[:, :INNER], proj[:, INNER:]
    ff_h = hidden * _gelu_exact(gate)
    ff = jnp.dot(ff_h.astype(cdt), w_ff2[...], preferred_element_type=f32) + b_ff2[...]

    # NOTE: at production dim / head_dim (multiples of 128) this store is a full-lane vst.
    o_ref[...] = (x + ff).astype(o_ref.dtype)


# ---------------------------------------------------------------------------
# host-side wrapper
# ---------------------------------------------------------------------------

def pack_params(raw, *, heads, head_dim, matmul_dtype=jnp.bfloat16):
    """One-time weight re-layout (do this at parameter-load time, not per forward call):
    fused K|V projections, 1/sqrt(head_dim) folded into the query weights, matmul weights
    stored in the MXU operand dtype; norm weights / biases stay f32."""
    cdt = matmul_dtype
    f32 = jnp.float32
    scale = 1.0 / math.sqrt(head_dim)
    return dict(
        rms1_w=raw["rms1_w"].astype(f32),
        w_q1=(raw["w_q1"] * scale).astype(cdt),
        w_kv1=jnp.concatenate([raw["w_k1"], raw["w_v1"]], axis=1).astype(cdt),
        w_o1=raw["w_o1"].astype(cdt),
        b_o1=raw["b_o1"].astype(f32),
        rms2_w=raw["rms2_w"].astype(f32),
        w_q2=(raw["w_q2"] * scale).astype(cdt),
        w_kv2=jnp.concatenate([raw["w_k2"], raw["w_v2"]], axis=1).astype(cdt),
        w_o2=raw["w_o2"].astype(cdt),
        b_o2=raw["b_o2"].astype(f32),
        ln3_w=raw["ln3_w"].astype(f32),
        ln3_b=raw["ln3_b"].astype(f32),
        w_ff1=raw["w_ff1"].astype(cdt),
        b_ff1=raw["b_ff1"].astype(f32),
        w_ff2=raw["w_ff2"].astype(cdt),
        b_ff2=raw["b_ff2"].astype(f32),
    )


def _pick_q_tile(S, requested):
    if requested is not None:
        if requested != S:
            assert S % requested == 0 and requested % 8 == 0, \
                "q_tile must divide S and be a multiple of 8 (or equal S)"
        return requested
    if S % 8 != 0:
        return S
    for t in (512, 256, 128, 64, 32, 16, 8):
        if t <= S and S % t == 0:
            return t
    return S


def _vmem_limit_bytes():
    # Raise the scoped-VMEM limit on v5e/v6e (128 MiB physical) while staying well inside
    # v7x's 64 MiB; conservative fallback if the hardware query is unavailable.
    try:
        cap = pltpu.get_tpu_info().vmem_capacity_bytes
        return int(min(cap * 3 // 4, 96 * 1024 * 1024))
    except Exception:
        return 64 * 1024 * 1024


def multi_cond_block(x, enc, packed, *, heads, head_dim, eps=1e-5, q_tile=None):
    B, S, D = x.shape
    _, Se, Dc = enc.shape
    assert D == heads * head_dim
    INNER = packed["w_ff2"].shape[0]
    cdt = packed["w_q1"].dtype

    TQ = _pick_q_tile(S, q_tile)
    NQ = S // TQ

    feats = _features()
    split_fn = _split_heads_einshape if feats["einshape"] else _split_heads_slices
    merge_fn = _merge_heads_einshape if feats["einshape"] else _merge_heads_slices

    kernel = partial(_block_kernel, TQ=TQ, H=heads, HD=head_dim, INNER=INNER,
                     EPS=eps, cdt=cdt, split_fn=split_fn, merge_fn=merge_fn)

    def const_spec(shape):
        index_map = lambda b, q: (0,) * len(shape)
        if feats["buffered1"]:
            # Weights / biases never change across the grid -> single-buffer them.
            return pl.BlockSpec(shape, index_map, pipeline_mode=pl.Buffered(1))
        return pl.BlockSpec(shape, index_map)

    in_specs = [
        pl.BlockSpec((pl.Squeezed(), S, D), lambda b, q: (b, 0, 0)),    # hidden_states (full seq)
        pl.BlockSpec((pl.Squeezed(), Se, Dc), lambda b, q: (b, 0, 0)),  # encoder_hidden_states
        const_spec((1, D)),                                  # norm1 RMS weight
        const_spec((D, D)),                                  # attn1 to_q (scale folded in)
        const_spec((D, 2 * D)),                              # attn1 fused to_k | to_v
        const_spec((D, D)), const_spec((1, D)),              # attn1 out proj + bias
        const_spec((1, D)),                                  # norm2 RMS weight
        const_spec((D, D)),                                  # attn2 to_q (scale folded in)
        const_spec((Dc, 2 * D)),                             # attn2 fused to_k | to_v
        const_spec((D, D)), const_spec((1, D)),              # attn2 out proj + bias
        const_spec((1, D)), const_spec((1, D)),              # norm3 gamma / beta
        const_spec((D, 2 * INNER)), const_spec((1, 2 * INNER)),  # GEGLU proj
        const_spec((INNER, D)), const_spec((1, D)),          # ff out proj
    ]
    out_spec = pl.BlockSpec((pl.Squeezed(), TQ, D), lambda b, q: (b, q, 0))

    fn = pl.pallas_call(
        kernel,
        out_shape=jax.ShapeDtypeStruct((B, S, D), x.dtype),
        grid_spec=pltpu.PrefetchScalarGridSpec(
            num_scalar_prefetch=0,
            grid=(B, NQ),
            in_specs=in_specs,
            out_specs=out_spec,
            scratch_shapes=[
                pltpu.VMEM((2 * heads, S, head_dim), cdt),    # self-attn  K|V cache (head-major)
                pltpu.VMEM((2 * heads, Se, head_dim), cdt),   # cross-attn K|V cache (head-major)
            ],
        ),
        compiler_params=pltpu.CompilerParams(
            dimension_semantics=("parallel", "arbitrary"),
            vmem_limit_bytes=_vmem_limit_bytes(),
        ),
    )
    return fn(
        x, enc,
        packed["rms1_w"], packed["w_q1"], packed["w_kv1"], packed["w_o1"], packed["b_o1"],
        packed["rms2_w"], packed["w_q2"], packed["w_kv2"], packed["w_o2"], packed["b_o2"],
        packed["ln3_w"], packed["ln3_b"],
        packed["w_ff1"], packed["b_ff1"], packed["w_ff2"], packed["b_ff2"],
    )


# ---------------------------------------------------------------------------
# pure-JAX reference of the PyTorch forward (default 'layer_norm' path + 1 cross-attn)
# ---------------------------------------------------------------------------

def ref_forward(x, enc, p, heads, head_dim, eps=1e-5):
    B, S, D = x.shape

    def rms(z, w):
        return z * jax.lax.rsqrt(jnp.mean(z * z, -1, keepdims=True) + eps) * w[0]

    def attn(nq, kvsrc, wq, wk, wv, wo, bo):
        q, k, v = nq @ wq, kvsrc @ wk, kvsrc @ wv

        def split(z):
            return z.reshape(z.shape[0], z.shape[1], heads, head_dim).transpose(0, 2, 1, 3)

        qh, kh, vh = split(q), split(k), split(v)
        s = jnp.einsum("bhqd,bhkd->bhqk", qh, kh) / math.sqrt(head_dim)
        a = jax.nn.softmax(s, axis=-1)
        o = jnp.einsum("bhqk,bhkd->bhqd", a, vh).transpose(0, 2, 1, 3)
        o = o.reshape(nq.shape[0], nq.shape[1], D)
        return o @ wo + bo[0]

    h = x
    h = h + attn(rms(h, p["rms1_w"]), rms(h, p["rms1_w"]),
                 p["w_q1"], p["w_k1"], p["w_v1"], p["w_o1"], p["b_o1"])
    h = h + attn(rms(h, p["rms2_w"]), enc,
                 p["w_q2"], p["w_k2"], p["w_v2"], p["w_o2"], p["b_o2"])

    mean = h.mean(-1, keepdims=True)
    var = ((h - mean) ** 2).mean(-1, keepdims=True)
    n3 = (h - mean) / jnp.sqrt(var + eps) * p["ln3_w"][0] + p["ln3_b"][0]

    proj = n3 @ p["w_ff1"] + p["b_ff1"][0]
    inner = p["w_ff2"].shape[0]
    hidden, gate = proj[..., :inner], proj[..., inner:]
    ffh = hidden * jax.nn.gelu(gate, approximate=False)     # exact erf GELU (diffusers GEGLU)
    return h + (ffh @ p["w_ff2"] + p["b_ff2"][0])


# ---------------------------------------------------------------------------
# self-test
# ---------------------------------------------------------------------------

if __name__ == "__main__":
    B, S, Se = 2, 16, 8
    heads, head_dim = 2, 32
    D = heads * head_dim            # dim = 64
    Dc = 96                         # cross_attention_dim
    INNER = 4 * D                   # ff inner dim = 256

    key = jax.random.PRNGKey(0)
    ks = jax.random.split(key, 24)

    def w(k, shape, scale=0.02):
        return (scale * jax.random.normal(k, shape)).astype(jnp.float32)

    raw = dict(
        rms1_w=1.0 + w(ks[0], (1, D)),
        w_q1=w(ks[1], (D, D)), w_k1=w(ks[2], (D, D)), w_v1=w(ks[3], (D, D)),
        w_o1=w(ks[4], (D, D)), b_o1=w(ks[5], (1, D)),
        rms2_w=1.0 + w(ks[6], (1, D)),
        w_q2=w(ks[7], (D, D)), w_k2=w(ks[8], (Dc, D)), w_v2=w(ks[9], (Dc, D)),
        w_o2=w(ks[10], (D, D)), b_o2=w(ks[11], (1, D)),
        ln3_w=1.0 + w(ks[12], (1, D)), ln3_b=w(ks[13], (1, D)),
        w_ff1=w(ks[14], (D, 2 * INNER)), b_ff1=w(ks[15], (1, 2 * INNER)),
        w_ff2=w(ks[16], (INNER, D)), b_ff2=w(ks[17], (1, D)),
    )

    x = jax.random.normal(ks[18], (B, S, D), dtype=jnp.float32)
    enc = jax.random.normal(ks[19], (B, Se, Dc), dtype=jnp.float32)

    with jax.default_matmul_precision("float32"):
        ref = ref_forward(x, enc, raw, heads, head_dim)

    # f32-operand path, 2 query tiles per batch element (exercises tiling + KV cache reuse).
    packed_f32 = pack_params(raw, heads=heads, head_dim=head_dim, matmul_dtype=jnp.float32)
    out = multi_cond_block(x, enc, packed_f32, heads=heads, head_dim=head_dim, q_tile=8)
    out = jax.block_until_ready(out)
    assert out.shape == (B, S, D)
    err_f32 = float(jnp.max(jnp.abs(out - ref)))
    assert jnp.allclose(out, ref, atol=2e-3, rtol=2e-3), err_f32

    # bf16-operand / f32-accumulate path (default production path on v6e/v7x).
    packed_bf16 = pack_params(raw, heads=heads, head_dim=head_dim, matmul_dtype=jnp.bfloat16)
    out_bf16 = multi_cond_block(x, enc, packed_bf16, heads=heads, head_dim=head_dim, q_tile=8)
    out_bf16 = jax.block_until_ready(out_bf16)
    err_bf16 = float(jnp.max(jnp.abs(out_bf16 - ref)))
    assert jnp.allclose(out_bf16, ref, atol=1e-2, rtol=1e-2), err_bf16

    print("KERNEL_OK")
</pallas_src>

<mosaic_0001>
module attributes {stable_mosaic.version = 11 : i64} {
  func.func @kern(%arg0: i32, %arg1: memref<8x128xf32, #tpu.memory_space<vmem>>, %arg2: memref<8x128xf32, #tpu.memory_space<vmem>>) attributes {dimension_semantics = [#tpu.dimension_semantics<arbitrary>], iteration_bounds = array<i64: 2>, scalar_prefetch = 0 : i64, scratch_operands = 0 : i64, tpu.core_type = #tpu.core_type<tc>, window_params = [{pipeline_mode = #tpu.pipeline_mode<synchronous>, transform_indices = @transform_0, window_bounds = array<i64: 8, 128>}, {pipeline_mode = #tpu.pipeline_mode<synchronous>, transform_indices = @transform_1, window_bounds = array<i64: 8, 128>}]} {
    %c0 = arith.constant 0 : index
    %c0_0 = arith.constant 0 : index
    %0 = vector.load %arg1[%c0, %c0_0] : memref<8x128xf32, #tpu.memory_space<vmem>>, vector<8x128xf32>
    %cst = arith.constant 2.000000e+00 : f32
    %1 = vector.broadcast %cst : f32 to vector<8x128xf32>
    %2 = arith.mulf %0, %1 : vector<8x128xf32>
    %c0_1 = arith.constant 0 : index
    %c0_2 = arith.constant 0 : index
    %3 = vector.load %arg2[%c0_1, %c0_2] : memref<8x128xf32, #tpu.memory_space<vmem>>, vector<8x128xf32>
    tpu.vector_store %arg2[%c0_1, %c0_2], %2 {strides = array<i32>} : memref<8x128xf32, #tpu.memory_space<vmem>>, vector<8x128xf32>,
    return
  }
  func.func @transform_0(%arg0: i32) -> (i32, i32) {
    %c0_i32 = arith.constant 0 : i32
    %c0_i32_0 = arith.constant 0 : i32
    %c0_i32_1 = arith.constant 0 : i32
    return %c0_i32, %c0_i32_0 : i32, i32
  }
  func.func @transform_1(%arg0: i32) -> (i32, i32) {
    %c0_i32 = arith.constant 0 : i32
    %c0_i32_0 = arith.constant 0 : i32
    %c0_i32_1 = arith.constant 0 : i32
    return %c0_i32, %c0_i32_0 : i32, i32
  }
}

module attributes {stable_mosaic.version = 11 : i64} {
  func.func @_block_kernel(%arg0: i32, %arg1: i32, %arg2: memref<1x16x64xf32, #tpu.memory_space<vmem>>, %arg3: memref<1x8x96xf32, #tpu.memory_space<vmem>>, %arg4: memref<1x64xf32, #tpu.memory_space<vmem>>, %arg5: memref<64x64xf32, #tpu.memory_space<vmem>>, %arg6: memref<64x128xf32, #tpu.memory_space<vmem>>, %arg7: memref<64x64xf32, #tpu.memory_space<vmem>>, %arg8: memref<1x64xf32, #tpu.memory_space<vmem>>, %arg9: memref<1x64xf32, #tpu.memory_space<vmem>>, %arg10: memref<64x64xf32, #tpu.memory_space<vmem>>, %arg11: memref<96x128xf32, #tpu.memory_space<vmem>>, %arg12: memref<64x64xf32, #tpu.memory_space<vmem>>, %arg13: memref<1x64xf32, #tpu.memory_space<vmem>>, %arg14: memref<1x64xf32, #tpu.memory_space<vmem>>, %arg15: memref<1x64xf32, #tpu.memory_space<vmem>>, %arg16: memref<64x512xf32, #tpu.memory_space<vmem>>, %arg17: memref<1x512xf32, #tpu.memory_space<vmem>>, %arg18: memref<256x64xf32, #tpu.memory_space<vmem>>, %arg19: memref<1x64xf32, #tpu.memory_space<vmem>>, %arg20: memref<1x8x64xf32, #tpu.memory_space<vmem>>, %arg21: memref<4x16x32xf32, #tpu.memory_space<vmem>>, %arg22: memref<4x8x32xf32, #tpu.memory_space<vmem>>) attributes {dimension_semantics = [#tpu.dimension_semantics<parallel>, #tpu.dimension_semantics<arbitrary>], iteration_bounds = array<i64: 2, 2>, scalar_prefetch = 0 : i64, scratch_operands = 2 : i64, tpu.core_type = #tpu.core_type<tc>, window_params = [{transform_indices = @transform_0, window_bounds = array<i64: 1, 16, 64>}, {transform_indices = @transform_1, window_bounds = array<i64: 1, 8, 96>}, {pipeline_mode = #tpu.pipeline_mode<synchronous>, transform_indices = @transform_2, window_bounds = array<i64: 1, 64>}, {pipeline_mode = #tpu.pipeline_mode<synchronous>, transform_indices = @transform_3, window_bounds = array<i64: 64, 64>}, {pipeline_mode = #tpu.pipeline_mode<synchronous>, transform_indices = @transform_4, window_bounds = array<i64: 64, 128>}, {pipeline_mode = #tpu.pipeline_mode<synchronous>, transform_indices = @transform_5, window_bounds = array<i64: 64, 64>}, {pipeline_mode = #tpu.pipeline_mode<synchronous>, transform_indices = @transform_6, window_bounds = array<i64: 1, 64>}, {pipeline_mode = #tpu.pipeline_mode<synchronous>, transform_indices = @transform_7, window_bounds = array<i64: 1, 64>}, {pipeline_mode = #tpu.pipeline_mode<synchronous>, transform_indices = @transform_8, window_bounds = array<i64: 64, 64>}, {pipeline_mode = #tpu.pipeline_mode<synchronous>, transform_indices = @transform_9, window_bounds = array<i64: 96, 128>}, {pipeline_mode = #tpu.pipeline_mode<synchronous>, transform_indices = @transform_10, window_bounds = array<i64: 64, 64>}, {pipeline_mode = #tpu.pipeline_mode<synchronous>, transform_indices = @transform_11, window_bounds = array<i64: 1, 64>}, {pipeline_mode = #tpu.pipeline_mode<synchronous>, transform_indices = @transform_12, window_bounds = array<i64: 1, 64>}, {pipeline_mode = #tpu.pipeline_mode<synchronous>, transform_indices = @transform_13, window_bounds = array<i64: 1, 64>}, {pipeline_mode = #tpu.pipeline_mode<synchronous>, transform_indices = @transform_14, window_bounds = array<i64: 64, 512>}, {pipeline_mode = #tpu.pipeline_mode<synchronous>, transform_indices = @transform_15, window_bounds = array<i64: 1, 512>}, {pipeline_mode = #tpu.pipeline_mode<synchronous>, transform_indices = @transform_16, window_bounds = array<i64: 256, 64>}, {pipeline_mode = #tpu.pipeline_mode<synchronous>, transform_indices = @transform_17, window_bounds = array<i64: 1, 64>}, {transform_indices = @transform_18, window_bounds = array<i64: 1, 8, 64>}]} {
    %c0_i32 = arith.constant 0 : i32
    %0 = arith.cmpi eq, %arg1, %c0_i32 : i32
    %1 = arith.extui %0 : i1 to i32
    %c0_i32_0 = arith.constant 0 : i32
    %2 = arith.cmpi ne, %1, %c0_i32_0 : i32
    scf.if %2 {
      %c0_81 = arith.constant 0 : index
      %c0_82 = arith.constant 0 : index
      %c0_83 = arith.constant 0 : index
      %193 = vector.load %arg2[%c0_81, %c0_82, %c0_83] : memref<1x16x64xf32, #tpu.memory_space<vmem>>, vector<1x16x64xf32>
      %194 = vector.shape_cast %193 : vector<1x16x64xf32> to vector<16x64xf32>
      %c0_84 = arith.constant 0 : index
      %c0_85 = arith.constant 0 : index
      %195 = vector.load %arg4[%c0_84, %c0_85] : memref<1x64xf32, #tpu.memory_space<vmem>>, vector<1x64xf32>
      %196 = arith.mulf %194, %194 : vector<16x64xf32>
      %cst_86 = arith.constant dense<0.000000e+00> : vector<16xf32>
      %197 = vector.multi_reduction <add>, %196, %cst_86 [1] : vector<16x64xf32> to vector<16xf32>
      %198 = vector.shape_cast %197 : vector<16xf32> to vector<16x1xf32>
      %cst_87 = arith.constant 6.400000e+01 : f32
      %199 = vector.broadcast %cst_87 : f32 to vector<16x1xf32>
      %200 = arith.divf %198, %199 : vector<16x1xf32>
      %cst_88 = arith.constant 9.99999974E-6 : f32
      %201 = vector.broadcast %cst_88 : f32 to vector<16x1xf32>
      %202 = arith.addf %200, %201 : vector<16x1xf32>
      %203 = math.rsqrt %202 : vector<16x1xf32>
      %204 = vector.broadcast %203 : vector<16x1xf32> to vector<16x64xf32>
      %205 = arith.mulf %194, %204 : vector<16x64xf32>
      %206 = vector.broadcast %195 : vector<1x64xf32> to vector<16x64xf32>
      %207 = arith.mulf %205, %206 : vector<16x64xf32>
      %c0_89 = arith.constant 0 : index
      %c0_90 = arith.constant 0 : index
      %208 = vector.load %arg6[%c0_89, %c0_90] : memref<64x128xf32, #tpu.memory_space<vmem>>, vector<64x128xf32>
      %cst_91 = arith.constant dense<0.000000e+00> : vector<16x128xf32>
      %209 = tpu.matmul %207, %208, %cst_91 {dimension_numbers = #tpu.dot_dimension_numbers<[1], [0], [0], [1], [0, 0, 1, 1], [], []>} : vector<16x64xf32>, vector<64x128xf32>, vector<16x128xf32> -> vector<16x128xf32>
      %210 = vector.extract_strided_slice %209 {offsets = [0, 0], sizes = [16, 32], strides = [1, 1]} : vector<16x128xf32> to vector<16x32xf32>
      %211 = vector.extract_strided_slice %209 {offsets = [0, 32], sizes = [16, 32], strides = [1, 1]} : vector<16x128xf32> to vector<16x32xf32>
      %212 = vector.extract_strided_slice %209 {offsets = [0, 64], sizes = [16, 32], strides = [1, 1]} : vector<16x128xf32> to vector<16x32xf32>
      %213 = vector.extract_strided_slice %209 {offsets = [0, 96], sizes = [16, 32], strides = [1, 1]} : vector<16x128xf32> to vector<16x32xf32>
      %214 = vector.shape_cast %210 : vector<16x32xf32> to vector<1x16x32xf32>
      %215 = vector.shape_cast %211 : vector<16x32xf32> to vector<1x16x32xf32>
      %216 = vector.shape_cast %212 : vector<16x32xf32> to vector<1x16x32xf32>
      %217 = vector.shape_cast %213 : vector<16x32xf32> to vector<1x16x32xf32>
      %218 = tpu.concatenate %214, %215, %216, %217 in 0 : vector<1x16x32xf32>, vector<1x16x32xf32>, vector<1x16x32xf32>, vector<1x16x32xf32> -> vector<4x16x32xf32>
      %c0_92 = arith.constant 0 : index
      %c0_93 = arith.constant 0 : index
      %c0_94 = arith.constant 0 : index
      %219 = vector.load %arg21[%c0_92, %c0_93, %c0_94] : memref<4x16x32xf32, #tpu.memory_space<vmem>>, vector<4x16x32xf32>
      tpu.vector_store %arg21[%c0_92, %c0_93, %c0_94], %218 {strides = array<i32>} : memref<4x16x32xf32, #tpu.memory_space<vmem>>, vector<4x16x32xf32>,
      %c0_95 = arith.constant 0 : index
      %c0_96 = arith.constant 0 : index
      %c0_97 = arith.constant 0 : index
      %220 = vector.load %arg3[%c0_95, %c0_96, %c0_97] : memref<1x8x96xf32, #tpu.memory_space<vmem>>, vector<1x8x96xf32>
      %221 = vector.shape_cast %220 : vector<1x8x96xf32> to vector<8x96xf32>
      %c0_98 = arith.constant 0 : index
      %c0_99 = arith.constant 0 : index
      %222 = vector.load %arg11[%c0_98, %c0_99] : memref<96x128xf32, #tpu.memory_space<vmem>>, vector<96x128xf32>
      %cst_100 = arith.constant dense<0.000000e+00> : vector<8x128xf32>
      %223 = tpu.matmul %221, %222, %cst_100 {dimension_numbers = #tpu.dot_dimension_numbers<[1], [0], [0], [1], [0, 0, 1, 1], [], []>} : vector<8x96xf32>, vector<96x128xf32>, vector<8x128xf32> -> vector<8x128xf32>
      %224 = vector.extract_strided_slice %223 {offsets = [0, 0], sizes = [8, 32], strides = [1, 1]} : vector<8x128xf32> to vector<8x32xf32>
      %225 = vector.extract_strided_slice %223 {offsets = [0, 32], sizes = [8, 32], strides = [1, 1]} : vector<8x128xf32> to vector<8x32xf32>
      %226 = vector.extract_strided_slice %223 {offsets = [0, 64], sizes = [8, 32], strides = [1, 1]} : vector<8x128xf32> to vector<8x32xf32>
      %227 = vector.extract_strided_slice %223 {offsets = [0, 96], sizes = [8, 32], strides = [1, 1]} : vector<8x128xf32> to vector<8x32xf32>
      %228 = vector.shape_cast %224 : vector<8x32xf32> to vector<1x8x32xf32>
      %229 = vector.shape_cast %225 : vector<8x32xf32> to vector<1x8x32xf32>
      %230 = vector.shape_cast %226 : vector<8x32xf32> to vector<1x8x32xf32>
      %231 = vector.shape_cast %227 : vector<8x32xf32> to vector<1x8x32xf32>
      %232 = tpu.concatenate %228, %229, %230, %231 in 0 : vector<1x8x32xf32>, vector<1x8x32xf32>, vector<1x8x32xf32>, vector<1x8x32xf32> -> vector<4x8x32xf32>
      %c0_101 = arith.constant 0 : index
      %c0_102 = arith.constant 0 : index
      %c0_103 = arith.constant 0 : index
      %233 = vector.load %arg22[%c0_101, %c0_102, %c0_103] : memref<4x8x32xf32, #tpu.memory_space<vmem>>, vector<4x8x32xf32>
      tpu.vector_store %arg22[%c0_101, %c0_102, %c0_103], %232 {strides = array<i32>} : memref<4x8x32xf32, #tpu.memory_space<vmem>>, vector<4x8x32xf32>,
    } else {
    }
    %c8_i32 = arith.constant 8 : i32
    %3 = arith.muli %arg1, %c8_i32 : i32
    %4 = tpu.assume_multiple %3, 8 : i32
    %c0 = arith.constant 0 : index
    %5 = arith.index_cast %4 : i32 to index
    %c0_1 = arith.constant 0 : index
    %6 = vector.load %arg2[%c0, %5, %c0_1] : memref<1x16x64xf32, #tpu.memory_space<vmem>>, vector<1x8x64xf32>
    %7 = vector.shape_cast %6 : vector<1x8x64xf32> to vector<8x64xf32>
    %c0_2 = arith.constant 0 : index
    %c0_3 = arith.constant 0 : index
    %8 = vector.load %arg4[%c0_2, %c0_3] : memref<1x64xf32, #tpu.memory_space<vmem>>, vector<1x64xf32>
    %9 = arith.mulf %7, %7 : vector<8x64xf32>
    %cst = arith.constant dense<0.000000e+00> : vector<8xf32>
    %10 = vector.multi_reduction <add>, %9, %cst [1] : vector<8x64xf32> to vector<8xf32>
    %11 = vector.shape_cast %10 : vector<8xf32> to vector<8x1xf32>
    %cst_4 = arith.constant 6.400000e+01 : f32
    %12 = vector.broadcast %cst_4 : f32 to vector<8x1xf32>
    %13 = arith.divf %11, %12 : vector<8x1xf32>
    %cst_5 = arith.constant 9.99999974E-6 : f32
    %14 = vector.broadcast %cst_5 : f32 to vector<8x1xf32>
    %15 = arith.addf %13, %14 : vector<8x1xf32>
    %16 = math.rsqrt %15 : vector<8x1xf32>
    %17 = vector.broadcast %16 : vector<8x1xf32> to vector<8x64xf32>
    %18 = arith.mulf %7, %17 : vector<8x64xf32>
    %19 = vector.broadcast %8 : vector<1x64xf32> to vector<8x64xf32>
    %20 = arith.mulf %18, %19 : vector<8x64xf32>
    %c0_6 = arith.constant 0 : index
    %c0_7 = arith.constant 0 : index
    %21 = vector.load %arg5[%c0_6, %c0_7] : memref<64x64xf32, #tpu.memory_space<vmem>>, vector<64x64xf32>
    %cst_8 = arith.constant dense<0.000000e+00> : vector<8x64xf32>
    %22 = tpu.matmul %20, %21, %cst_8 {dimension_numbers = #tpu.dot_dimension_numbers<[1], [0], [0], [1], [0, 0, 1, 1], [], []>} : vector<8x64xf32>, vector<64x64xf32>, vector<8x64xf32> -> vector<8x64xf32>
    %23 = vector.extract_strided_slice %22 {offsets = [0, 0], sizes = [8, 32], strides = [1, 1]} : vector<8x64xf32> to vector<8x32xf32>
    %24 = vector.extract_strided_slice %22 {offsets = [0, 32], sizes = [8, 32], strides = [1, 1]} : vector<8x64xf32> to vector<8x32xf32>
    %25 = vector.shape_cast %23 : vector<8x32xf32> to vector<1x8x32xf32>
    %26 = vector.shape_cast %24 : vector<8x32xf32> to vector<1x8x32xf32>
    %27 = tpu.concatenate %25, %26 in 0 : vector<1x8x32xf32>, vector<1x8x32xf32> -> vector<2x8x32xf32>
    %c0_9 = arith.constant 0 : index
    %c0_10 = arith.constant 0 : index
    %c0_11 = arith.constant 0 : index
    %28 = vector.load %arg21[%c0_9, %c0_10, %c0_11] : memref<4x16x32xf32, #tpu.memory_space<vmem>>, vector<4x16x32xf32>
    %29 = vector.extract_strided_slice %28 {offsets = [0, 0, 0], sizes = [2, 16, 32], strides = [1, 1, 1]} : vector<4x16x32xf32> to vector<2x16x32xf32>
    %30 = vector.extract_strided_slice %28 {offsets = [2, 0, 0], sizes = [2, 16, 32], strides = [1, 1, 1]} : vector<4x16x32xf32> to vector<2x16x32xf32>
    "tpu.trace_start"() <{level = 10 : i32, message = "hqd,hkd->hqk"}> : () -> ()
    %cst_12 = arith.constant dense<0.000000e+00> : vector<2x8x16xf32>
    %31 = tpu.matmul %27, %29, %cst_12 {dimension_numbers = #tpu.dot_dimension_numbers<[2], [2], [1], [1], [0, 0, 0, 1, 1, 1], [0], [0]>} : vector<2x8x32xf32>, vector<2x16x32xf32>, vector<2x8x16xf32> -> vector<2x8x16xf32>
    "tpu.trace_stop"() : () -> ()
    %cst_13 = arith.constant dense<0xFF800000> : vector<2x8xf32>
    %32 = vector.multi_reduction <maximumf>, %31, %cst_13 [2] : vector<2x8x16xf32> to vector<2x8xf32>
    %33 = vector.shape_cast %32 : vector<2x8xf32> to vector<2x8x1xf32>
    %34 = vector.broadcast %33 : vector<2x8x1xf32> to vector<2x8x16xf32>
    %35 = arith.subf %31, %34 : vector<2x8x16xf32>
    %36 = math.exp %35 : vector<2x8x16xf32>
    %cst_14 = arith.constant dense<0.000000e+00> : vector<2x8xf32>
    %37 = vector.multi_reduction <add>, %36, %cst_14 [2] : vector<2x8x16xf32> to vector<2x8xf32>
    %38 = vector.shape_cast %37 : vector<2x8xf32> to vector<2x8x1xf32>
    %39 = tpu.reciprocal %38 {approx = true} : vector<2x8x1xf32> -> vector<2x8x1xf32>
    %40 = arith.mulf %38, %39 : vector<2x8x1xf32>
    %cst_15 = arith.constant 2.000000e+00 : f32
    %41 = vector.broadcast %cst_15 : f32 to vector<2x8x1xf32>
    %42 = arith.subf %41, %40 : vector<2x8x1xf32>
    %43 = arith.mulf %39, %42 : vector<2x8x1xf32>
    "tpu.trace_start"() <{level = 10 : i32, message = "hqk,hkd->hqd"}> : () -> ()
    %cst_16 = arith.constant dense<0.000000e+00> : vector<2x8x32xf32>
    %44 = tpu.matmul %36, %30, %cst_16 {dimension_numbers = #tpu.dot_dimension_numbers<[2], [1], [1], [2], [0, 0, 0, 1, 1, 2], [0], [0]>} : vector<2x8x16xf32>, vector<2x16x32xf32>, vector<2x8x32xf32> -> vector<2x8x32xf32>
    "tpu.trace_stop"() : () -> ()
    %45 = vector.broadcast %43 : vector<2x8x1xf32> to vector<2x8x32xf32>
    %46 = arith.mulf %44, %45 : vector<2x8x32xf32>
    %47 = vector.extract_strided_slice %46 {offsets = [0, 0, 0], sizes = [1, 8, 32], strides = [1, 1, 1]} : vector<2x8x32xf32> to vector<1x8x32xf32>
    %48 = vector.shape_cast %47 : vector<1x8x32xf32> to vector<8x32xf32>
    %49 = vector.extract_strided_slice %46 {offsets = [1, 0, 0], sizes = [1, 8, 32], strides = [1, 1, 1]} : vector<2x8x32xf32> to vector<1x8x32xf32>
    %50 = vector.shape_cast %49 : vector<1x8x32xf32> to vector<8x32xf32>
    %51 = tpu.concatenate %48, %50 in 1 : vector<8x32xf32>, vector<8x32xf32> -> vector<8x64xf32>
    %c0_17 = arith.constant 0 : index
    %c0_18 = arith.constant 0 : index
    %52 = vector.load %arg7[%c0_17, %c0_18] : memref<64x64xf32, #tpu.memory_space<vmem>>, vector<64x64xf32>
    %cst_19 = arith.constant dense<0.000000e+00> : vector<8x64xf32>
    %53 = tpu.matmul %51, %52, %cst_19 {dimension_numbers = #tpu.dot_dimension_numbers<[1], [0], [0], [1], [0, 0, 1, 1], [], []>} : vector<8x64xf32>, vector<64x64xf32>, vector<8x64xf32> -> vector<8x64xf32>
    %54 = arith.addf %7, %53 : vector<8x64xf32>
    %c0_20 = arith.constant 0 : index
    %c0_21 = arith.constant 0 : index
    %55 = vector.load %arg8[%c0_20, %c0_21] : memref<1x64xf32, #tpu.memory_space<vmem>>, vector<1x64xf32>
    %56 = vector.broadcast %55 : vector<1x64xf32> to vector<8x64xf32>
    %57 = arith.addf %54, %56 : vector<8x64xf32>
    %c0_22 = arith.constant 0 : index
    %c0_23 = arith.constant 0 : index
    %58 = vector.load %arg9[%c0_22, %c0_23] : memref<1x64xf32, #tpu.memory_space<vmem>>, vector<1x64xf32>
    %59 = arith.mulf %57, %57 : vector<8x64xf32>
    %cst_24 = arith.constant dense<0.000000e+00> : vector<8xf32>
    %60 = vector.multi_reduction <add>, %59, %cst_24 [1] : vector<8x64xf32> to vector<8xf32>
    %61 = vector.shape_cast %60 : vector<8xf32> to vector<8x1xf32>
    %cst_25 = arith.constant 6.400000e+01 : f32
    %62 = vector.broadcast %cst_25 : f32 to vector<8x1xf32>
    %63 = arith.divf %61, %62 : vector<8x1xf32>
    %cst_26 = arith.constant 9.99999974E-6 : f32
    %64 = vector.broadcast %cst_26 : f32 to vector<8x1xf32>
    %65 = arith.addf %63, %64 : vector<8x1xf32>
    %66 = math.rsqrt %65 : vector<8x1xf32>
    %67 = vector.broadcast %66 : vector<8x1xf32> to vector<8x64xf32>
    %68 = arith.mulf %57, %67 : vector<8x64xf32>
    %69 = vector.broadcast %58 : vector<1x64xf32> to vector<8x64xf32>
    %70 = arith.mulf %68, %69 : vector<8x64xf32>
    %c0_27 = arith.constant 0 : index
    %c0_28 = arith.constant 0 : index
    %71 = vector.load %arg10[%c0_27, %c0_28] : memref<64x64xf32, #tpu.memory_space<vmem>>, vector<64x64xf32>
    %cst_29 = arith.constant dense<0.000000e+00> : vector<8x64xf32>
    %72 = tpu.matmul %70, %71, %cst_29 {dimension_numbers = #tpu.dot_dimension_numbers<[1], [0], [0], [1], [0, 0, 1, 1], [], []>} : vector<8x64xf32>, vector<64x64xf32>, vector<8x64xf32> -> vector<8x64xf32>
    %73 = vector.extract_strided_slice %72 {offsets = [0, 0], sizes = [8, 32], strides = [1, 1]} : vector<8x64xf32> to vector<8x32xf32>
    %74 = vector.extract_strided_slice %72 {offsets = [0, 32], sizes = [8, 32], strides = [1, 1]} : vector<8x64xf32> to vector<8x32xf32>
    %75 = vector.shape_cast %73 : vector<8x32xf32> to vector<1x8x32xf32>
    %76 = vector.shape_cast %74 : vector<8x32xf32> to vector<1x8x32xf32>
    %77 = tpu.concatenate %75, %76 in 0 : vector<1x8x32xf32>, vector<1x8x32xf32> -> vector<2x8x32xf32>
    %c0_30 = arith.constant 0 : index
    %c0_31 = arith.constant 0 : index
    %c0_32 = arith.constant 0 : index
    %78 = vector.load %arg22[%c0_30, %c0_31, %c0_32] : memref<4x8x32xf32, #tpu.memory_space<vmem>>, vector<4x8x32xf32>
    %79 = vector.extract_strided_slice %78 {offsets = [0, 0, 0], sizes = [2, 8, 32], strides = [1, 1, 1]} : vector<4x8x32xf32> to vector<2x8x32xf32>
    %80 = vector.extract_strided_slice %78 {offsets = [2, 0, 0], sizes = [2, 8, 32], strides = [1, 1, 1]} : vector<4x8x32xf32> to vector<2x8x32xf32>
    "tpu.trace_start"() <{level = 10 : i32, message = "hqd,hkd->hqk"}> : () -> ()
    %cst_33 = arith.constant dense<0.000000e+00> : vector<2x8x8xf32>
    %81 = tpu.matmul %77, %79, %cst_33 {dimension_numbers = #tpu.dot_dimension_numbers<[2], [2], [1], [1], [0, 0, 0, 1, 1, 1], [0], [0]>} : vector<2x8x32xf32>, vector<2x8x32xf32>, vector<2x8x8xf32> -> vector<2x8x8xf32>
    "tpu.trace_stop"() : () -> ()
    %cst_34 = arith.constant dense<0xFF800000> : vector<2x8xf32>
    %82 = vector.multi_reduction <maximumf>, %81, %cst_34 [2] : vector<2x8x8xf32> to vector<2x8xf32>
    %83 = vector.shape_cast %82 : vector<2x8xf32> to vector<2x8x1xf32>
    %84 = vector.broadcast %83 : vector<2x8x1xf32> to vector<2x8x8xf32>
    %85 = arith.subf %81, %84 : vector<2x8x8xf32>
    %86 = math.exp %85 : vector<2x8x8xf32>
    %cst_35 = arith.constant dense<0.000000e+00> : vector<2x8xf32>
    %87 = vector.multi_reduction <add>, %86, %cst_35 [2] : vector<2x8x8xf32> to vector<2x8xf32>
    %88 = vector.shape_cast %87 : vector<2x8xf32> to vector<2x8x1xf32>
    %89 = tpu.reciprocal %88 {approx = true} : vector<2x8x1xf32> -> vector<2x8x1xf32>
    %90 = arith.mulf %88, %89 : vector<2x8x1xf32>
    %cst_36 = arith.constant 2.000000e+00 : f32
    %91 = vector.broadcast %cst_36 : f32 to vector<2x8x1xf32>
    %92 = arith.subf %91, %90 : vector<2x8x1xf32>
    %93 = arith.mulf %89, %92 : vector<2x8x1xf32>
    "tpu.trace_start"() <{level = 10 : i32, message = "hqk,hkd->hqd"}> : () -> ()
    %cst_37 = arith.constant dense<0.000000e+00> : vector<2x8x32xf32>
    %94 = tpu.matmul %86, %80, %cst_37 {dimension_numbers = #tpu.dot_dimension_numbers<[2], [1], [1], [2], [0, 0, 0, 1, 1, 2], [0], [0]>} : vector<2x8x8xf32>, vector<2x8x32xf32>, vector<2x8x32xf32> -> vector<2x8x32xf32>
    "tpu.trace_stop"() : () -> ()
    %95 = vector.broadcast %93 : vector<2x8x1xf32> to vector<2x8x32xf32>
    %96 = arith.mulf %94, %95 : vector<2x8x32xf32>
    %97 = vector.extract_strided_slice %96 {offsets = [0, 0, 0], sizes = [1, 8, 32], strides = [1, 1, 1]} : vector<2x8x32xf32> to vector<1x8x32xf32>
    %98 = vector.shape_cast %97 : vector<1x8x32xf32> to vector<8x32xf32>
    %99 = vector.extract_strided_slice %96 {offsets = [1, 0, 0], sizes = [1, 8, 32], strides = [1, 1, 1]} : vector<2x8x32xf32> to vector<1x8x32xf32>
    %100 = vector.shape_cast %99 : vector<1x8x32xf32> to vector<8x32xf32>
    %101 = tpu.concatenate %98, %100 in 1 : vector<8x32xf32>, vector<8x32xf32> -> vector<8x64xf32>
    %c0_38 = arith.constant 0 : index
    %c0_39 = arith.constant 0 : index
    %102 = vector.load %arg12[%c0_38, %c0_39] : memref<64x64xf32, #tpu.memory_space<vmem>>, vector<64x64xf32>
    %cst_40 = arith.constant dense<0.000000e+00> : vector<8x64xf32>
    %103 = tpu.matmul %101, %102, %cst_40 {dimension_numbers = #tpu.dot_dimension_numbers<[1], [0], [0], [1], [0, 0, 1, 1], [], []>} : vector<8x64xf32>, vector<64x64xf32>, vector<8x64xf32> -> vector<8x64xf32>
    %104 = arith.addf %57, %103 : vector<8x64xf32>
    %c0_41 = arith.constant 0 : index
    %c0_42 = arith.constant 0 : index
    %105 = vector.load %arg13[%c0_41, %c0_42] : memref<1x64xf32, #tpu.memory_space<vmem>>, vector<1x64xf32>
    %106 = vector.broadcast %105 : vector<1x64xf32> to vector<8x64xf32>
    %107 = arith.addf %104, %106 : vector<8x64xf32>
    %cst_43 = arith.constant dense<0.000000e+00> : vector<8xf32>
    %108 = vector.multi_reduction <add>, %107, %cst_43 [1] : vector<8x64xf32> to vector<8xf32>
    %109 = vector.shape_cast %108 : vector<8xf32> to vector<8x1xf32>
    %cst_44 = arith.constant 6.400000e+01 : f32
    %110 = vector.broadcast %cst_44 : f32 to vector<8x1xf32>
    %111 = arith.divf %109, %110 : vector<8x1xf32>
    %112 = vector.broadcast %111 : vector<8x1xf32> to vector<8x64xf32>
    %113 = arith.subf %107, %112 : vector<8x64xf32>
    %114 = arith.mulf %113, %113 : vector<8x64xf32>
    %cst_45 = arith.constant dense<0.000000e+00> : vector<8xf32>
    %115 = vector.multi_reduction <add>, %114, %cst_45 [1] : vector<8x64xf32> to vector<8xf32>
    %116 = vector.shape_cast %115 : vector<8xf32> to vector<8x1xf32>
    %cst_46 = arith.constant 6.400000e+01 : f32
    %117 = vector.broadcast %cst_46 : f32 to vector<8x1xf32>
    %118 = arith.divf %116, %117 : vector<8x1xf32>
    %119 = vector.broadcast %111 : vector<8x1xf32> to vector<8x64xf32>
    %120 = arith.subf %107, %119 : vector<8x64xf32>
    %cst_47 = arith.constant 9.99999974E-6 : f32
    %121 = vector.broadcast %cst_47 : f32 to vector<8x1xf32>
    %122 = arith.addf %118, %121 : vector<8x1xf32>
    %123 = math.rsqrt %122 : vector<8x1xf32>
    %124 = vector.broadcast %123 : vector<8x1xf32> to vector<8x64xf32>
    %125 = arith.mulf %120, %124 : vector<8x64xf32>
    %c0_48 = arith.constant 0 : index
    %c0_49 = arith.constant 0 : index
    %126 = vector.load %arg14[%c0_48, %c0_49] : memref<1x64xf32, #tpu.memory_space<vmem>>, vector<1x64xf32>
    %127 = vector.broadcast %126 : vector<1x64xf32> to vector<8x64xf32>
    %128 = arith.mulf %125, %127 : vector<8x64xf32>
    %c0_50 = arith.constant 0 : index
    %c0_51 = arith.constant 0 : index
    %129 = vector.load %arg15[%c0_50, %c0_51] : memref<1x64xf32, #tpu.memory_space<vmem>>, vector<1x64xf32>
    %130 = vector.broadcast %129 : vector<1x64xf32> to vector<8x64xf32>
    %131 = arith.addf %128, %130 : vector<8x64xf32>
    %c0_52 = arith.constant 0 : index
    %c0_53 = arith.constant 0 : index
    %132 = vector.load %arg16[%c0_52, %c0_53] : memref<64x512xf32, #tpu.memory_space<vmem>>, vector<64x512xf32>
    %cst_54 = arith.constant dense<0.000000e+00> : vector<8x512xf32>
    %133 = tpu.matmul %131, %132, %cst_54 {dimension_numbers = #tpu.dot_dimension_numbers<[1], [0], [0], [1], [0, 0, 1, 1], [], []>} : vector<8x64xf32>, vector<64x512xf32>, vector<8x512xf32> -> vector<8x512xf32>
    %c0_55 = arith.constant 0 : index
    %c0_56 = arith.constant 0 : index
    %134 = vector.load %arg17[%c0_55, %c0_56] : memref<1x512xf32, #tpu.memory_space<vmem>>, vector<1x512xf32>
    %135 = vector.broadcast %134 : vector<1x512xf32> to vector<8x512xf32>
    %136 = arith.addf %133, %135 : vector<8x512xf32>
    %137 = vector.extract_strided_slice %136 {offsets = [0, 0], sizes = [8, 256], strides = [1, 1]} : vector<8x512xf32> to vector<8x256xf32>
    %138 = vector.extract_strided_slice %136 {offsets = [0, 256], sizes = [8, 256], strides = [1, 1]} : vector<8x512xf32> to vector<8x256xf32>
    %cst_57 = arith.constant 5.000000e-01 : f32
    %139 = vector.broadcast %cst_57 : f32 to vector<8x256xf32>
    %140 = arith.mulf %139, %138 : vector<8x256xf32>
    %cst_58 = arith.constant 0.707106769 : f32
    %141 = vector.broadcast %cst_58 : f32 to vector<8x256xf32>
    %142 = arith.mulf %138, %141 : vector<8x256xf32>
    %cst_59 = arith.constant 0.000000e+00 : f32
    %143 = vector.broadcast %cst_59 : f32 to vector<8x256xf32>
    %144 = arith.cmpf olt, %142, %143 : vector<8x256xf32>
    %cst_60 = arith.constant -1.000000e+00 : f32
    %cst_61 = arith.constant 1.000000e+00 : f32
    %145 = vector.broadcast %cst_60 : f32 to vector<8x256xf32>
    %146 = vector.broadcast %cst_61 : f32 to vector<8x256xf32>
    %147 = arith.select %144, %145, %146 : vector<8x256xi1>, vector<8x256xf32>
    %148 = math.absf %142 : vector<8x256xf32>
    %cst_62 = arith.constant 0.327591091 : f32
    %149 = vector.broadcast %cst_62 : f32 to vector<8x256xf32>
    %150 = arith.mulf %149, %148 : vector<8x256xf32>
    %cst_63 = arith.constant 1.000000e+00 : f32
    %151 = vector.broadcast %cst_63 : f32 to vector<8x256xf32>
    %152 = arith.addf %151, %150 : vector<8x256xf32>
    %153 = tpu.reciprocal %152 {approx = true} : vector<8x256xf32> -> vector<8x256xf32>
    %154 = arith.mulf %152, %153 : vector<8x256xf32>
    %cst_64 = arith.constant 2.000000e+00 : f32
    %155 = vector.broadcast %cst_64 : f32 to vector<8x256xf32>
    %156 = arith.subf %155, %154 : vector<8x256xf32>
    %157 = arith.mulf %153, %156 : vector<8x256xf32>
    %cst_65 = arith.constant 1.06140542 : f32
    %158 = vector.broadcast %cst_65 : f32 to vector<8x256xf32>
    %159 = arith.mulf %158, %157 : vector<8x256xf32>
    %cst_66 = arith.constant -1.45315206 : f32
    %160 = vector.broadcast %cst_66 : f32 to vector<8x256xf32>
    %161 = arith.addf %159, %160 : vector<8x256xf32>
    %162 = arith.mulf %161, %157 : vector<8x256xf32>
    %cst_67 = arith.constant 1.42141378 : f32
    %163 = vector.broadcast %cst_67 : f32 to vector<8x256xf32>
    %164 = arith.addf %162, %163 : vector<8x256xf32>
    %165 = arith.mulf %164, %157 : vector<8x256xf32>
    %cst_68 = arith.constant -0.284496725 : f32
    %166 = vector.broadcast %cst_68 : f32 to vector<8x256xf32>
    %167 = arith.addf %165, %166 : vector<8x256xf32>
    %168 = arith.mulf %167, %157 : vector<8x256xf32>
    %cst_69 = arith.constant 0.254829586 : f32
    %169 = vector.broadcast %cst_69 : f32 to vector<8x256xf32>
    %170 = arith.addf %168, %169 : vector<8x256xf32>
    %171 = arith.mulf %170, %157 : vector<8x256xf32>
    %cst_70 = arith.constant 0.000000e+00 : f32
    %172 = vector.broadcast %cst_70 : f32 to vector<8x256xf32>
    %173 = arith.subf %172, %148 : vector<8x256xf32>
    %174 = arith.mulf %173, %148 : vector<8x256xf32>
    %175 = math.exp %174 : vector<8x256xf32>
    %176 = arith.mulf %171, %175 : vector<8x256xf32>
    %cst_71 = arith.constant 1.000000e+00 : f32
    %177 = vector.broadcast %cst_71 : f32 to vector<8x256xf32>
    %178 = arith.subf %177, %176 : vector<8x256xf32>
    %179 = arith.mulf %147, %178 : vector<8x256xf32>
    %cst_72 = arith.constant 1.000000e+00 : f32
    %180 = vector.broadcast %cst_72 : f32 to vector<8x256xf32>
    %181 = arith.addf %180, %179 : vector<8x256xf32>
    %182 = arith.mulf %140, %181 : vector<8x256xf32>
    %183 = arith.mulf %137, %182 : vector<8x256xf32>
    %c0_73 = arith.constant 0 : index
    %c0_74 = arith.constant 0 : index
    %184 = vector.load %arg18[%c0_73, %c0_74] : memref<256x64xf32, #tpu.memory_space<vmem>>, vector<256x64xf32>
    %cst_75 = arith.constant dense<0.000000e+00> : vector<8x64xf32>
    %185 = tpu.matmul %183, %184, %cst_75 {dimension_numbers = #tpu.dot_dimension_numbers<[1], [0], [0], [1], [0, 0, 1, 1], [], []>} : vector<8x256xf32>, vector<256x64xf32>, vector<8x64xf32> -> vector<8x64xf32>
    %c0_76 = arith.constant 0 : index
    %c0_77 = arith.constant 0 : index
    %186 = vector.load %arg19[%c0_76, %c0_77] : memref<1x64xf32, #tpu.memory_space<vmem>>, vector<1x64xf32>
    %187 = vector.broadcast %186 : vector<1x64xf32> to vector<8x64xf32>
    %188 = arith.addf %185, %187 : vector<8x64xf32>
    %189 = arith.addf %107, %188 : vector<8x64xf32>
    %c0_78 = arith.constant 0 : index
    %c0_79 = arith.constant 0 : index
    %c0_80 = arith.constant 0 : index
    %190 = vector.load %arg20[%c0_78, %c0_79, %c0_80] : memref<1x8x64xf32, #tpu.memory_space<vmem>>, vector<1x8x64xf32>
    %191 = vector.shape_cast %190 : vector<1x8x64xf32> to vector<8x64xf32>
    %192 = vector.shape_cast %189 : vector<8x64xf32> to vector<1x8x64xf32>
    tpu.vector_store %arg20[%c0_78, %c0_79, %c0_80], %192 {strides = array<i32>} : memref<1x8x64xf32, #tpu.memory_space<vmem>>, vector<1x8x64xf32>,
    return
  }
  func.func @transform_0(%arg0: i32, %arg1: i32) -> (i32, i32, i32) {
    %c0_i32 = arith.constant 0 : i32
    %c0_i32_0 = arith.constant 0 : i32
    %c0_i32_1 = arith.constant 0 : i32
    return %arg0, %c0_i32, %c0_i32_0 : i32, i32, i32
  }
  func.func @transform_1(%arg0: i32, %arg1: i32) -> (i32, i32, i32) {
    %c0_i32 = arith.constant 0 : i32
    %c0_i32_0 = arith.constant 0 : i32
    %c0_i32_1 = arith.constant 0 : i32
    return %arg0, %c0_i32, %c0_i32_0 : i32, i32, i32
  }
  func.func @transform_2(%arg0: i32, %arg1: i32) -> (i32, i32) {
    %c0_i32 = arith.constant 0 : i32
    %c0_i32_0 = arith.constant 0 : i32
    %c0_i32_1 = arith.constant 0 : i32
    return %c0_i32, %c0_i32_0 : i32, i32
  }
  func.func @transform_3(%arg0: i32, %arg1: i32) -> (i32, i32) {
    %c0_i32 = arith.constant 0 : i32
    %c0_i32_0 = arith.constant 0 : i32
    %c0_i32_1 = arith.constant 0 : i32
    return %c0_i32, %c0_i32_0 : i32, i32
  }
  func.func @transform_4(%arg0: i32, %arg1: i32) -> (i32, i32) {
    %c0_i32 = arith.constant 0 : i32
    %c0_i32_0 = arith.constant 0 : i32
    %c0_i32_1 = arith.constant 0 : i32
    return %c0_i32, %c0_i32_0 : i32, i32
  }
  func.func @transform_5(%arg0: i32, %arg1: i32) -> (i32, i32) {
    %c0_i32 = arith.constant 0 : i32
    %c0_i32_0 = arith.constant 0 : i32
    %c0_i32_1 = arith.constant 0 : i32
    return %c0_i32, %c0_i32_0 : i32, i32
  }
  func.func @transform_6(%arg0: i32, %arg1: i32) -> (i32, i32) {
    %c0_i32 = arith.constant 0 : i32
    %c0_i32_0 = arith.constant 0 : i32
    %c0_i32_1 = arith.constant 0 : i32
    return %c0_i32, %c0_i32_0 : i32, i32
  }
  func.func @transform_7(%arg0: i32, %arg1: i32) -> (i32, i32) {
    %c0_i32 = arith.constant 0 : i32
    %c0_i32_0 = arith.constant 0 : i32
    %c0_i32_1 = arith.constant 0 : i32
    return %c0_i32, %c0_i32_0 : i32, i32
  }
  func.func @transform_8(%arg0: i32, %arg1: i32) -> (i32, i32) {
    %c0_i32 = arith.constant 0 : i32
    %c0_i32_0 = arith.constant 0 : i32
    %c0_i32_1 = arith.constant 0 : i32
    return %c0_i32, %c0_i32_0 : i32, i32
  }
  func.func @transform_9(%arg0: i32, %arg1: i32) -> (i32, i32) {
    %c0_i32 = arith.constant 0 : i32
    %c0_i32_0 = arith.constant 0 : i32
    %c0_i32_1 = arith.constant 0 : i32
    return %c0_i32, %c0_i32_0 : i32, i32
  }
  func.func @transform_10(%arg0: i32, %arg1: i32) -> (i32, i32) {
    %c0_i32 = arith.constant 0 : i32
    %c0_i32_0 = arith.constant 0 : i32
    %c0_i32_1 = arith.constant 0 : i32
    return %c0_i32, %c0_i32_0 : i32, i32
  }
  func.func @transform_11(%arg0: i32, %arg1: i32) -> (i32, i32) {
    %c0_i32 = arith.constant 0 : i32
    %c0_i32_0 = arith.constant 0 : i32
    %c0_i32_1 = arith.constant 0 : i32
    return %c0_i32, %c0_i32_0 : i32, i32
  }
  func.func @transform_12(%arg0: i32, %arg1: i32) -> (i32, i32) {
    %c0_i32 = arith.constant 0 : i32
    %c0_i32_0 = arith.constant 0 : i32
    %c0_i32_1 = arith.constant 0 : i32
    return %c0_i32, %c0_i32_0 : i32, i32
  }
  func.func @transform_13(%arg0: i32, %arg1: i32) -> (i32, i32) {
    %c0_i32 = arith.constant 0 : i32
    %c0_i32_0 = arith.constant 0 : i32
    %c0_i32_1 = arith.constant 0 : i32
    return %c0_i32, %c0_i32_0 : i32, i32
  }
  func.func @transform_14(%arg0: i32, %arg1: i32) -> (i32, i32) {
    %c0_i32 = arith.constant 0 : i32
    %c0_i32_0 = arith.constant 0 : i32
    %c0_i32_1 = arith.constant 0 : i32
    return %c0_i32, %c0_i32_0 : i32, i32
  }
  func.func @transform_15(%arg0: i32, %arg1: i32) -> (i32, i32) {
    %c0_i32 = arith.constant 0 : i32
    %c0_i32_0 = arith.constant 0 : i32
    %c0_i32_1 = arith.constant 0 : i32
    return %c0_i32, %c0_i32_0 : i32, i32
  }
  func.func @transform_16(%arg0: i32, %arg1: i32) -> (i32, i32) {
    %c0_i32 = arith.constant 0 : i32
    %c0_i32_0 = arith.constant 0 : i32
    %c0_i32_1 = arith.constant 0 : i32
    return %c0_i32, %c0_i32_0 : i32, i32
  }
  func.func @transform_17(%arg0: i32, %arg1: i32) -> (i32, i32) {
    %c0_i32 = arith.constant 0 : i32
    %c0_i32_0 = arith.constant 0 : i32
    %c0_i32_1 = arith.constant 0 : i32
    return %c0_i32, %c0_i32_0 : i32, i32
  }
  func.func @transform_18(%arg0: i32, %arg1: i32) -> (i32, i32, i32) {
    %c0_i32 = arith.constant 0 : i32
    %c0_i32_0 = arith.constant 0 : i32
    return %arg0, %arg1, %c0_i32 : i32, i32, i32
  }
}

</mosaic_0001>

<llo_original>
// kernel: tpu_custom_call.1
$region0: #{tpu_custom_call.1}
  #allocation0 [shape = 'u32[]', space=smem, size = 0x4, offset = 0x4, fixed_abs, tag = 'smem constant byte address 0x4 - core index']
  #allocation1 [shape = 'u32[144,128]{1,0:T(1,128)}', space=vmem, size = 0x12000, scoped, tag = 'internal scratch']
  %s0 = inlined_call_operand.hbm [shape: f32[8,128], index: 0, kind: input, shape index: {}]
  %s1 = inlined_call_operand.hbm [shape: f32[8,128], index: 1, kind: output, shape index: {}]
  %s2 = sld [smem:[#allocation0]]
  $region41: #{tpu_custom_call.1} parent=0
    _
  %s4 = ssub.s32 1, %s2
  %s5 = scalar_select 0, %s4, %s2
  $region1: #{tpu_custom_call.1} parent=0
    #allocation2 [shape = 'u8[4096]{0}', space=vmem, size = 0x1000, scoped, tag = 'input window, operand 0, single buffered']
    #allocation3 [shape = 's32[2]{0}', space=sflag, size = 0x8, scoped, tag = 'scoped memory for tpu_custom_call.1']
    #allocation4 [shape = 's32[2]{0}', space=sflag, size = 0x8, scoped, tag = 'scoped memory for tpu_custom_call.1']
    #allocation5 [shape = 'u8[4096]{0}', space=vmem, size = 0x1000, scoped, tag = 'output window, operand 0, single buffered']
    %6 = vsyncpa [#allocation3], 0
    %7 = vsyncpa [#allocation4], 0
    loop: start=0, step=1, limit=4
    $region2: #{tpu_custom_call.1} parent=1 // loop_pre_header
      _
    $region3: #{tpu_custom_call.1} parent=1 // loop_header
      %s9 = sphi 0, %s13
      %p10 = scmp.ge.s32.totalorder %s9, 4
      %s17 = sphi 0, %s17
      %s19 = sphi 0, %s17
      %s20 = sphi 0, %s19
      %s34 = sphi 0, %s20
      %s38 = sphi 0, %s38
      %s40 = sphi 0, %s38
      %s41 = sphi 0, %s40
      %s55 = sphi 0, %s41
    $region4: #{tpu_custom_call.1} parent=1 // loop_header_branch
      %12 = sbr.rel (%p10) target = $region8
    $region5: #{tpu_custom_call.1} parent=1 // loop_body
      %s14 = ssub.s32 %s9, 1
      %s15 = ssub.s32 %s9, 2
      %s16 = sadd.s32 %s9, 1
      %s18 = sadd.s32 %s17, 1
      %p21 = scmp.eq.s32.totalorder %s9, 1
      %p22 = scmp.ne.s32.totalorder %s17, %s19
      %p23 = scmp.eq.s32.totalorder %s9, 0
      %p24 = por %p22, %p23
      %p25 = scmp.ne.s32.totalorder %s17, %s19
      %p26 = scmp.eq.s32.totalorder %s14, 1
      %p27 = por %p25, %p26
      %p28 = scmp.ne.s32.totalorder %s19, %s20
      %p29 = scmp.eq.s32.totalorder %s14, 0
      %p30 = por %p28, %p29
      %p31 = scmp.ne.s32.totalorder %s19, %s20
      %p32 = scmp.eq.s32.totalorder %s15, 1
      %p33 = por %p31, %p32
      %p35 = scmp.ne.s32.totalorder %s20, %s34
      %p36 = scmp.eq.s32.totalorder %s15, 0
      %p37 = por %p35, %p36
      %s39 = sadd.s32 %s38, 1
      %p42 = scmp.eq.s32.totalorder %s9, 1
      %p43 = scmp.ne.s32.totalorder %s38, %s40
      %p44 = scmp.eq.s32.totalorder %s9, 0
      %p45 = por %p43, %p44
      %p46 = scmp.ne.s32.totalorder %s38, %s40
      %p47 = scmp.eq.s32.totalorder %s14, 1
      %p48 = por %p46, %p47
      %p49 = scmp.ne.s32.totalorder %s40, %s41
      %p50 = scmp.eq.s32.totalorder %s14, 0
      %p51 = por %p49, %p50
      %p52 = scmp.ne.s32.totalorder %s40, %s41
      %p53 = scmp.eq.s32.totalorder %s15, 1
      %p54 = por %p52, %p53
      %p56 = scmp.ne.s32.totalorder %s41, %s55
      %p57 = scmp.eq.s32.totalorder %s15, 0
      %p58 = por %p56, %p57
      %p59 = scmp.le.s32.totalorder 1, %s9
      %p60 = scmp.lt.s32.totalorder %s9, 3
      %p61 = pnand %p59, %p60
      %p62 = pneg %p61
      // Predicated region
      $region9: #{tpu_custom_call.1} parent=5 // pred_check
        _
      $region10: #{tpu_custom_call.1} parent=5 // pred_check_branch
        %64 = sbr.rel (%p61) target = $region12
      $region11: #{tpu_custom_call.1} parent=5 // pred_region
        %s65 = ssub.s32 %s9, 1
        // Predicated region
        $region13: #{tpu_custom_call.1} parent=11 // pred_check
          %p66 = pneg %p30
        $region14: #{tpu_custom_call.1} parent=11 // pred_check_branch
          %68 = sbr.rel (%p66) target = $region16
        $region15: #{tpu_custom_call.1} parent=11 // pred_region
          %s70 = ssub.s32 128, 128
          %71 = vsyncadd [#allocation3], %s70
          %s73 = sshll.u32 [#allocation2], 4
          %s74 = int_to_ptr.vmem [resolvable:$true] %s73
          %76 = dma.hbm_to_vmem [thread:$0]  %s0, 128, %s74, [#allocation3]
        $region16: #{tpu_custom_call.1} parent=11 // pred_fallthru
          _
      $region12: #{tpu_custom_call.1} parent=5 // pred_fallthru
        _
      %p77 = scmp.lt.s32.totalorder %s9, 2
      // Predicated region
      $region17: #{tpu_custom_call.1} parent=5 // pred_check
        %p78 = pneg %p77
      $region18: #{tpu_custom_call.1} parent=5 // pred_check_branch
        %80 = sbr.rel (%p78) target = $region20
      $region19: #{tpu_custom_call.1} parent=5 // pred_region
        _
      $region20: #{tpu_custom_call.1} parent=5 // pred_fallthru
        _
      %p81 = scmp.le.s32.totalorder 1, %s9
      %p82 = scmp.lt.s32.totalorder %s9, 3
      %p83 = pnand %p81, %p82
      %p84 = pneg %p83
      // Predicated region
      $region21: #{tpu_custom_call.1} parent=5 // pred_check
        _
      $region22: #{tpu_custom_call.1} parent=5 // pred_check_branch
        %86 = sbr.rel (%p83) target = $region24
      $region23: #{tpu_custom_call.1} parent=5 // pred_region
        %s87 = ssub.s32 %s9, 1
        // Predicated region
        $region25: #{tpu_custom_call.1} parent=23 // pred_check
          %p88 = pneg %p30
        $region26: #{tpu_custom_call.1} parent=23 // pred_check_branch
          %90 = sbr.rel (%p88) target = $region28
        $region27: #{tpu_custom_call.1} parent=23 // pred_region
          %91 = dma.done [#allocation3], 128
        $region28: #{tpu_custom_call.1} parent=23 // pred_fallthru
          _
        %p92 = pneg %p30
        %p93 = pneg %p27
        %p94 = pneg %p51
        %p95 = pneg %p48
        %v96 = vld [vmem:[#allocation2] sm:$0xff]
        %v97 = vmul.f32 %v96, 2.0
        %98 = vst [vmem:[#allocation5] sm:$0xff] %v97
        // Predicated region
        $region29: #{tpu_custom_call.1} parent=23 // pred_check
          %p99 = pneg %p48
        $region30: #{tpu_custom_call.1} parent=23 // pred_check_branch
          %101 = sbr.rel (%p99) target = $region32
        $region31: #{tpu_custom_call.1} parent=23 // pred_region
          %s103 = ssub.s32 128, 128
          %104 = vsyncadd [#allocation4], %s103
          %s106 = sshll.u32 [#allocation5], 4
          %s107 = int_to_ptr.vmem [resolvable:$true] %s106
          %109 = dma.vmem_to_hbm [thread:$0]  %s107, 128, %s1, [#allocation4]
        $region32: #{tpu_custom_call.1} parent=23 // pred_fallthru
          _
        // Predicated region
        $region33: #{tpu_custom_call.1} parent=23 // pred_check
          %p110 = pneg %p48
        $region34: #{tpu_custom_call.1} parent=23 // pred_check_branch
          %112 = sbr.rel (%p110) target = $region36
        $region35: #{tpu_custom_call.1} parent=23 // pred_region
          %113 = dma.done [#allocation4], 128
        $region36: #{tpu_custom_call.1} parent=23 // pred_fallthru
          _
      $region24: #{tpu_custom_call.1} parent=5 // pred_fallthru
        _
      %p114 = scmp.le.s32.totalorder 2, %s9
      // Predicated region
      $region37: #{tpu_custom_call.1} parent=5 // pred_check
        %p115 = pneg %p114
      $region38: #{tpu_custom_call.1} parent=5 // pred_check_branch
        %117 = sbr.rel (%p115) target = $region40
      $region39: #{tpu_custom_call.1} parent=5 // pred_region
        %s118 = ssub.s32 %s9, 2
      $region40: #{tpu_custom_call.1} parent=5 // pred_fallthru
        _
    $region6: #{tpu_custom_call.1} parent=1 // loop_footer
      %s13 = sadd.s32 1, %s9
    $region7: #{tpu_custom_call.1} parent=1 // loop_footer_branch
      %8 = sbr.rel target = $region3
    $region8: #{tpu_custom_call.1} parent=1 // loop_exit
      _
    %119 = vsyncpa [#allocation3], 1
    %s120 = scalar_lea.sflag [#allocation3], 1
    %121 = vsyncpa %s120, 1
    %122 = vsyncpa [#allocation4], 1
    %s123 = scalar_lea.sflag [#allocation4], 1
    %124 = vsyncpa %s123, 1

// kernel: tpu_custom_call.1
$region0: #{tpu_custom_call.1}
  #allocation0 [shape = 'u32[]', space=smem, size = 0x4, offset = 0x4, fixed_abs, tag = 'smem constant byte address 0x4 - core index']
  #allocation1 [shape = 'u32[144,128]{1,0:T(1,128)}', space=vmem, size = 0x12000, scoped, tag = 'internal scratch']
  #allocation2 [shape = 'f32[4,16,32]{2,1,0:T(8,128)}', space=vmem, size = 0x8000, scoped, tag = 'scratch operand']
  #allocation3 [shape = 'f32[4,8,32]{2,1,0:T(8,128)}', space=vmem, size = 0x4000, scoped, tag = 'scratch operand']
  %s0 = inlined_call_operand.hbm [shape: f32[2,16,64], index: 0, kind: input, shape index: {}]
  %s1 = inlined_call_operand.hbm [shape: f32[2,8,96], index: 1, kind: input, shape index: {}]
  %s2 = inlined_call_operand.hbm [shape: f32[1,64], index: 2, kind: input, shape index: {}]
  %s3 = inlined_call_operand.hbm [shape: f32[64,64], index: 3, kind: input, shape index: {}]
  %s4 = inlined_call_operand.hbm [shape: f32[64,128], index: 4, kind: input, shape index: {}]
  %s5 = inlined_call_operand.hbm [shape: f32[64,64], index: 5, kind: input, shape index: {}]
  %s6 = inlined_call_operand.hbm [shape: f32[1,64], index: 6, kind: input, shape index: {}]
  %s7 = inlined_call_operand.hbm [shape: f32[1,64], index: 7, kind: input, shape index: {}]
  %s8 = inlined_call_operand.hbm [shape: f32[64,64], index: 8, kind: input, shape index: {}]
  %s9 = inlined_call_operand.hbm [shape: f32[96,128], index: 9, kind: input, shape index: {}]
  %s10 = inlined_call_operand.hbm [shape: f32[64,64], index: 10, kind: input, shape index: {}]
  %s11 = inlined_call_operand.hbm [shape: f32[1,64], index: 11, kind: input, shape index: {}]
  %s12 = inlined_call_operand.hbm [shape: f32[1,64], index: 12, kind: input, shape index: {}]
  %s13 = inlined_call_operand.hbm [shape: f32[1,64], index: 13, kind: input, shape index: {}]
  %s14 = inlined_call_operand.hbm [shape: f32[64,512], index: 14, kind: input, shape index: {}]
  %s15 = inlined_call_operand.hbm [shape: f32[1,512], index: 15, kind: input, shape index: {}]
  %s16 = inlined_call_operand.hbm [shape: f32[256,64], index: 16, kind: input, shape index: {}]
  %s17 = inlined_call_operand.hbm [shape: f32[1,64], index: 17, kind: input, shape index: {}]
  %s18 = inlined_call_operand.hbm [shape: f32[2,16,64], index: 18, kind: output, shape index: {}]
  %s19 = sld [smem:[#allocation0]]
  $region181: #{tpu_custom_call.1} parent=0
    _
  %s21 = ssub.s32 1, %s19
  %s22 = scalar_select 0, %s21, %s19
  $region1: #{tpu_custom_call.1} parent=0
    #allocation4 [shape = 'u8[16384]{0}', space=vmem, size = 0x4000, scoped, tag = 'input window, operand 0']
    #allocation5 [shape = 's32[2]{0}', space=sflag, size = 0x8, scoped, tag = 'scoped memory for tpu_custom_call.1']
    #allocation6 [shape = 's32[2]{0}', space=sflag, size = 0x8, scoped, tag = 'scoped memory for tpu_custom_call.1']
    #allocation7 [shape = 'u8[8192]{0}', space=vmem, size = 0x2000, scoped, tag = 'input window, operand 1']
    #allocation8 [shape = 's32[2]{0}', space=sflag, size = 0x8, scoped, tag = 'scoped memory for tpu_custom_call.1']
    #allocation9 [shape = 'u8[512]{0}', space=vmem, size = 0x400, scoped, tag = 'input window, operand 2, single buffered']
    #allocation10 [shape = 'u8[32768]{0}', space=vmem, size = 0x8000, scoped, tag = 'input window, operand 3, single buffered']
    #allocation11 [shape = 's32[1]{0}', space=sflag, size = 0x4, scoped, tag = 'scoped memory for tpu_custom_call.1']
    #allocation12 [shape = 'u8[32768]{0}', space=vmem, size = 0x8000, scoped, tag = 'input window, operand 4, single buffered']
    #allocation13 [shape = 'u8[32768]{0}', space=vmem, size = 0x8000, scoped, tag = 'input window, operand 5, single buffered']
    #allocation14 [shape = 's32[1]{0}', space=sflag, size = 0x4, scoped, tag = 'scoped memory for tpu_custom_call.1']
    #allocation15 [shape = 'u8[512]{0}', space=vmem, size = 0x400, scoped, tag = 'input window, operand 6, single buffered']
    #allocation16 [shape = 'u8[512]{0}', space=vmem, size = 0x400, scoped, tag = 'input window, operand 7, single buffered']
    #allocation17 [shape = 's32[1]{0}', space=sflag, size = 0x4, scoped, tag = 'scoped memory for tpu_custom_call.1']
    #allocation18 [shape = 'u8[32768]{0}', space=vmem, size = 0x8000, scoped, tag = 'input window, operand 8, single buffered']
    #allocation19 [shape = 'u8[49152]{0}', space=vmem, size = 0xc000, scoped, tag = 'input window, operand 9, single buffered']
    #allocation20 [shape = 's32[1]{0}', space=sflag, size = 0x4, scoped, tag = 'scoped memory for tpu_custom_call.1']
    #allocation21 [shape = 'u8[32768]{0}', space=vmem, size = 0x8000, scoped, tag = 'input window, operand 10, single buffered']
    #allocation22 [shape = 'u8[512]{0}', space=vmem, size = 0x400, scoped, tag = 'input window, operand 11, single buffered']
    #allocation23 [shape = 's32[1]{0}', space=sflag, size = 0x4, scoped, tag = 'scoped memory for tpu_custom_call.1']
    #allocation24 [shape = 'u8[512]{0}', space=vmem, size = 0x400, scoped, tag = 'input window, operand 12, single buffered']
    #allocation25 [shape = 'u8[512]{0}', space=vmem, size = 0x400, scoped, tag = 'input window, operand 13, single buffered']
    #allocation26 [shape = 's32[1]{0}', space=sflag, size = 0x4, scoped, tag = 'scoped memory for tpu_custom_call.1']
    #allocation27 [shape = 'u8[131072]{0}', space=vmem, size = 0x20000, scoped, tag = 'input window, operand 14, single buffered']
    #allocation28 [shape = 'u8[2048]{0}', space=vmem, size = 0x800, scoped, tag = 'input window, operand 15, single buffered']
    #allocation29 [shape = 's32[1]{0}', space=sflag, size = 0x4, scoped, tag = 'scoped memory for tpu_custom_call.1']
    #allocation30 [shape = 'u8[131072]{0}', space=vmem, size = 0x20000, scoped, tag = 'input window, operand 16, single buffered']
    #allocation31 [shape = 'u8[512]{0}', space=vmem, size = 0x400, scoped, tag = 'input window, operand 17, single buffered']
    #allocation32 [shape = 's32[1]{0}', space=sflag, size = 0x4, scoped, tag = 'scoped memory for tpu_custom_call.1']
    #allocation33 [shape = 'u8[8192]{0}', space=vmem, size = 0x2000, scoped, tag = 'output window, operand 0']
    %23 = vsyncpa [#allocation5], 0
    %s24 = scalar_lea.sflag [#allocation5], 1
    %25 = vsyncpa %s24, 0
    %26 = vsyncpa [#allocation8], 0
    %s27 = scalar_lea.sflag [#allocation8], 1
    %28 = vsyncpa %s27, 0
    %29 = vsyncpa [#allocation11], 0
    %30 = vsyncpa [#allocation14], 0
    %31 = vsyncpa [#allocation17], 0
    %32 = vsyncpa [#allocation20], 0
    %33 = vsyncpa [#allocation23], 0
    %34 = vsyncpa [#allocation26], 0
    %35 = vsyncpa [#allocation29], 0
    %36 = vsyncpa [#allocation32], 0
    %37 = vsyncpa [#allocation6], 0
    %s38 = scalar_lea.sflag [#allocation6], 1
    %39 = vsyncpa %s38, 0
    loop: start=0, step=1, limit=6
    $region2: #{tpu_custom_call.1} parent=1 // loop_pre_header
      _
    $region3: #{tpu_custom_call.1} parent=1 // loop_header
      %s41 = sphi 0, %s45
      %p42 = scmp.ge.s32.totalorder %s41, 6
      %s48 = sphi 0, %s60
      %s49 = sphi 0, %s56
      %s50 = sphi 0, %s48
      %s51 = sphi 0, %s49
      %s52 = sphi 0, %s50
      %s53 = sphi 0, %s51
      %s63 = sphi 0, %s65
      %s66 = sphi 0, %s63
      %s67 = sphi 0, %s66
      %s83 = sphi 0, %s67
      %s89 = sphi 0, %s91
      %s92 = sphi 0, %s89
      %s93 = sphi 0, %s92
      %s109 = sphi 0, %s93
      %s113 = sphi 0, %s113
      %s115 = sphi 0, %s113
      %s116 = sphi 0, %s115
      %s130 = sphi 0, %s116
      %s134 = sphi 0, %s134
      %s136 = sphi 0, %s134
      %s137 = sphi 0, %s136
      %s151 = sphi 0, %s137
      %s155 = sphi 0, %s155
      %s157 = sphi 0, %s155
      %s158 = sphi 0, %s157
      %s172 = sphi 0, %s158
      %s176 = sphi 0, %s176
      %s178 = sphi 0, %s176
      %s179 = sphi 0, %s178
      %s193 = sphi 0, %s179
      %s197 = sphi 0, %s197
      %s199 = sphi 0, %s197
      %s200 = sphi 0, %s199
      %s214 = sphi 0, %s200
      %s218 = sphi 0, %s218
      %s220 = sphi 0, %s218
      %s221 = sphi 0, %s220
      %s235 = sphi 0, %s221
      %s239 = sphi 0, %s239
      %s241 = sphi 0, %s239
      %s242 = sphi 0, %s241
      %s256 = sphi 0, %s242
      %s260 = sphi 0, %s260
      %s262 = sphi 0, %s260
      %s263 = sphi 0, %s262
      %s277 = sphi 0, %s263
      %s281 = sphi 0, %s281
      %s283 = sphi 0, %s281
      %s284 = sphi 0, %s283
      %s298 = sphi 0, %s284
      %s302 = sphi 0, %s302
      %s304 = sphi 0, %s302
      %s305 = sphi 0, %s304
      %s319 = sphi 0, %s305
      %s323 = sphi 0, %s323
      %s325 = sphi 0, %s323
      %s326 = sphi 0, %s325
      %s340 = sphi 0, %s326
      %s344 = sphi 0, %s344
      %s346 = sphi 0, %s344
      %s347 = sphi 0, %s346
      %s361 = sphi 0, %s347
      %s365 = sphi 0, %s365
      %s367 = sphi 0, %s365
      %s368 = sphi 0, %s367
      %s382 = sphi 0, %s368
      %s386 = sphi 0, %s386
      %s388 = sphi 0, %s386
      %s389 = sphi 0, %s388
      %s403 = sphi 0, %s389
      %s407 = sphi 0, %s407
      %s409 = sphi 0, %s407
      %s410 = sphi 0, %s409
      %s424 = sphi 0, %s410
      %s428 = sphi 0, %s428
      %s430 = sphi 0, %s428
      %s431 = sphi 0, %s430
      %s445 = sphi 0, %s431
      %s453 = sphi 0, %s455
      %s456 = sphi 0, %s453
      %s457 = sphi 0, %s456
      %s473 = sphi 0, %s457
    $region4: #{tpu_custom_call.1} parent=1 // loop_header_branch
      %44 = sbr.rel (%p42) target = $region8
    $region5: #{tpu_custom_call.1} parent=1 // loop_body
      %s46 = ssub.s32 %s41, 1
      %s47 = ssub.s32 %s41, 2
      %s54 = sadd.s32 1, %s49
      %p55 = scmp.ge.s32.totalorder %s54, 2
      %s56 = scalar_select %p55, 0, %s54
      %s57 = sadd.s32 1, %s48
      %s58 = scalar_select %p55, %s57, %s48
      %p59 = scmp.ge.s32.totalorder %s58, 2
      %s60 = scalar_select %p59, 0, %s58
      %s61 = ssub.s32 %s48, %s60
      %p62 = scmp.eq.s32.totalorder %s61, 0
      %s64 = sadd.s32 %s63, 1
      %s65 = scalar_select %p62, %s63, %s64
      %p68 = pneg %p62
      %p69 = scmp.eq.s32.totalorder %s41, 3
      %p70 = por %p68, %p69
      %p71 = scmp.ne.s32.totalorder %s63, %s66
      %p72 = scmp.eq.s32.totalorder %s41, 0
      %p73 = por %p71, %p72
      %p74 = scmp.ne.s32.totalorder %s63, %s66
      %p75 = scmp.eq.s32.totalorder %s46, 3
      %p76 = por %p74, %p75
      %p77 = scmp.ne.s32.totalorder %s66, %s67
      %p78 = scmp.eq.s32.totalorder %s46, 0
      %p79 = por %p77, %p78
      %p80 = scmp.ne.s32.totalorder %s66, %s67
      %p81 = scmp.eq.s32.totalorder %s47, 3
      %p82 = por %p80, %p81
      %p84 = scmp.ne.s32.totalorder %s67, %s83
      %p85 = scmp.eq.s32.totalorder %s47, 0
      %p86 = por %p84, %p85
      %s87 = ssub.s32 %s48, %s60
      %p88 = scmp.eq.s32.totalorder %s87, 0
      %s90 = sadd.s32 %s89, 1
      %s91 = scalar_select %p88, %s89, %s90
      %p94 = pneg %p88
      %p95 = scmp.eq.s32.totalorder %s41, 3
      %p96 = por %p94, %p95
      %p97 = scmp.ne.s32.totalorder %s89, %s92
      %p98 = scmp.eq.s32.totalorder %s41, 0
      %p99 = por %p97, %p98
      %p100 = scmp.ne.s32.totalorder %s89, %s92
      %p101 = scmp.eq.s32.totalorder %s46, 3
      %p102 = por %p100, %p101
      %p103 = scmp.ne.s32.totalorder %s92, %s93
      %p104 = scmp.eq.s32.totalorder %s46, 0
      %p105 = por %p103, %p104
      %p106 = scmp.ne.s32.totalorder %s92, %s93
      %p107 = scmp.eq.s32.totalorder %s47, 3
      %p108 = por %p106, %p107
      %p110 = scmp.ne.s32.totalorder %s93, %s109
      %p111 = scmp.eq.s32.totalorder %s47, 0
      %p112 = por %p110, %p111
      %s114 = sadd.s32 %s113, 1
      %p117 = scmp.eq.s32.totalorder %s41, 3
      %p118 = scmp.ne.s32.totalorder %s113, %s115
      %p119 = scmp.eq.s32.totalorder %s41, 0
      %p120 = por %p118, %p119
      %p121 = scmp.ne.s32.totalorder %s113, %s115
      %p122 = scmp.eq.s32.totalorder %s46, 3
      %p123 = por %p121, %p122
      %p124 = scmp.ne.s32.totalorder %s115, %s116
      %p125 = scmp.eq.s32.totalorder %s46, 0
      %p126 = por %p124, %p125
      %p127 = scmp.ne.s32.totalorder %s115, %s116
      %p128 = scmp.eq.s32.totalorder %s47, 3
      %p129 = por %p127, %p128
      %p131 = scmp.ne.s32.totalorder %s116, %s130
      %p132 = scmp.eq.s32.totalorder %s47, 0
      %p133 = por %p131, %p132
      %s135 = sadd.s32 %s134, 1
      %p138 = scmp.eq.s32.totalorder %s41, 3
      %p139 = scmp.ne.s32.totalorder %s134, %s136
      %p140 = scmp.eq.s32.totalorder %s41, 0
      %p141 = por %p139, %p140
      %p142 = scmp.ne.s32.totalorder %s134, %s136
      %p143 = scmp.eq.s32.totalorder %s46, 3
      %p144 = por %p142, %p143
      %p145 = scmp.ne.s32.totalorder %s136, %s137
      %p146 = scmp.eq.s32.totalorder %s46, 0
      %p147 = por %p145, %p146
      %p148 = scmp.ne.s32.totalorder %s136, %s137
      %p149 = scmp.eq.s32.totalorder %s47, 3
      %p150 = por %p148, %p149
      %p152 = scmp.ne.s32.totalorder %s137, %s151
      %p153 = scmp.eq.s32.totalorder %s47, 0
      %p154 = por %p152, %p153
      %s156 = sadd.s32 %s155, 1
      %p159 = scmp.eq.s32.totalorder %s41, 3
      %p160 = scmp.ne.s32.totalorder %s155, %s157
      %p161 = scmp.eq.s32.totalorder %s41, 0
      %p162 = por %p160, %p161
      %p163 = scmp.ne.s32.totalorder %s155, %s157
      %p164 = scmp.eq.s32.totalorder %s46, 3
      %p165 = por %p163, %p164
      %p166 = scmp.ne.s32.totalorder %s157, %s158
      %p167 = scmp.eq.s32.totalorder %s46, 0
      %p168 = por %p166, %p167
      %p169 = scmp.ne.s32.totalorder %s157, %s158
      %p170 = scmp.eq.s32.totalorder %s47, 3
      %p171 = por %p169, %p170
      %p173 = scmp.ne.s32.totalorder %s158, %s172
      %p174 = scmp.eq.s32.totalorder %s47, 0
      %p175 = por %p173, %p174
      %s177 = sadd.s32 %s176, 1
      %p180 = scmp.eq.s32.totalorder %s41, 3
      %p181 = scmp.ne.s32.totalorder %s176, %s178
      %p182 = scmp.eq.s32.totalorder %s41, 0
      %p183 = por %p181, %p182
      %p184 = scmp.ne.s32.totalorder %s176, %s178
      %p185 = scmp.eq.s32.totalorder %s46, 3
      %p186 = por %p184, %p185
      %p187 = scmp.ne.s32.totalorder %s178, %s179
      %p188 = scmp.eq.s32.totalorder %s46, 0
      %p189 = por %p187, %p188
      %p190 = scmp.ne.s32.totalorder %s178, %s179
      %p191 = scmp.eq.s32.totalorder %s47, 3
      %p192 = por %p190, %p191
      %p194 = scmp.ne.s32.totalorder %s179, %s193
      %p195 = scmp.eq.s32.totalorder %s47, 0
      %p196 = por %p194, %p195
      %s198 = sadd.s32 %s197, 1
      %p201 = scmp.eq.s32.totalorder %s41, 3
      %p202 = scmp.ne.s32.totalorder %s197, %s199
      %p203 = scmp.eq.s32.totalorder %s41, 0
      %p204 = por %p202, %p203
      %p205 = scmp.ne.s32.totalorder %s197, %s199
      %p206 = scmp.eq.s32.totalorder %s46, 3
      %p207 = por %p205, %p206
      %p208 = scmp.ne.s32.totalorder %s199, %s200
      %p209 = scmp.eq.s32.totalorder %s46, 0
      %p210 = por %p208, %p209
      %p211 = scmp.ne.s32.totalorder %s199, %s200
      %p212 = scmp.eq.s32.totalorder %s47, 3
      %p213 = por %p211, %p212
      %p215 = scmp.ne.s32.totalorder %s200, %s214
      %p216 = scmp.eq.s32.totalorder %s47, 0
      %p217 = por %p215, %p216
      %s219 = sadd.s32 %s218, 1
      %p222 = scmp.eq.s32.totalorder %s41, 3
      %p223 = scmp.ne.s32.totalorder %s218, %s220
      %p224 = scmp.eq.s32.totalorder %s41, 0
      %p225 = por %p223, %p224
      %p226 = scmp.ne.s32.totalorder %s218, %s220
      %p227 = scmp.eq.s32.totalorder %s46, 3
      %p228 = por %p226, %p227
      %p229 = scmp.ne.s32.totalorder %s220, %s221
      %p230 = scmp.eq.s32.totalorder %s46, 0
      %p231 = por %p229, %p230
      %p232 = scmp.ne.s32.totalorder %s220, %s221
      %p233 = scmp.eq.s32.totalorder %s47, 3
      %p234 = por %p232, %p233
      %p236 = scmp.ne.s32.totalorder %s221, %s235
      %p237 = scmp.eq.s32.totalorder %s47, 0
      %p238 = por %p236, %p237
      %s240 = sadd.s32 %s239, 1
      %p243 = scmp.eq.s32.totalorder %s41, 3
      %p244 = scmp.ne.s32.totalorder %s239, %s241
      %p245 = scmp.eq.s32.totalorder %s41, 0
      %p246 = por %p244, %p245
      %p247 = scmp.ne.s32.totalorder %s239, %s241
      %p248 = scmp.eq.s32.totalorder %s46, 3
      %p249 = por %p247, %p248
      %p250 = scmp.ne.s32.totalorder %s241, %s242
      %p251 = scmp.eq.s32.totalorder %s46, 0
      %p252 = por %p250, %p251
      %p253 = scmp.ne.s32.totalorder %s241, %s242
      %p254 = scmp.eq.s32.totalorder %s47, 3
      %p255 = por %p253, %p254
      %p257 = scmp.ne.s32.totalorder %s242, %s256
      %p258 = scmp.eq.s32.totalorder %s47, 0
      %p259 = por %p257, %p258
      %s261 = sadd.s32 %s260, 1
      %p264 = scmp.eq.s32.totalorder %s41, 3
      %p265 = scmp.ne.s32.totalorder %s260, %s262
      %p266 = scmp.eq.s32.totalorder %s41, 0
      %p267 = por %p265, %p266
      %p268 = scmp.ne.s32.totalorder %s260, %s262
      %p269 = scmp.eq.s32.totalorder %s46, 3
      %p270 = por %p268, %p269
      %p271 = scmp.ne.s32.totalorder %s262, %s263
      %p272 = scmp.eq.s32.totalorder %s46, 0
      %p273 = por %p271, %p272
      %p274 = scmp.ne.s32.totalorder %s262, %s263
      %p275 = scmp.eq.s32.totalorder %s47, 3
      %p276 = por %p274, %p275
      %p278 = scmp.ne.s32.totalorder %s263, %s277
      %p279 = scmp.eq.s32.totalorder %s47, 0
      %p280 = por %p278, %p279
      %s282 = sadd.s32 %s281, 1
      %p285 = scmp.eq.s32.totalorder %s41, 3
      %p286 = scmp.ne.s32.totalorder %s281, %s283
      %p287 = scmp.eq.s32.totalorder %s41, 0
      %p288 = por %p286, %p287
      %p289 = scmp.ne.s32.totalorder %s281, %s283
      %p290 = scmp.eq.s32.totalorder %s46, 3
      %p291 = por %p289, %p290
      %p292 = scmp.ne.s32.totalorder %s283, %s284
      %p293 = scmp.eq.s32.totalorder %s46, 0
      %p294 = por %p292, %p293
      %p295 = scmp.ne.s32.totalorder %s283, %s284
      %p296 = scmp.eq.s32.totalorder %s47, 3
      %p297 = por %p295, %p296
      %p299 = scmp.ne.s32.totalorder %s284, %s298
      %p300 = scmp.eq.s32.totalorder %s47, 0
      %p301 = por %p299, %p300
      %s303 = sadd.s32 %s302, 1
      %p306 = scmp.eq.s32.totalorder %s41, 3
      %p307 = scmp.ne.s32.totalorder %s302, %s304
      %p308 = scmp.eq.s32.totalorder %s41, 0
      %p309 = por %p307, %p308
      %p310 = scmp.ne.s32.totalorder %s302, %s304
      %p311 = scmp.eq.s32.totalorder %s46, 3
      %p312 = por %p310, %p311
      %p313 = scmp.ne.s32.totalorder %s304, %s305
      %p314 = scmp.eq.s32.totalorder %s46, 0
      %p315 = por %p313, %p314
      %p316 = scmp.ne.s32.totalorder %s304, %s305
      %p317 = scmp.eq.s32.totalorder %s47, 3
      %p318 = por %p316, %p317
      %p320 = scmp.ne.s32.totalorder %s305, %s319
      %p321 = scmp.eq.s32.totalorder %s47, 0
      %p322 = por %p320, %p321
      %s324 = sadd.s32 %s323, 1
      %p327 = scmp.eq.s32.totalorder %s41, 3
      %p328 = scmp.ne.s32.totalorder %s323, %s325
      %p329 = scmp.eq.s32.totalorder %s41, 0
      %p330 = por %p328, %p329
      %p331 = scmp.ne.s32.totalorder %s323, %s325
      %p332 = scmp.eq.s32.totalorder %s46, 3
      %p333 = por %p331, %p332
      %p334 = scmp.ne.s32.totalorder %s325, %s326
      %p335 = scmp.eq.s32.totalorder %s46, 0
      %p336 = por %p334, %p335
      %p337 = scmp.ne.s32.totalorder %s325, %s326
      %p338 = scmp.eq.s32.totalorder %s47, 3
      %p339 = por %p337, %p338
      %p341 = scmp.ne.s32.totalorder %s326, %s340
      %p342 = scmp.eq.s32.totalorder %s47, 0
      %p343 = por %p341, %p342
      %s345 = sadd.s32 %s344, 1
      %p348 = scmp.eq.s32.totalorder %s41, 3
      %p349 = scmp.ne.s32.totalorder %s344, %s346
      %p350 = scmp.eq.s32.totalorder %s41, 0
      %p351 = por %p349, %p350
      %p352 = scmp.ne.s32.totalorder %s344, %s346
      %p353 = scmp.eq.s32.totalorder %s46, 3
      %p354 = por %p352, %p353
      %p355 = scmp.ne.s32.totalorder %s346, %s347
      %p356 = scmp.eq.s32.totalorder %s46, 0
      %p357 = por %p355, %p356
      %p358 = scmp.ne.s32.totalorder %s346, %s347
      %p359 = scmp.eq.s32.totalorder %s47, 3
      %p360 = por %p358, %p359
      %p362 = scmp.ne.s32.totalorder %s347, %s361
      %p363 = scmp.eq.s32.totalorder %s47, 0
      %p364 = por %p362, %p363
      %s366 = sadd.s32 %s365, 1
      %p369 = scmp.eq.s32.totalorder %s41, 3
      %p370 = scmp.ne.s32.totalorder %s365, %s367
      %p371 = scmp.eq.s32.totalorder %s41, 0
      %p372 = por %p370, %p371
      %p373 = scmp.ne.s32.totalorder %s365, %s367
      %p374 = scmp.eq.s32.totalorder %s46, 3
      %p375 = por %p373, %p374
      %p376 = scmp.ne.s32.totalorder %s367, %s368
      %p377 = scmp.eq.s32.totalorder %s46, 0
      %p378 = por %p376, %p377
      %p379 = scmp.ne.s32.totalorder %s367, %s368
      %p380 = scmp.eq.s32.totalorder %s47, 3
      %p381 = por %p379, %p380
      %p383 = scmp.ne.s32.totalorder %s368, %s382
      %p384 = scmp.eq.s32.totalorder %s47, 0
      %p385 = por %p383, %p384
      %s387 = sadd.s32 %s386, 1
      %p390 = scmp.eq.s32.totalorder %s41, 3
      %p391 = scmp.ne.s32.totalorder %s386, %s388
      %p392 = scmp.eq.s32.totalorder %s41, 0
      %p393 = por %p391, %p392
      %p394 = scmp.ne.s32.totalorder %s386, %s388
      %p395 = scmp.eq.s32.totalorder %s46, 3
      %p396 = por %p394, %p395
      %p397 = scmp.ne.s32.totalorder %s388, %s389
      %p398 = scmp.eq.s32.totalorder %s46, 0
      %p399 = por %p397, %p398
      %p400 = scmp.ne.s32.totalorder %s388, %s389
      %p401 = scmp.eq.s32.totalorder %s47, 3
      %p402 = por %p400, %p401
      %p404 = scmp.ne.s32.totalorder %s389, %s403
      %p405 = scmp.eq.s32.totalorder %s47, 0
      %p406 = por %p404, %p405
      %s408 = sadd.s32 %s407, 1
      %p411 = scmp.eq.s32.totalorder %s41, 3
      %p412 = scmp.ne.s32.totalorder %s407, %s409
      %p413 = scmp.eq.s32.totalorder %s41, 0
      %p414 = por %p412, %p413
      %p415 = scmp.ne.s32.totalorder %s407, %s409
      %p416 = scmp.eq.s32.totalorder %s46, 3
      %p417 = por %p415, %p416
      %p418 = scmp.ne.s32.totalorder %s409, %s410
      %p419 = scmp.eq.s32.totalorder %s46, 0
      %p420 = por %p418, %p419
      %p421 = scmp.ne.s32.totalorder %s409, %s410
      %p422 = scmp.eq.s32.totalorder %s47, 3
      %p423 = por %p421, %p422
      %p425 = scmp.ne.s32.totalorder %s410, %s424
      %p426 = scmp.eq.s32.totalorder %s47, 0
      %p427 = por %p425, %p426
      %s429 = sadd.s32 %s428, 1
      %p432 = scmp.eq.s32.totalorder %s41, 3
      %p433 = scmp.ne.s32.totalorder %s428, %s430
      %p434 = scmp.eq.s32.totalorder %s41, 0
      %p435 = por %p433, %p434
      %p436 = scmp.ne.s32.totalorder %s428, %s430
      %p437 = scmp.eq.s32.totalorder %s46, 3
      %p438 = por %p436, %p437
      %p439 = scmp.ne.s32.totalorder %s430, %s431
      %p440 = scmp.eq.s32.totalorder %s46, 0
      %p441 = por %p439, %p440
      %p442 = scmp.ne.s32.totalorder %s430, %s431
      %p443 = scmp.eq.s32.totalorder %s47, 3
      %p444 = por %p442, %p443
      %p446 = scmp.ne.s32.totalorder %s431, %s445
      %p447 = scmp.eq.s32.totalorder %s47, 0
      %p448 = por %p446, %p447
      %s449 = ssub.s32 %s48, %s60
      %s450 = ssub.s32 %s49, %s56
      %s451 = sor.u32 %s449, %s450
      %p452 = scmp.eq.s32.totalorder %s451, 0
      %s454 = sadd.s32 %s453, 1
      %s455 = scalar_select %p452, %s453, %s454
      %p458 = pneg %p452
      %p459 = scmp.eq.s32.totalorder %s41, 3
      %p460 = por %p458, %p459
      %p461 = scmp.ne.s32.totalorder %s453, %s456
      %p462 = scmp.eq.s32.totalorder %s41, 0
      %p463 = por %p461, %p462
      %p464 = scmp.ne.s32.totalorder %s453, %s456
      %p465 = scmp.eq.s32.totalorder %s46, 3
      %p466 = por %p464, %p465
      %p467 = scmp.ne.s32.totalorder %s456, %s457
      %p468 = scmp.eq.s32.totalorder %s46, 0
      %p469 = por %p467, %p468
      %p470 = scmp.ne.s32.totalorder %s456, %s457
      %p471 = scmp.eq.s32.totalorder %s47, 3
      %p472 = por %p470, %p471
      %p474 = scmp.ne.s32.totalorder %s457, %s473
      %p475 = scmp.eq.s32.totalorder %s47, 0
      %p476 = por %p474, %p475
      %p477 = scmp.le.s32.totalorder 1, %s41
      %p478 = scmp.lt.s32.totalorder %s41, 5
      %p479 = pnand %p477, %p478
      %p480 = pneg %p479
      // Predicated region
      $region9: #{tpu_custom_call.1} parent=5 // pred_check
        _
      $region10: #{tpu_custom_call.1} parent=5 // pred_check_branch
        %482 = sbr.rel (%p479) target = $region12
      $region11: #{tpu_custom_call.1} parent=5 // pred_region
        %s483 = ssub.s32 %s41, 1
        // Predicated region
        $region13: #{tpu_custom_call.1} parent=11 // pred_check
          %p484 = pneg %p126
        $region14: #{tpu_custom_call.1} parent=11 // pred_check_branch
          %486 = sbr.rel (%p484) target = $region16
        $region15: #{tpu_custom_call.1} parent=11 // pred_region
          %s488 = ssub.s32 16, 16
          %489 = vsyncadd [#allocation8], %s488
          %s491 = sshll.u32 [#allocation9], 4
          %s492 = int_to_ptr.vmem [resolvable:$true] %s491
          %494 = dma.hbm_to_vmem [thread:$0]  %s2, 16, %s492, [#allocation8]
        $region16: #{tpu_custom_call.1} parent=11 // pred_fallthru
          _
        // Predicated region
        $region17: #{tpu_custom_call.1} parent=11 // pred_check
          %p495 = pneg %p147
        $region18: #{tpu_custom_call.1} parent=11 // pred_check_branch
          %497 = sbr.rel (%p495) target = $region20
        $region19: #{tpu_custom_call.1} parent=11 // pred_region
          %s499 = ssub.s32 1024, 1024
          %500 = vsyncadd [#allocation11], %s499
          %s501 = sshll.u32 [#allocation10], 4
          %s502 = int_to_ptr.vmem [resolvable:$true] %s501
          %507 = dma.hbm_to_vmem [thread:$0]  %s3, 1024, %s502, [#allocation11], 128, 128, 8
        $region20: #{tpu_custom_call.1} parent=11 // pred_fallthru
          _
        // Predicated region
        $region21: #{tpu_custom_call.1} parent=11 // pred_check
          %p508 = pneg %p168
        $region22: #{tpu_custom_call.1} parent=11 // pred_check_branch
          %510 = sbr.rel (%p508) target = $region24
        $region23: #{tpu_custom_call.1} parent=11 // pred_region
          %s512 = ssub.s32 1024, 1024
          %513 = vsyncadd [#allocation11], %s512
          %s514 = sshll.u32 [#allocation12], 4
          %s515 = int_to_ptr.vmem [resolvable:$true] %s514
          %520 = dma.hbm_to_vmem [thread:$0]  %s4, 1024, %s515, [#allocation11], 128, 128, 8
        $region24: #{tpu_custom_call.1} parent=11 // pred_fallthru
          _
        // Predicated region
        $region25: #{tpu_custom_call.1} parent=11 // pred_check
          %p521 = pneg %p189
        $region26: #{tpu_custom_call.1} parent=11 // pred_check_branch
          %523 = sbr.rel (%p521) target = $region28
        $region27: #{tpu_custom_call.1} parent=11 // pred_region
          %s525 = ssub.s32 1024, 1024
          %526 = vsyncadd [#allocation14], %s525
          %s527 = sshll.u32 [#allocation13], 4
          %s528 = int_to_ptr.vmem [resolvable:$true] %s527
          %533 = dma.hbm_to_vmem [thread:$0]  %s5, 1024, %s528, [#allocation14], 128, 128, 8
        $region28: #{tpu_custom_call.1} parent=11 // pred_fallthru
          _
        // Predicated region
        $region29: #{tpu_custom_call.1} parent=11 // pred_check
          %p534 = pneg %p210
        $region30: #{tpu_custom_call.1} parent=11 // pred_check_branch
          %536 = sbr.rel (%p534) target = $region32
        $region31: #{tpu_custom_call.1} parent=11 // pred_region
          %s538 = ssub.s32 16, 16
          %539 = vsyncadd [#allocation14], %s538
          %s541 = sshll.u32 [#allocation15], 4
          %s542 = int_to_ptr.vmem [resolvable:$true] %s541
          %544 = dma.hbm_to_vmem [thread:$0]  %s6, 16, %s542, [#allocation14]
        $region32: #{tpu_custom_call.1} parent=11 // pred_fallthru
          _
        // Predicated region
        $region33: #{tpu_custom_call.1} parent=11 // pred_check
          %p545 = pneg %p231
        $region34: #{tpu_custom_call.1} parent=11 // pred_check_branch
          %547 = sbr.rel (%p545) target = $region36
        $region35: #{tpu_custom_call.1} parent=11 // pred_region
          %s549 = ssub.s32 16, 16
          %550 = vsyncadd [#allocation17], %s549
          %s552 = sshll.u32 [#allocation16], 4
          %s553 = int_to_ptr.vmem [resolvable:$true] %s552
          %555 = dma.hbm_to_vmem [thread:$0]  %s7, 16, %s553, [#allocation17]
        $region36: #{tpu_custom_call.1} parent=11 // pred_fallthru
          _
        // Predicated region
        $region37: #{tpu_custom_call.1} parent=11 // pred_check
          %p556 = pneg %p252
        $region38: #{tpu_custom_call.1} parent=11 // pred_check_branch
          %558 = sbr.rel (%p556) target = $region40
        $region39: #{tpu_custom_call.1} parent=11 // pred_region
          %s560 = ssub.s32 1024, 1024
          %561 = vsyncadd [#allocation17], %s560
          %s562 = sshll.u32 [#allocation18], 4
          %s563 = int_to_ptr.vmem [resolvable:$true] %s562
          %568 = dma.hbm_to_vmem [thread:$0]  %s8, 1024, %s563, [#allocation17], 128, 128, 8
        $region40: #{tpu_custom_call.1} parent=11 // pred_fallthru
          _
        // Predicated region
        $region41: #{tpu_custom_call.1} parent=11 // pred_check
          %p569 = pneg %p273
        $region42: #{tpu_custom_call.1} parent=11 // pred_check_branch
          %571 = sbr.rel (%p569) target = $region44
        $region43: #{tpu_custom_call.1} parent=11 // pred_region
          %s573 = ssub.s32 1536, 1536
          %574 = vsyncadd [#allocation20], %s573
          %s575 = sshll.u32 [#allocation19], 4
          %s576 = int_to_ptr.vmem [resolvable:$true] %s575
          %581 = dma.hbm_to_vmem [thread:$0]  %s9, 1536, %s576, [#allocation20], 128, 128, 8
        $region44: #{tpu_custom_call.1} parent=11 // pred_fallthru
          _
        // Predicated region
        $region45: #{tpu_custom_call.1} parent=11 // pred_check
          %p582 = pneg %p294
        $region46: #{tpu_custom_call.1} parent=11 // pred_check_branch
          %584 = sbr.rel (%p582) target = $region48
        $region47: #{tpu_custom_call.1} parent=11 // pred_region
          %s586 = ssub.s32 1024, 1024
          %587 = vsyncadd [#allocation20], %s586
          %s588 = sshll.u32 [#allocation21], 4
          %s589 = int_to_ptr.vmem [resolvable:$true] %s588
          %594 = dma.hbm_to_vmem [thread:$0]  %s10, 1024, %s589, [#allocation20], 128, 128, 8
        $region48: #{tpu_custom_call.1} parent=11 // pred_fallthru
          _
        // Predicated region
        $region49: #{tpu_custom_call.1} parent=11 // pred_check
          %p595 = pneg %p315
        $region50: #{tpu_custom_call.1} parent=11 // pred_check_branch
          %597 = sbr.rel (%p595) target = $region52
        $region51: #{tpu_custom_call.1} parent=11 // pred_region
          %s599 = ssub.s32 16, 16
          %600 = vsyncadd [#allocation23], %s599
          %s602 = sshll.u32 [#allocation22], 4
          %s603 = int_to_ptr.vmem [resolvable:$true] %s602
          %605 = dma.hbm_to_vmem [thread:$0]  %s11, 16, %s603, [#allocation23]
        $region52: #{tpu_custom_call.1} parent=11 // pred_fallthru
          _
        // Predicated region
        $region53: #{tpu_custom_call.1} parent=11 // pred_check
          %p606 = pneg %p336
        $region54: #{tpu_custom_call.1} parent=11 // pred_check_branch
          %608 = sbr.rel (%p606) target = $region56
        $region55: #{tpu_custom_call.1} parent=11 // pred_region
          %s610 = ssub.s32 16, 16
          %611 = vsyncadd [#allocation23], %s610
          %s613 = sshll.u32 [#allocation24], 4
          %s614 = int_to_ptr.vmem [resolvable:$true] %s613
          %616 = dma.hbm_to_vmem [thread:$0]  %s12, 16, %s614, [#allocation23]
        $region56: #{tpu_custom_call.1} parent=11 // pred_fallthru
          _
        // Predicated region
        $region57: #{tpu_custom_call.1} parent=11 // pred_check
          %p617 = pneg %p357
        $region58: #{tpu_custom_call.1} parent=11 // pred_check_branch
          %619 = sbr.rel (%p617) target = $region60
        $region59: #{tpu_custom_call.1} parent=11 // pred_region
          %s621 = ssub.s32 16, 16
          %622 = vsyncadd [#allocation26], %s621
          %s624 = sshll.u32 [#allocation25], 4
          %s625 = int_to_ptr.vmem [resolvable:$true] %s624
          %627 = dma.hbm_to_vmem [thread:$0]  %s13, 16, %s625, [#allocation26]
        $region60: #{tpu_custom_call.1} parent=11 // pred_fallthru
          _
        // Predicated region
        $region61: #{tpu_custom_call.1} parent=11 // pred_check
          %p628 = pneg %p378
        $region62: #{tpu_custom_call.1} parent=11 // pred_check_branch
          %630 = sbr.rel (%p628) target = $region64
        $region63: #{tpu_custom_call.1} parent=11 // pred_region
          %s632 = ssub.s32 4096, 4096
          %633 = vsyncadd [#allocation26], %s632
          %s634 = sshll.u32 [#allocation27], 4
          %s635 = int_to_ptr.vmem [resolvable:$true] %s634
          %640 = dma.hbm_to_vmem [thread:$0]  %s14, 4096, %s635, [#allocation26], 512, 512, 32
        $region64: #{tpu_custom_call.1} parent=11 // pred_fallthru
          _
        // Predicated region
        $region65: #{tpu_custom_call.1} parent=11 // pred_check
          %p641 = pneg %p399
        $region66: #{tpu_custom_call.1} parent=11 // pred_check_branch
          %643 = sbr.rel (%p641) target = $region68
        $region67: #{tpu_custom_call.1} parent=11 // pred_region
          %s645 = ssub.s32 64, 64
          %646 = vsyncadd [#allocation29], %s645
          %s648 = sshll.u32 [#allocation28], 4
          %s649 = int_to_ptr.vmem [resolvable:$true] %s648
          %651 = dma.hbm_to_vmem [thread:$0]  %s15, 64, %s649, [#allocation29]
        $region68: #{tpu_custom_call.1} parent=11 // pred_fallthru
          _
        // Predicated region
        $region69: #{tpu_custom_call.1} parent=11 // pred_check
          %p652 = pneg %p420
        $region70: #{tpu_custom_call.1} parent=11 // pred_check_branch
          %654 = sbr.rel (%p652) target = $region72
        $region71: #{tpu_custom_call.1} parent=11 // pred_region
          %s656 = ssub.s32 4096, 4096
          %657 = vsyncadd [#allocation29], %s656
          %s658 = sshll.u32 [#allocation30], 4
          %s659 = int_to_ptr.vmem [resolvable:$true] %s658
          %664 = dma.hbm_to_vmem [thread:$0]  %s16, 4096, %s659, [#allocation29], 128, 128, 8
        $region72: #{tpu_custom_call.1} parent=11 // pred_fallthru
          _
        // Predicated region
        $region73: #{tpu_custom_call.1} parent=11 // pred_check
          %p665 = pneg %p441
        $region74: #{tpu_custom_call.1} parent=11 // pred_check_branch
          %667 = sbr.rel (%p665) target = $region76
        $region75: #{tpu_custom_call.1} parent=11 // pred_region
          %s669 = ssub.s32 16, 16
          %670 = vsyncadd [#allocation32], %s669
          %s672 = sshll.u32 [#allocation31], 4
          %s673 = int_to_ptr.vmem [resolvable:$true] %s672
          %675 = dma.hbm_to_vmem [thread:$0]  %s17, 16, %s673, [#allocation32]
        $region76: #{tpu_custom_call.1} parent=11 // pred_fallthru
          _
      $region12: #{tpu_custom_call.1} parent=5 // pred_fallthru
        _
      %p676 = scmp.lt.s32.totalorder %s41, 4
      // Predicated region
      $region77: #{tpu_custom_call.1} parent=5 // pred_check
        %p677 = pneg %p676
      $region78: #{tpu_custom_call.1} parent=5 // pred_check_branch
        %679 = sbr.rel (%p677) target = $region80
      $region79: #{tpu_custom_call.1} parent=5 // pred_region
        // Predicated region
        $region81: #{tpu_custom_call.1} parent=79 // pred_check
          %p680 = pneg %p73
        $region82: #{tpu_custom_call.1} parent=79 // pred_check_branch
          %682 = sbr.rel (%p680) target = $region84
        $region83: #{tpu_custom_call.1} parent=79 // pred_region
          %s683 = sand.u32 %s63, 1
          %s684 = scalar_lea.sflag [#allocation5], %s683
          %s685 = sand.u32 %s63, 1
          %s686 = smul.addr %s685, 16
          %s687 = scalar_lea.vmem [#allocation4], %s686
          %s689 = ssub.s32 256, 256
          %690 = vsyncadd %s684, %s689
          %s691 = smul.addr %s48, 2
          %s692 = smul.addr %s691, 128
          %s693 = scalar_lea.hbm %s0, %s692
          %s694 = sshll.u32 %s687, 4
          %s695 = int_to_ptr.vmem [resolvable:$true] %s694
          %700 = dma.hbm_to_vmem [thread:$0]  %s693, 256, %s695, %s684, 128, 128, 8
        $region84: #{tpu_custom_call.1} parent=79 // pred_fallthru
          _
        // Predicated region
        $region85: #{tpu_custom_call.1} parent=79 // pred_check
          %p701 = pneg %p99
        $region86: #{tpu_custom_call.1} parent=79 // pred_check_branch
          %703 = sbr.rel (%p701) target = $region88
        $region87: #{tpu_custom_call.1} parent=79 // pred_region
          %s704 = sand.u32 %s41, 1
          %s705 = scalar_lea.sflag [#allocation8], %s704
          %s706 = sand.u32 %s89, 1
          %s707 = smul.addr %s706, 8
          %s708 = scalar_lea.vmem [#allocation7], %s707
          %s710 = ssub.s32 128, 128
          %711 = vsyncadd %s705, %s710
          %s712 = smul.addr %s48, 128
          %s713 = scalar_lea.hbm %s1, %s712
          %s715 = sshll.u32 %s708, 4
          %s716 = int_to_ptr.vmem [resolvable:$true] %s715
          %718 = dma.hbm_to_vmem [thread:$0]  %s713, 128, %s716, %s705
        $region88: #{tpu_custom_call.1} parent=79 // pred_fallthru
          _
      $region80: #{tpu_custom_call.1} parent=5 // pred_fallthru
        _
      %p719 = scmp.le.s32.totalorder 1, %s41
      %p720 = scmp.lt.s32.totalorder %s41, 5
      %p721 = pnand %p719, %p720
      %p722 = pneg %p721
      // Predicated region
      $region89: #{tpu_custom_call.1} parent=5 // pred_check
        _
      $region90: #{tpu_custom_call.1} parent=5 // pred_check_branch
        %724 = sbr.rel (%p721) target = $region92
      $region91: #{tpu_custom_call.1} parent=5 // pred_region
        %s725 = ssub.s32 %s41, 1
        %s726 = sand.u32 %s66, 1
        %s727 = scalar_lea.sflag [#allocation5], %s726
        %s728 = sand.u32 %s66, 1
        %s729 = smul.addr %s728, 16
        %s730 = scalar_lea.vmem [#allocation4], %s729
        // Predicated region
        $region93: #{tpu_custom_call.1} parent=91 // pred_check
          %p731 = pneg %p79
        $region94: #{tpu_custom_call.1} parent=91 // pred_check_branch
          %733 = sbr.rel (%p731) target = $region96
        $region95: #{tpu_custom_call.1} parent=91 // pred_region
          %734 = dma.done %s727, 256
        $region96: #{tpu_custom_call.1} parent=91 // pred_fallthru
          _
        %s735 = sand.u32 %s46, 1
        %s736 = scalar_lea.sflag [#allocation8], %s735
        %s737 = sand.u32 %s92, 1
        %s738 = smul.addr %s737, 8
        %s739 = scalar_lea.vmem [#allocation7], %s738
        // Predicated region
        $region97: #{tpu_custom_call.1} parent=91 // pred_check
          %p740 = pneg %p105
        $region98: #{tpu_custom_call.1} parent=91 // pred_check_branch
          %742 = sbr.rel (%p740) target = $region100
        $region99: #{tpu_custom_call.1} parent=91 // pred_region
          %743 = dma.done %s736, 128
        $region100: #{tpu_custom_call.1} parent=91 // pred_fallthru
          _
        // Predicated region
        $region101: #{tpu_custom_call.1} parent=91 // pred_check
          %p744 = pneg %p126
        $region102: #{tpu_custom_call.1} parent=91 // pred_check_branch
          %746 = sbr.rel (%p744) target = $region104
        $region103: #{tpu_custom_call.1} parent=91 // pred_region
          %747 = dma.done [#allocation8], 16
        $region104: #{tpu_custom_call.1} parent=91 // pred_fallthru
          _
        // Predicated region
        $region105: #{tpu_custom_call.1} parent=91 // pred_check
          %p748 = pneg %p147
        $region106: #{tpu_custom_call.1} parent=91 // pred_check_branch
          %750 = sbr.rel (%p748) target = $region108
        $region107: #{tpu_custom_call.1} parent=91 // pred_region
          %751 = dma.done [#allocation11], 1024
        $region108: #{tpu_custom_call.1} parent=91 // pred_fallthru
          _
        // Predicated region
        $region109: #{tpu_custom_call.1} parent=91 // pred_check
          %p752 = pneg %p168
        $region110: #{tpu_custom_call.1} parent=91 // pred_check_branch
          %754 = sbr.rel (%p752) target = $region112
        $region111: #{tpu_custom_call.1} parent=91 // pred_region
          %755 = dma.done [#allocation11], 1024
        $region112: #{tpu_custom_call.1} parent=91 // pred_fallthru
          _
        // Predicated region
        $region113: #{tpu_custom_call.1} parent=91 // pred_check
          %p756 = pneg %p189
        $region114: #{tpu_custom_call.1} parent=91 // pred_check_branch
          %758 = sbr.rel (%p756) target = $region116
        $region115: #{tpu_custom_call.1} parent=91 // pred_region
          %759 = dma.done [#allocation14], 1024
        $region116: #{tpu_custom_call.1} parent=91 // pred_fallthru
          _
        // Predicated region
        $region117: #{tpu_custom_call.1} parent=91 // pred_check
          %p760 = pneg %p210
        $region118: #{tpu_custom_call.1} parent=91 // pred_check_branch
          %762 = sbr.rel (%p760) target = $region120
        $region119: #{tpu_custom_call.1} parent=91 // pred_region
          %763 = dma.done [#allocation14], 16
        $region120: #{tpu_custom_call.1} parent=91 // pred_fallthru
          _
        // Predicated region
        $region121: #{tpu_custom_call.1} parent=91 // pred_check
          %p764 = pneg %p231
        $region122: #{tpu_custom_call.1} parent=91 // pred_check_branch
          %766 = sbr.rel (%p764) target = $region124
        $region123: #{tpu_custom_call.1} parent=91 // pred_region
          %767 = dma.done [#allocation17], 16
        $region124: #{tpu_custom_call.1} parent=91 // pred_fallthru
          _
        // Predicated region
        $region125: #{tpu_custom_call.1} parent=91 // pred_check
          %p768 = pneg %p252
        $region126: #{tpu_custom_call.1} parent=91 // pred_check_branch
          %770 = sbr.rel (%p768) target = $region128
        $region127: #{tpu_custom_call.1} parent=91 // pred_region
          %771 = dma.done [#allocation17], 1024
        $region128: #{tpu_custom_call.1} parent=91 // pred_fallthru
          _
        // Predicated region
        $region129: #{tpu_custom_call.1} parent=91 // pred_check
          %p772 = pneg %p273
        $region130: #{tpu_custom_call.1} parent=91 // pred_check_branch
          %774 = sbr.rel (%p772) target = $region132
        $region131: #{tpu_custom_call.1} parent=91 // pred_region
          %775 = dma.done [#allocation20], 1536
        $region132: #{tpu_custom_call.1} parent=91 // pred_fallthru
          _
        // Predicated region
        $region133: #{tpu_custom_call.1} parent=91 // pred_check
          %p776 = pneg %p294
        $region134: #{tpu_custom_call.1} parent=91 // pred_check_branch
          %778 = sbr.rel (%p776) target = $region136
        $region135: #{tpu_custom_call.1} parent=91 // pred_region
          %779 = dma.done [#allocation20], 1024
        $region136: #{tpu_custom_call.1} parent=91 // pred_fallthru
          _
        // Predicated region
        $region137: #{tpu_custom_call.1} parent=91 // pred_check
          %p780 = pneg %p315
        $region138: #{tpu_custom_call.1} parent=91 // pred_check_branch
          %782 = sbr.rel (%p780) target = $region140
        $region139: #{tpu_custom_call.1} parent=91 // pred_region
          %783 = dma.done [#allocation23], 16
        $region140: #{tpu_custom_call.1} parent=91 // pred_fallthru
          _
        // Predicated region
        $region141: #{tpu_custom_call.1} parent=91 // pred_check
          %p784 = pneg %p336
        $region142: #{tpu_custom_call.1} parent=91 // pred_check_branch
          %786 = sbr.rel (%p784) target = $region144
        $region143: #{tpu_custom_call.1} parent=91 // pred_region
          %787 = dma.done [#allocation23], 16
        $region144: #{tpu_custom_call.1} parent=91 // pred_fallthru
          _
        // Predicated region
        $region145: #{tpu_custom_call.1} parent=91 // pred_check
          %p788 = pneg %p357
        $region146: #{tpu_custom_call.1} parent=91 // pred_check_branch
          %790 = sbr.rel (%p788) target = $region148
        $region147: #{tpu_custom_call.1} parent=91 // pred_region
          %791 = dma.done [#allocation26], 16
        $region148: #{tpu_custom_call.1} parent=91 // pred_fallthru
          _
        // Predicated region
        $region149: #{tpu_custom_call.1} parent=91 // pred_check
          %p792 = pneg %p378
        $region150: #{tpu_custom_call.1} parent=91 // pred_check_branch
          %794 = sbr.rel (%p792) target = $region152
        $region151: #{tpu_custom_call.1} parent=91 // pred_region
          %795 = dma.done [#allocation26], 4096
        $region152: #{tpu_custom_call.1} parent=91 // pred_fallthru
          _
        // Predicated region
        $region153: #{tpu_custom_call.1} parent=91 // pred_check
          %p796 = pneg %p399
        $region154: #{tpu_custom_call.1} parent=91 // pred_check_branch
          %798 = sbr.rel (%p796) target = $region156
        $region155: #{tpu_custom_call.1} parent=91 // pred_region
          %799 = dma.done [#allocation29], 64
        $region156: #{tpu_custom_call.1} parent=91 // pred_fallthru
          _
        // Predicated region
        $region157: #{tpu_custom_call.1} parent=91 // pred_check
          %p800 = pneg %p420
        $region158: #{tpu_custom_call.1} parent=91 // pred_check_branch
          %802 = sbr.rel (%p800) target = $region160
        $region159: #{tpu_custom_call.1} parent=91 // pred_region
          %803 = dma.done [#allocation29], 4096
        $region160: #{tpu_custom_call.1} parent=91 // pred_fallthru
          _
        // Predicated region
        $region161: #{tpu_custom_call.1} parent=91 // pred_check
          %p804 = pneg %p441
        $region162: #{tpu_custom_call.1} parent=91 // pred_check_branch
          %806 = sbr.rel (%p804) target = $region164
        $region163: #{tpu_custom_call.1} parent=91 // pred_region
          %807 = dma.done [#allocation32], 16
        $region164: #{tpu_custom_call.1} parent=91 // pred_fallthru
          _
        %s808 = sand.u32 %s66, 1
        %s809 = scalar_lea.sflag [#allocation5], %s808
        %s810 = sand.u32 %s66, 1
        %s811 = smul.addr %s810, 16
        %s812 = scalar_lea.vmem [#allocation4], %s811
        %p813 = pneg %p79
        %p814 = pneg %p76
        %s815 = sand.u32 %s46, 1
        %s816 = scalar_lea.sflag [#allocation8], %s815
        %s817 = sand.u32 %s92, 1
        %s818 = smul.addr %s817, 8
        %s819 = scalar_lea.vmem [#allocation7], %s818
        %p820 = pneg %p105
        %p821 = pneg %p102
        %p822 = pneg %p126
        %p823 = pneg %p123
        %p824 = pneg %p147
        %p825 = pneg %p144
        %p826 = pneg %p168
        %p827 = pneg %p165
        %p828 = pneg %p189
        %p829 = pneg %p186
        %p830 = pneg %p210
        %p831 = pneg %p207
        %p832 = pneg %p231
        %p833 = pneg %p228
        %p834 = pneg %p252
        %p835 = pneg %p249
        %p836 = pneg %p273
        %p837 = pneg %p270
        %p838 = pneg %p294
        %p839 = pneg %p291
        %p840 = pneg %p315
        %p841 = pneg %p312
        %p842 = pneg %p336
        %p843 = pneg %p333
        %p844 = pneg %p357
        %p845 = pneg %p354
        %p846 = pneg %p378
        %p847 = pneg %p375
        %p848 = pneg %p399
        %p849 = pneg %p396
        %p850 = pneg %p420
        %p851 = pneg %p417
        %p852 = pneg %p441
        %p853 = pneg %p438
        %p854 = pneg %p469
        %p855 = pneg %p466
        %s856 = sand.u32 %s456, 1
        %s857 = scalar_lea.sflag [#allocation6], %s856
        %s858 = sand.u32 %s456, 1
        %s859 = smul.addr %s858, 8
        %s860 = scalar_lea.vmem [#allocation33], %s859
        %p861 = scmp.eq.s32.totalorder %s51, 0
        // Predicated region
        $region165: #{tpu_custom_call.1} parent=91 // pred_check
          %p862 = pneg %p861
        $region166: #{tpu_custom_call.1} parent=91 // pred_check_branch
          %864 = sbr.rel (%p862) target = $region168
        $region167: #{tpu_custom_call.1} parent=91 // pred_region
          %v865 = vld [vmem:[%s730] sm:$0xff]
          %v866 = vld [vmem:[%s730 + $0x8] sm:$0xff]
          %v867 = vld [vmem:[#allocation9] sm:$0x1]
          %v868 = vmul.f32 %v865, %v865
          %v869 = vmul.f32 %v866, %v866
          %vm870 = vcmask 523264
          %v871 = vsel %vm870, %v868, 0.0
          %872 = vadd.xlane.f32.xlu0 %v871
          %v873 = vpop.xlane.xlu0 %872
          %v874 = vsel %vm870, %v869, 0.0
          %875 = vadd.xlane.f32.xlu0 %v874
          %v876 = vpop.xlane.xlu0 %875
          %v877 = vrcp.pop 64.0
          %v878 = vmul.f32 %v873, %v877
          %v879 = vmul.f32 %v876, %v877
          %v880 = vadd.f32 %v878, 1e-05
          %v881 = vadd.f32 %v879, 1e-05
          %v882 = vrsqrt.pop %v880
          %v883 = vrsqrt.pop %v881
          %v884 = vmul.f32 %v865, %v882
          %v885 = vmul.f32 %v866, %v883
          %v887 = vlaneseq
          %v888 = vshrl.u32 %v887, 7
          %v889 = vsub.s32 0, %v888
          %v890 = vrot.slane %v867, %v889
          %v892 = vmul.f32 %v884, %v890
          %v893 = vmul.f32 %v885, %v890
          %v894 = vld [vmem:[#allocation12] sm:$0xff]
          %v895 = vld [vmem:[#allocation12 + $0x8] sm:$0xff]
          %v896 = vld [vmem:[#allocation12 + $0x10] sm:$0xff]
          %v897 = vld [vmem:[#allocation12 + $0x18] sm:$0xff]
          %v898 = vld [vmem:[#allocation12 + $0x20] sm:$0xff]
          %v899 = vld [vmem:[#allocation12 + $0x28] sm:$0xff]
          %v900 = vld [vmem:[#allocation12 + $0x30] sm:$0xff]
          %v901 = vld [vmem:[#allocation12 + $0x38] sm:$0xff]
          %v903 = vsel %vm870, %v892, 0
          %v906 = vsel %vm870, %v893, 0
          %908 = vmatprep.subr.mxu0 0.0
          %909 = vmatpush1.msra.mxu0 %v894
          %910 = vmatprep.subr.mxu0 0.0
          %911 = vmatpush1.msra.mxu0 %v895
          %912 = vmatprep.subr.mxu0 0.0
          %913 = vmatpush1.msra.mxu0 %v896
          %914 = vmatprep.subr.mxu0 0.0
          %915 = vmatpush1.msra.mxu0 %v897
          %916 = vmatprep.subr.mxu0 0.0
          %917 = vmatpush1.msra.mxu0 %v898
          %918 = vmatprep.subr.mxu0 0.0
          %919 = vmatpush1.msra.mxu0 %v899
          %920 = vmatprep.subr.mxu0 0.0
          %921 = vmatpush1.msra.mxu0 %v900
          %922 = vmatprep.subr.mxu0 0.0
          %923 = vmatpush1.msra.mxu0 %v901
          %924 = vmatprep.subr.mxu0 0.0
          %925 = vmatpush1.msra.mxu0 0.0
          %926 = vmatprep.subr.mxu0 0.0
          %927 = vmatpush1.msra.mxu0 0.0
          %928 = vmatprep.subr.mxu0 0.0
          %929 = vmatpush1.msra.mxu0 0.0
          %930 = vmatprep.subr.mxu0 0.0
          %931 = vmatpush1.msra.mxu0 0.0
          %932 = vmatprep.subr.mxu0 0.0
          %933 = vmatpush1.msra.mxu0 0.0
          %934 = vmatprep.subr.mxu0 0.0
          %935 = vmatpush1.msra.mxu0 0.0
          %936 = vmatprep.subr.mxu0 0.0
          %937 = vmatpush1.msra.mxu0 0.0
          %938 = vmatprep.subr.mxu0 0.0
          %939 = vmatpush1.msra.mxu0 0.0
          %940 = vmatprep.subr.mxu0 0.0
          %941 = vmatpush1.msra.mxu0 0.0
          %942 = vmatprep.subr.mxu0 0.0
          %943 = vmatpush1.msra.mxu0 0.0
          %944 = vmatprep.subr.mxu0 0.0
          %945 = vmatpush1.msra.mxu0 0.0
          %946 = vmatprep.subr.mxu0 0.0
          %947 = vmatpush1.msra.mxu0 0.0
          %948 = vmatprep.subr.mxu0 0.0
          %949 = vmatpush1.msra.mxu0 0.0
          %950 = vmatprep.subr.mxu0 0.0
          %951 = vmatpush1.msra.mxu0 0.0
          %952 = vmatprep.subr.mxu0 0.0
          %953 = vmatpush1.msra.mxu0 0.0
          %954 = vmatprep.subr.mxu0 0.0
          %955 = vmatpush1.msra.mxu0 0.0
          %956 = vmatprep.subr.mxu0 0.0
          %957 = vmatpush1.msra.mxu0 0.0
          %958 = vmatprep.subr.mxu0 0.0
          %959 = vmatpush1.msra.mxu0 0.0
          %960 = vmatprep.subr.mxu0 0.0
          %961 = vmatpush1.msra.mxu0 0.0
          %962 = vmatprep.subr.mxu0 0.0
          %963 = vmatpush1.msra.mxu0 0.0
          %964 = vmatprep.subr.mxu0 0.0
          %965 = vmatpush1.msra.mxu0 0.0
          %966 = vmatprep.subr.mxu0 0.0
          %967 = vmatpush1.msra.mxu0 0.0
          %968 = vmatprep.subr.mxu0 0.0
          %969 = vmatpush1.msra.mxu0 0.0
          %970 = vmatprep.subr.mxu0 0.0
          %971 = vmatpush1.msra.mxu0 0.0
          %972 = vmatprep.mubr.f32.mxu0 0.0
          %973 = vmatmul.mubr.f32.gmra.mrb[0].mxu0 %v903
          %v974 = vpop.f32.mrb[0].mxu0
          %v975 = vadd.f32 0.0, %v974
          %v976 = vpop.f32.mrb[0].mxu0
          %977 = vmatprep.mubr.f32.mxu0 0.0
          %978 = vmatmul.mubr.f32.gmra.mrb[0].mxu0 %v906
          %v979 = vpop.f32.mrb[0].mxu0
          %v980 = vadd.f32 0.0, %v979
          %v981 = vpop.f32.mrb[0].mxu0
          %982 = vdwg.mxu0
          %985 = vrot.lane.b32.xlu0 %v975, 96
          %v986 = vpop.permute.xlu0 %985
          %987 = vrot.lane.b32.xlu0 %v980, 96
          %v988 = vpop.permute.xlu0 %987
          %991 = vrot.lane.b32.xlu0 %v975, 64
          %v992 = vpop.permute.xlu0 %991
          %993 = vrot.lane.b32.xlu0 %v980, 64
          %v994 = vpop.permute.xlu0 %993
          %997 = vrot.lane.b32.xlu0 %v975, 32
          %v998 = vpop.permute.xlu0 %997
          %999 = vrot.lane.b32.xlu0 %v980, 32
          %v1000 = vpop.permute.xlu0 %999
          %vm1003 = vcmask 261120
          %1004 = vst.msk [vmem:[#allocation2] sm:$0xff] %vm1003, %v975
          %1005 = vst.msk [vmem:[#allocation2 + $0x8] sm:$0xff] %vm1003, %v980
          %1006 = vst.msk [vmem:[#allocation2 + $0x10] sm:$0xff] %vm1003, %v986
          %1007 = vst.msk [vmem:[#allocation2 + $0x18] sm:$0xff] %vm1003, %v988
          %1008 = vst.msk [vmem:[#allocation2 + $0x20] sm:$0xff] %vm1003, %v992
          %1009 = vst.msk [vmem:[#allocation2 + $0x28] sm:$0xff] %vm1003, %v994
          %1010 = vst.msk [vmem:[#allocation2 + $0x30] sm:$0xff] %vm1003, %v998
          %1011 = vst.msk [vmem:[#allocation2 + $0x38] sm:$0xff] %vm1003, %v1000
          %v1012 = vld [vmem:[%s739] sm:$0xff]
          %v1013 = vld [vmem:[#allocation19] sm:$0xff]
          %v1014 = vld [vmem:[#allocation19 + $0x8] sm:$0xff]
          %v1015 = vld [vmem:[#allocation19 + $0x10] sm:$0xff]
          %v1016 = vld [vmem:[#allocation19 + $0x18] sm:$0xff]
          %v1017 = vld [vmem:[#allocation19 + $0x20] sm:$0xff]
          %v1018 = vld [vmem:[#allocation19 + $0x28] sm:$0xff]
          %v1019 = vld [vmem:[#allocation19 + $0x30] sm:$0xff]
          %v1020 = vld [vmem:[#allocation19 + $0x38] sm:$0xff]
          %v1021 = vld [vmem:[#allocation19 + $0x40] sm:$0xff]
          %v1022 = vld [vmem:[#allocation19 + $0x48] sm:$0xff]
          %v1023 = vld [vmem:[#allocation19 + $0x50] sm:$0xff]
          %v1024 = vld [vmem:[#allocation19 + $0x58] sm:$0xff]
          %vm1025 = vcmask 785408
          %v1027 = vsel %vm1025, %v1012, 0
          %1029 = vmatprep.subr.mxu0 0.0
          %1030 = vmatpush1.msra.mxu0 %v1013
          %1031 = vmatprep.subr.mxu0 0.0
          %1032 = vmatpush1.msra.mxu0 %v1014
          %1033 = vmatprep.subr.mxu0 0.0
          %1034 = vmatpush1.msra.mxu0 %v1015
          %1035 = vmatprep.subr.mxu0 0.0
          %1036 = vmatpush1.msra.mxu0 %v1016
          %1037 = vmatprep.subr.mxu0 0.0
          %1038 = vmatpush1.msra.mxu0 %v1017
          %1039 = vmatprep.subr.mxu0 0.0
          %1040 = vmatpush1.msra.mxu0 %v1018
          %1041 = vmatprep.subr.mxu0 0.0
          %1042 = vmatpush1.msra.mxu0 %v1019
          %1043 = vmatprep.subr.mxu0 0.0
          %1044 = vmatpush1.msra.mxu0 %v1020
          %1045 = vmatprep.subr.mxu0 0.0
          %1046 = vmatpush1.msra.mxu0 %v1021
          %1047 = vmatprep.subr.mxu0 0.0
          %1048 = vmatpush1.msra.mxu0 %v1022
          %1049 = vmatprep.subr.mxu0 0.0
          %1050 = vmatpush1.msra.mxu0 %v1023
          %1051 = vmatprep.subr.mxu0 0.0
          %1052 = vmatpush1.msra.mxu0 %v1024
          %1053 = vmatprep.subr.mxu0 0.0
          %1054 = vmatpush1.msra.mxu0 0.0
          %1055 = vmatprep.subr.mxu0 0.0
          %1056 = vmatpush1.msra.mxu0 0.0
          %1057 = vmatprep.subr.mxu0 0.0
          %1058 = vmatpush1.msra.mxu0 0.0
          %1059 = vmatprep.subr.mxu0 0.0
          %1060 = vmatpush1.msra.mxu0 0.0
          %1061 = vmatprep.subr.mxu0 0.0
          %1062 = vmatpush1.msra.mxu0 0.0
          %1063 = vmatprep.subr.mxu0 0.0
          %1064 = vmatpush1.msra.mxu0 0.0
          %1065 = vmatprep.subr.mxu0 0.0
          %1066 = vmatpush1.msra.mxu0 0.0
          %1067 = vmatprep.subr.mxu0 0.0
          %1068 = vmatpush1.msra.mxu0 0.0
          %1069 = vmatprep.subr.mxu0 0.0
          %1070 = vmatpush1.msra.mxu0 0.0
          %1071 = vmatprep.subr.mxu0 0.0
          %1072 = vmatpush1.msra.mxu0 0.0
          %1073 = vmatprep.subr.mxu0 0.0
          %1074 = vmatpush1.msra.mxu0 0.0
          %1075 = vmatprep.subr.mxu0 0.0
          %1076 = vmatpush1.msra.mxu0 0.0
          %1077 = vmatprep.subr.mxu0 0.0
          %1078 = vmatpush1.msra.mxu0 0.0
          %1079 = vmatprep.subr.mxu0 0.0
          %1080 = vmatpush1.msra.mxu0 0.0
          %1081 = vmatprep.subr.mxu0 0.0
          %1082 = vmatpush1.msra.mxu0 0.0
          %1083 = vmatprep.subr.mxu0 0.0
          %1084 = vmatpush1.msra.mxu0 0.0
          %1085 = vmatprep.subr.mxu0 0.0
          %1086 = vmatpush1.msra.mxu0 0.0
          %1087 = vmatprep.subr.mxu0 0.0
          %1088 = vmatpush1.msra.mxu0 0.0
          %1089 = vmatprep.subr.mxu0 0.0
          %1090 = vmatpush1.msra.mxu0 0.0
          %1091 = vmatprep.subr.mxu0 0.0
          %1092 = vmatpush1.msra.mxu0 0.0
          %1093 = vmatprep.mubr.f32.mxu0 0.0
          %1094 = vmatmul.mubr.f32.gmra.mrb[0].mxu0 %v1027
          %v1095 = vpop.f32.mrb[0].mxu0
          %v1096 = vadd.f32 0.0, %v1095
          %v1097 = vpop.f32.mrb[0].mxu0
          %1098 = vdwg.mxu0
          %1100 = vrot.lane.b32.xlu0 %v1096, 96
          %v1101 = vpop.permute.xlu0 %1100
          %1103 = vrot.lane.b32.xlu0 %v1096, 64
          %v1104 = vpop.permute.xlu0 %1103
          %1106 = vrot.lane.b32.xlu0 %v1096, 32
          %v1107 = vpop.permute.xlu0 %1106
          %1109 = vst.msk [vmem:[#allocation3] sm:$0xff] %vm1003, %v1096
          %1110 = vst.msk [vmem:[#allocation3 + $0x8] sm:$0xff] %vm1003, %v1101
          %1111 = vst.msk [vmem:[#allocation3 + $0x10] sm:$0xff] %vm1003, %v1104
          %1112 = vst.msk [vmem:[#allocation3 + $0x18] sm:$0xff] %vm1003, %v1107
        $region168: #{tpu_custom_call.1} parent=91 // pred_fallthru
          _
        %s1113 = smul.u32 %s51, 8
        %s1114 = scalar_lea.vmem %s730, %s1113 [#allocation4]
        %v1115 = vld [vmem:[%s1114] sm:$0xff]
        %v1116 = vld [vmem:[#allocation9] sm:$0x1]
        %v1117 = vmul.f32 %v1115, %v1115
        %vm1118 = vcmask 523264
        %v1119 = vsel %vm1118, %v1117, 0.0
        %1120 = vadd.xlane.f32.xlu0 %v1119
        %v1121 = vpop.xlane.xlu0 %1120
        %v1122 = vrcp.pop 64.0
        %v1123 = vmul.f32 %v1121, %v1122
        %v1124 = vadd.f32 %v1123, 1e-05
        %v1125 = vrsqrt.pop %v1124
        %v1126 = vmul.f32 %v1115, %v1125
        %v1128 = vlaneseq
        %v1129 = vshrl.u32 %v1128, 7
        %v1130 = vsub.s32 0, %v1129
        %v1131 = vrot.slane %v1116, %v1130
        %v1133 = vmul.f32 %v1126, %v1131
        %v1134 = vld [vmem:[#allocation10] sm:$0xff]
        %v1135 = vld [vmem:[#allocation10 + $0x8] sm:$0xff]
        %v1136 = vld [vmem:[#allocation10 + $0x10] sm:$0xff]
        %v1137 = vld [vmem:[#allocation10 + $0x18] sm:$0xff]
        %v1138 = vld [vmem:[#allocation10 + $0x20] sm:$0xff]
        %v1139 = vld [vmem:[#allocation10 + $0x28] sm:$0xff]
        %v1140 = vld [vmem:[#allocation10 + $0x30] sm:$0xff]
        %v1141 = vld [vmem:[#allocation10 + $0x38] sm:$0xff]
        %v1143 = vsel %vm1118, %v1133, 0
        %1145 = vmatprep.subr.mxu0 0.0
        %1146 = vmatpush1.msra.mxu0 %v1134
        %1147 = vmatprep.subr.mxu0 0.0
        %1148 = vmatpush1.msra.mxu0 %v1135
        %1149 = vmatprep.subr.mxu0 0.0
        %1150 = vmatpush1.msra.mxu0 %v1136
        %1151 = vmatprep.subr.mxu0 0.0
        %1152 = vmatpush1.msra.mxu0 %v1137
        %1153 = vmatprep.subr.mxu0 0.0
        %1154 = vmatpush1.msra.mxu0 %v1138
        %1155 = vmatprep.subr.mxu0 0.0
        %1156 = vmatpush1.msra.mxu0 %v1139
        %1157 = vmatprep.subr.mxu0 0.0
        %1158 = vmatpush1.msra.mxu0 %v1140
        %1159 = vmatprep.subr.mxu0 0.0
        %1160 = vmatpush1.msra.mxu0 %v1141
        %1161 = vmatprep.subr.mxu0 0.0
        %1162 = vmatpush1.msra.mxu0 0.0
        %1163 = vmatprep.subr.mxu0 0.0
        %1164 = vmatpush1.msra.mxu0 0.0
        %1165 = vmatprep.subr.mxu0 0.0
        %1166 = vmatpush1.msra.mxu0 0.0
        %1167 = vmatprep.subr.mxu0 0.0
        %1168 = vmatpush1.msra.mxu0 0.0
        %1169 = vmatprep.subr.mxu0 0.0
        %1170 = vmatpush1.msra.mxu0 0.0
        %1171 = vmatprep.subr.mxu0 0.0
        %1172 = vmatpush1.msra.mxu0 0.0
        %1173 = vmatprep.subr.mxu0 0.0
        %1174 = vmatpush1.msra.mxu0 0.0
        %1175 = vmatprep.subr.mxu0 0.0
        %1176 = vmatpush1.msra.mxu0 0.0
        %1177 = vmatprep.subr.mxu0 0.0
        %1178 = vmatpush1.msra.mxu0 0.0
        %1179 = vmatprep.subr.mxu0 0.0
        %1180 = vmatpush1.msra.mxu0 0.0
        %1181 = vmatprep.subr.mxu0 0.0
        %1182 = vmatpush1.msra.mxu0 0.0
        %1183 = vmatprep.subr.mxu0 0.0
        %1184 = vmatpush1.msra.mxu0 0.0
        %1185 = vmatprep.subr.mxu0 0.0
        %1186 = vmatpush1.msra.mxu0 0.0
        %1187 = vmatprep.subr.mxu0 0.0
        %1188 = vmatpush1.msra.mxu0 0.0
        %1189 = vmatprep.subr.mxu0 0.0
        %1190 = vmatpush1.msra.mxu0 0.0
        %1191 = vmatprep.subr.mxu0 0.0
        %1192 = vmatpush1.msra.mxu0 0.0
        %1193 = vmatprep.subr.mxu0 0.0
        %1194 = vmatpush1.msra.mxu0 0.0
        %1195 = vmatprep.subr.mxu0 0.0
        %1196 = vmatpush1.msra.mxu0 0.0
        %1197 = vmatprep.subr.mxu0 0.0
        %1198 = vmatpush1.msra.mxu0 0.0
        %1199 = vmatprep.subr.mxu0 0.0
        %1200 = vmatpush1.msra.mxu0 0.0
        %1201 = vmatprep.subr.mxu0 0.0
        %1202 = vmatpush1.msra.mxu0 0.0
        %1203 = vmatprep.subr.mxu0 0.0
        %1204 = vmatpush1.msra.mxu0 0.0
        %1205 = vmatprep.subr.mxu0 0.0
        %1206 = vmatpush1.msra.mxu0 0.0
        %1207 = vmatprep.subr.mxu0 0.0
        %1208 = vmatpush1.msra.mxu0 0.0
        %1209 = vmatprep.mubr.f32.mxu0 0.0
        %1210 = vmatmul.mubr.f32.gmra.mrb[0].mxu0 %v1143
        %v1211 = vpop.f32.mrb[0].mxu0
        %v1212 = vadd.f32 0.0, %v1211
        %v1213 = vpop.f32.mrb[0].mxu0
        %1214 = vdwg.mxu0
        %1216 = vrot.lane.b32.xlu0 %v1212, 96
        %v1217 = vpop.permute.xlu0 %1216
        %v1218 = vld [vmem:[#allocation2] sm:$0xff]
        %v1219 = vld [vmem:[#allocation2 + $0x8] sm:$0xff]
        %v1220 = vld [vmem:[#allocation2 + $0x10] sm:$0xff]
        %v1221 = vld [vmem:[#allocation2 + $0x18] sm:$0xff]
        %v1222 = vld [vmem:[#allocation2 + $0x20] sm:$0xff]
        %v1223 = vld [vmem:[#allocation2 + $0x28] sm:$0xff]
        %v1224 = vld [vmem:[#allocation2 + $0x30] sm:$0xff]
        %v1225 = vld [vmem:[#allocation2 + $0x38] sm:$0xff]
        %vm1226 = vcmask 261120
        %v1227 = vsel %vm1226, %v1212, 0
        %v1230 = vsel %vm1226, %v1218, 0
        %v1233 = vsel %vm1226, %v1219, 0
        %1235 = vmatprep.subr.mxu0 0.0
        %1236 = vmatpush1.xpose.msra.mxu0 %v1230
        %1237 = vmatprep.subr.mxu0 0.0
        %1238 = vmatpush1.xpose.msra.mxu0 %v1233
        %1239 = vmatprep.subr.mxu0 0.0
        %1240 = vmatpush1.xpose.msra.mxu0 0.0
        %1241 = vmatprep.subr.mxu0 0.0
        %1242 = vmatpush1.xpose.msra.mxu0 0.0
        %1243 = vmatprep.subr.mxu0 0.0
        %1244 = vmatpush1.xpose.msra.mxu0 0.0
        %1245 = vmatprep.subr.mxu0 0.0
        %1246 = vmatpush1.xpose.msra.mxu0 0.0
        %1247 = vmatprep.subr.mxu0 0.0
        %1248 = vmatpush1.xpose.msra.mxu0 0.0
        %1249 = vmatprep.subr.mxu0 0.0
        %1250 = vmatpush1.xpose.msra.mxu0 0.0
        %1251 = vmatprep.subr.mxu0 0.0
        %1252 = vmatpush1.xpose.msra.mxu0 0.0
        %1253 = vmatprep.subr.mxu0 0.0
        %1254 = vmatpush1.xpose.msra.mxu0 0.0
        %1255 = vmatprep.subr.mxu0 0.0
        %1256 = vmatpush1.xpose.msra.mxu0 0.0
        %1257 = vmatprep.subr.mxu0 0.0
        %1258 = vmatpush1.xpose.msra.mxu0 0.0
        %1259 = vmatprep.subr.mxu0 0.0
        %1260 = vmatpush1.xpose.msra.mxu0 0.0
        %1261 = vmatprep.subr.mxu0 0.0
        %1262 = vmatpush1.xpose.msra.mxu0 0.0
        %1263 = vmatprep.subr.mxu0 0.0
        %1264 = vmatpush1.xpose.msra.mxu0 0.0
        %1265 = vmatprep.subr.mxu0 0.0
        %1266 = vmatpush1.xpose.msra.mxu0 0.0
        %1267 = vmatprep.subr.mxu0 0.0
        %1268 = vmatpush1.xpose.msra.mxu0 0.0
        %1269 = vmatprep.subr.mxu0 0.0
        %1270 = vmatpush1.xpose.msra.mxu0 0.0
        %1271 = vmatprep.subr.mxu0 0.0
        %1272 = vmatpush1.xpose.msra.mxu0 0.0
        %1273 = vmatprep.subr.mxu0 0.0
        %1274 = vmatpush1.xpose.msra.mxu0 0.0
        %1275 = vmatprep.subr.mxu0 0.0
        %1276 = vmatpush1.xpose.msra.mxu0 0.0
        %1277 = vmatprep.subr.mxu0 0.0
        %1278 = vmatpush1.xpose.msra.mxu0 0.0
        %1279 = vmatprep.subr.mxu0 0.0
        %1280 = vmatpush1.xpose.msra.mxu0 0.0
        %1281 = vmatprep.subr.mxu0 0.0
        %1282 = vmatpush1.xpose.msra.mxu0 0.0
        %1283 = vmatprep.subr.mxu0 0.0
        %1284 = vmatpush1.xpose.msra.mxu0 0.0
        %1285 = vmatprep.subr.mxu0 0.0
        %1286 = vmatpush1.xpose.msra.mxu0 0.0
        %1287 = vmatprep.subr.mxu0 0.0
        %1288 = vmatpush1.xpose.msra.mxu0 0.0
        %1289 = vmatprep.subr.mxu0 0.0
        %1290 = vmatpush1.xpose.msra.mxu0 0.0
        %1291 = vmatprep.subr.mxu0 0.0
        %1292 = vmatpush1.xpose.msra.mxu0 0.0
        %1293 = vmatprep.subr.mxu0 0.0
        %1294 = vmatpush1.xpose.msra.mxu0 0.0
        %1295 = vmatprep.subr.mxu0 0.0
        %1296 = vmatpush1.xpose.msra.mxu0 0.0
        %1297 = vmatprep.subr.mxu0 0.0
        %1298 = vmatpush1.xpose.msra.mxu0 0.0
        %1299 = vmatprep.mubr.f32.mxu0 0.0
        %1300 = vmatmul.mubr.f32.gmra.mrb[0].mxu0 %v1227
        %v1301 = vpop.f32.mrb[0].mxu0
        %v1302 = vadd.f32 0.0, %v1301
        %v1303 = vpop.f32.mrb[0].mxu0
        %1304 = vdwg.mxu0
        %v1305 = vsel %vm1226, %v1217, 0
        %v1308 = vsel %vm1226, %v1220, 0
        %v1311 = vsel %vm1226, %v1221, 0
        %1313 = vmatprep.subr.mxu0 0.0
        %1314 = vmatpush1.xpose.msra.mxu0 %v1308
        %1315 = vmatprep.subr.mxu0 0.0
        %1316 = vmatpush1.xpose.msra.mxu0 %v1311
        %1317 = vmatprep.subr.mxu0 0.0
        %1318 = vmatpush1.xpose.msra.mxu0 0.0
        %1319 = vmatprep.subr.mxu0 0.0
        %1320 = vmatpush1.xpose.msra.mxu0 0.0
        %1321 = vmatprep.subr.mxu0 0.0
        %1322 = vmatpush1.xpose.msra.mxu0 0.0
        %1323 = vmatprep.subr.mxu0 0.0
        %1324 = vmatpush1.xpose.msra.mxu0 0.0
        %1325 = vmatprep.subr.mxu0 0.0
        %1326 = vmatpush1.xpose.msra.mxu0 0.0
        %1327 = vmatprep.subr.mxu0 0.0
        %1328 = vmatpush1.xpose.msra.mxu0 0.0
        %1329 = vmatprep.subr.mxu0 0.0
        %1330 = vmatpush1.xpose.msra.mxu0 0.0
        %1331 = vmatprep.subr.mxu0 0.0
        %1332 = vmatpush1.xpose.msra.mxu0 0.0
        %1333 = vmatprep.subr.mxu0 0.0
        %1334 = vmatpush1.xpose.msra.mxu0 0.0
        %1335 = vmatprep.subr.mxu0 0.0
        %1336 = vmatpush1.xpose.msra.mxu0 0.0
        %1337 = vmatprep.subr.mxu0 0.0
        %1338 = vmatpush1.xpose.msra.mxu0 0.0
        %1339 = vmatprep.subr.mxu0 0.0
        %1340 = vmatpush1.xpose.msra.mxu0 0.0
        %1341 = vmatprep.subr.mxu0 0.0
        %1342 = vmatpush1.xpose.msra.mxu0 0.0
        %1343 = vmatprep.subr.mxu0 0.0
        %1344 = vmatpush1.xpose.msra.mxu0 0.0
        %1345 = vmatprep.subr.mxu0 0.0
        %1346 = vmatpush1.xpose.msra.mxu0 0.0
        %1347 = vmatprep.subr.mxu0 0.0
        %1348 = vmatpush1.xpose.msra.mxu0 0.0
        %1349 = vmatprep.subr.mxu0 0.0
        %1350 = vmatpush1.xpose.msra.mxu0 0.0
        %1351 = vmatprep.subr.mxu0 0.0
        %1352 = vmatpush1.xpose.msra.mxu0 0.0
        %1353 = vmatprep.subr.mxu0 0.0
        %1354 = vmatpush1.xpose.msra.mxu0 0.0
        %1355 = vmatprep.subr.mxu0 0.0
        %1356 = vmatpush1.xpose.msra.mxu0 0.0
        %1357 = vmatprep.subr.mxu0 0.0
        %1358 = vmatpush1.xpose.msra.mxu0 0.0
        %1359 = vmatprep.subr.mxu0 0.0
        %1360 = vmatpush1.xpose.msra.mxu0 0.0
        %1361 = vmatprep.subr.mxu0 0.0
        %1362 = vmatpush1.xpose.msra.mxu0 0.0
        %1363 = vmatprep.subr.mxu0 0.0
        %1364 = vmatpush1.xpose.msra.mxu0 0.0
        %1365 = vmatprep.subr.mxu0 0.0
        %1366 = vmatpush1.xpose.msra.mxu0 0.0
        %1367 = vmatprep.subr.mxu0 0.0
        %1368 = vmatpush1.xpose.msra.mxu0 0.0
        %1369 = vmatprep.subr.mxu0 0.0
        %1370 = vmatpush1.xpose.msra.mxu0 0.0
        %1371 = vmatprep.subr.mxu0 0.0
        %1372 = vmatpush1.xpose.msra.mxu0 0.0
        %1373 = vmatprep.subr.mxu0 0.0
        %1374 = vmatpush1.xpose.msra.mxu0 0.0
        %1375 = vmatprep.subr.mxu0 0.0
        %1376 = vmatpush1.xpose.msra.mxu0 0.0
        %1377 = vmatprep.mubr.f32.mxu0 0.0
        %1378 = vmatmul.mubr.f32.gmra.mrb[0].mxu0 %v1305
        %v1379 = vpop.f32.mrb[0].mxu0
        %v1380 = vadd.f32 0.0, %v1379
        %v1381 = vpop.f32.mrb[0].mxu0
        %1382 = vdwg.mxu0
        %vm1383 = vcmask 130048
        %v1384 = vsel %vm1383, %v1302, -inf
        %1385 = vmax.xlane.f32.xlu0 %v1384
        %v1386 = vpop.xlane.xlu0 %1385
        %v1387 = vsel %vm1383, %v1380, -inf
        %1388 = vmax.xlane.f32.xlu0 %v1387
        %v1389 = vpop.xlane.xlu0 %1388
        %v1390 = vsub.f32 %v1302, %v1386
        %v1391 = vsub.f32 %v1380, %v1389
        %v1392 = vmul.f32 %v1390, 1.442695
        %v1393 = vpow.pop %v1392
        %v1394 = vmul.f32 %v1391, 1.442695
        %v1395 = vpow.pop %v1394
        %v1396 = vsel %vm1383, %v1393, 0.0
        %1397 = vadd.xlane.f32.xlu0 %v1396
        %v1398 = vpop.xlane.xlu0 %1397
        %v1399 = vsel %vm1383, %v1395, 0.0
        %1400 = vadd.xlane.f32.xlu0 %v1399
        %v1401 = vpop.xlane.xlu0 %1400
        %v1402 = vrcp.pop %v1398
        %v1403 = vrcp.pop %v1401
        %v1404 = vmul.f32 %v1398, %v1402
        %v1405 = vmul.f32 %v1401, %v1403
        %v1406 = vsub.f32 2.0, %v1404
        %v1407 = vsub.f32 2.0, %v1405
        %v1408 = vmul.f32 %v1402, %v1406
        %v1409 = vmul.f32 %v1403, %v1407
        %v1411 = vsel %vm1383, %v1393, 0
        %1413 = vmatprep.subr.mxu0 0.0
        %1414 = vmatpush1.msra.mxu0 %v1222
        %1415 = vmatprep.subr.mxu0 0.0
        %1416 = vmatpush1.msra.mxu0 %v1223
        %1417 = vmatprep.subr.mxu0 0.0
        %1418 = vmatpush1.msra.mxu0 0.0
        %1419 = vmatprep.subr.mxu0 0.0
        %1420 = vmatpush1.msra.mxu0 0.0
        %1421 = vmatprep.subr.mxu0 0.0
        %1422 = vmatpush1.msra.mxu0 0.0
        %1423 = vmatprep.subr.mxu0 0.0
        %1424 = vmatpush1.msra.mxu0 0.0
        %1425 = vmatprep.subr.mxu0 0.0
        %1426 = vmatpush1.msra.mxu0 0.0
        %1427 = vmatprep.subr.mxu0 0.0
        %1428 = vmatpush1.msra.mxu0 0.0
        %1429 = vmatprep.subr.mxu0 0.0
        %1430 = vmatpush1.msra.mxu0 0.0
        %1431 = vmatprep.subr.mxu0 0.0
        %1432 = vmatpush1.msra.mxu0 0.0
        %1433 = vmatprep.subr.mxu0 0.0
        %1434 = vmatpush1.msra.mxu0 0.0
        %1435 = vmatprep.subr.mxu0 0.0
        %1436 = vmatpush1.msra.mxu0 0.0
        %1437 = vmatprep.subr.mxu0 0.0
        %1438 = vmatpush1.msra.mxu0 0.0
        %1439 = vmatprep.subr.mxu0 0.0
        %1440 = vmatpush1.msra.mxu0 0.0
        %1441 = vmatprep.subr.mxu0 0.0
        %1442 = vmatpush1.msra.mxu0 0.0
        %1443 = vmatprep.subr.mxu0 0.0
        %1444 = vmatpush1.msra.mxu0 0.0
        %1445 = vmatprep.subr.mxu0 0.0
        %1446 = vmatpush1.msra.mxu0 0.0
        %1447 = vmatprep.subr.mxu0 0.0
        %1448 = vmatpush1.msra.mxu0 0.0
        %1449 = vmatprep.subr.mxu0 0.0
        %1450 = vmatpush1.msra.mxu0 0.0
        %1451 = vmatprep.subr.mxu0 0.0
        %1452 = vmatpush1.msra.mxu0 0.0
        %1453 = vmatprep.subr.mxu0 0.0
        %1454 = vmatpush1.msra.mxu0 0.0
        %1455 = vmatprep.subr.mxu0 0.0
        %1456 = vmatpush1.msra.mxu0 0.0
        %1457 = vmatprep.subr.mxu0 0.0
        %1458 = vmatpush1.msra.mxu0 0.0
        %1459 = vmatprep.subr.mxu0 0.0
        %1460 = vmatpush1.msra.mxu0 0.0
        %1461 = vmatprep.subr.mxu0 0.0
        %1462 = vmatpush1.msra.mxu0 0.0
        %1463 = vmatprep.subr.mxu0 0.0
        %1464 = vmatpush1.msra.mxu0 0.0
        %1465 = vmatprep.subr.mxu0 0.0
        %1466 = vmatpush1.msra.mxu0 0.0
        %1467 = vmatprep.subr.mxu0 0.0
        %1468 = vmatpush1.msra.mxu0 0.0
        %1469 = vmatprep.subr.mxu0 0.0
        %1470 = vmatpush1.msra.mxu0 0.0
        %1471 = vmatprep.subr.mxu0 0.0
        %1472 = vmatpush1.msra.mxu0 0.0
        %1473 = vmatprep.subr.mxu0 0.0
        %1474 = vmatpush1.msra.mxu0 0.0
        %1475 = vmatprep.subr.mxu0 0.0
        %1476 = vmatpush1.msra.mxu0 0.0
        %1477 = vmatprep.mubr.f32.mxu0 0.0
        %1478 = vmatmul.mubr.f32.gmra.mrb[0].mxu0 %v1411
        %v1479 = vpop.f32.mrb[0].mxu0
        %v1480 = vadd.f32 0.0, %v1479
        %v1481 = vpop.f32.mrb[0].mxu0
        %1482 = vdwg.mxu0
        %v1484 = vsel %vm1383, %v1395, 0
        %1486 = vmatprep.subr.mxu0 0.0
        %1487 = vmatpush1.msra.mxu0 %v1224
        %1488 = vmatprep.subr.mxu0 0.0
        %1489 = vmatpush1.msra.mxu0 %v1225
        %1490 = vmatprep.subr.mxu0 0.0
        %1491 = vmatpush1.msra.mxu0 0.0
        %1492 = vmatprep.subr.mxu0 0.0
        %1493 = vmatpush1.msra.mxu0 0.0
        %1494 = vmatprep.subr.mxu0 0.0
        %1495 = vmatpush1.msra.mxu0 0.0
        %1496 = vmatprep.subr.mxu0 0.0
        %1497 = vmatpush1.msra.mxu0 0.0
        %1498 = vmatprep.subr.mxu0 0.0
        %1499 = vmatpush1.msra.mxu0 0.0
        %1500 = vmatprep.subr.mxu0 0.0
        %1501 = vmatpush1.msra.mxu0 0.0
        %1502 = vmatprep.subr.mxu0 0.0
        %1503 = vmatpush1.msra.mxu0 0.0
        %1504 = vmatprep.subr.mxu0 0.0
        %1505 = vmatpush1.msra.mxu0 0.0
        %1506 = vmatprep.subr.mxu0 0.0
        %1507 = vmatpush1.msra.mxu0 0.0
        %1508 = vmatprep.subr.mxu0 0.0
        %1509 = vmatpush1.msra.mxu0 0.0
        %1510 = vmatprep.subr.mxu0 0.0
        %1511 = vmatpush1.msra.mxu0 0.0
        %1512 = vmatprep.subr.mxu0 0.0
        %1513 = vmatpush1.msra.mxu0 0.0
        %1514 = vmatprep.subr.mxu0 0.0
        %1515 = vmatpush1.msra.mxu0 0.0
        %1516 = vmatprep.subr.mxu0 0.0
        %1517 = vmatpush1.msra.mxu0 0.0
        %1518 = vmatprep.subr.mxu0 0.0
        %1519 = vmatpush1.msra.mxu0 0.0
        %1520 = vmatprep.subr.mxu0 0.0
        %1521 = vmatpush1.msra.mxu0 0.0
        %1522 = vmatprep.subr.mxu0 0.0
        %1523 = vmatpush1.msra.mxu0 0.0
        %1524 = vmatprep.subr.mxu0 0.0
        %1525 = vmatpush1.msra.mxu0 0.0
        %1526 = vmatprep.subr.mxu0 0.0
        %1527 = vmatpush1.msra.mxu0 0.0
        %1528 = vmatprep.subr.mxu0 0.0
        %1529 = vmatpush1.msra.mxu0 0.0
        %1530 = vmatprep.subr.mxu0 0.0
        %1531 = vmatpush1.msra.mxu0 0.0
        %1532 = vmatprep.subr.mxu0 0.0
        %1533 = vmatpush1.msra.mxu0 0.0
        %1534 = vmatprep.subr.mxu0 0.0
        %1535 = vmatpush1.msra.mxu0 0.0
        %1536 = vmatprep.subr.mxu0 0.0
        %1537 = vmatpush1.msra.mxu0 0.0
        %1538 = vmatprep.subr.mxu0 0.0
        %1539 = vmatpush1.msra.mxu0 0.0
        %1540 = vmatprep.subr.mxu0 0.0
        %1541 = vmatpush1.msra.mxu0 0.0
        %1542 = vmatprep.subr.mxu0 0.0
        %1543 = vmatpush1.msra.mxu0 0.0
        %1544 = vmatprep.subr.mxu0 0.0
        %1545 = vmatpush1.msra.mxu0 0.0
        %1546 = vmatprep.subr.mxu0 0.0
        %1547 = vmatpush1.msra.mxu0 0.0
        %1548 = vmatprep.subr.mxu0 0.0
        %1549 = vmatpush1.msra.mxu0 0.0
        %1550 = vmatprep.mubr.f32.mxu0 0.0
        %1551 = vmatmul.mubr.f32.gmra.mrb[0].mxu0 %v1484
        %v1552 = vpop.f32.mrb[0].mxu0
        %v1553 = vadd.f32 0.0, %v1552
        %v1554 = vpop.f32.mrb[0].mxu0
        %1555 = vdwg.mxu0
        %v1556 = vmul.f32 %v1480, %v1408
        %v1557 = vmul.f32 %v1553, %v1409
        %1559 = vrot.lane.b32.xlu0 %v1557, 32
        %v1560 = vpop.permute.xlu0 %1559
        %v1562 = vsel %vm1226, %v1556, %v1560
        %v1563 = vld [vmem:[#allocation13] sm:$0xff]
        %v1564 = vld [vmem:[#allocation13 + $0x8] sm:$0xff]
        %v1565 = vld [vmem:[#allocation13 + $0x10] sm:$0xff]
        %v1566 = vld [vmem:[#allocation13 + $0x18] sm:$0xff]
        %v1567 = vld [vmem:[#allocation13 + $0x20] sm:$0xff]
        %v1568 = vld [vmem:[#allocation13 + $0x28] sm:$0xff]
        %v1569 = vld [vmem:[#allocation13 + $0x30] sm:$0xff]
        %v1570 = vld [vmem:[#allocation13 + $0x38] sm:$0xff]
        %v1572 = vsel %vm1118, %v1562, 0
        %1574 = vmatprep.subr.mxu0 0.0
        %1575 = vmatpush1.msra.mxu0 %v1563
        %1576 = vmatprep.subr.mxu0 0.0
        %1577 = vmatpush1.msra.mxu0 %v1564
        %1578 = vmatprep.subr.mxu0 0.0
        %1579 = vmatpush1.msra.mxu0 %v1565
        %1580 = vmatprep.subr.mxu0 0.0
        %1581 = vmatpush1.msra.mxu0 %v1566
        %1582 = vmatprep.subr.mxu0 0.0
        %1583 = vmatpush1.msra.mxu0 %v1567
        %1584 = vmatprep.subr.mxu0 0.0
        %1585 = vmatpush1.msra.mxu0 %v1568
        %1586 = vmatprep.subr.mxu0 0.0
        %1587 = vmatpush1.msra.mxu0 %v1569
        %1588 = vmatprep.subr.mxu0 0.0
        %1589 = vmatpush1.msra.mxu0 %v1570
        %1590 = vmatprep.subr.mxu0 0.0
        %1591 = vmatpush1.msra.mxu0 0.0
        %1592 = vmatprep.subr.mxu0 0.0
        %1593 = vmatpush1.msra.mxu0 0.0
        %1594 = vmatprep.subr.mxu0 0.0
        %1595 = vmatpush1.msra.mxu0 0.0
        %1596 = vmatprep.subr.mxu0 0.0
        %1597 = vmatpush1.msra.mxu0 0.0
        %1598 = vmatprep.subr.mxu0 0.0
        %1599 = vmatpush1.msra.mxu0 0.0
        %1600 = vmatprep.subr.mxu0 0.0
        %1601 = vmatpush1.msra.mxu0 0.0
        %1602 = vmatprep.subr.mxu0 0.0
        %1603 = vmatpush1.msra.mxu0 0.0
        %1604 = vmatprep.subr.mxu0 0.0
        %1605 = vmatpush1.msra.mxu0 0.0
        %1606 = vmatprep.subr.mxu0 0.0
        %1607 = vmatpush1.msra.mxu0 0.0
        %1608 = vmatprep.subr.mxu0 0.0
        %1609 = vmatpush1.msra.mxu0 0.0
        %1610 = vmatprep.subr.mxu0 0.0
        %1611 = vmatpush1.msra.mxu0 0.0
        %1612 = vmatprep.subr.mxu0 0.0
        %1613 = vmatpush1.msra.mxu0 0.0
        %1614 = vmatprep.subr.mxu0 0.0
        %1615 = vmatpush1.msra.mxu0 0.0
        %1616 = vmatprep.subr.mxu0 0.0
        %1617 = vmatpush1.msra.mxu0 0.0
        %1618 = vmatprep.subr.mxu0 0.0
        %1619 = vmatpush1.msra.mxu0 0.0
        %1620 = vmatprep.subr.mxu0 0.0
        %1621 = vmatpush1.msra.mxu0 0.0
        %1622 = vmatprep.subr.mxu0 0.0
        %1623 = vmatpush1.msra.mxu0 0.0
        %1624 = vmatprep.subr.mxu0 0.0
        %1625 = vmatpush1.msra.mxu0 0.0
        %1626 = vmatprep.subr.mxu0 0.0
        %1627 = vmatpush1.msra.mxu0 0.0
        %1628 = vmatprep.subr.mxu0 0.0
        %1629 = vmatpush1.msra.mxu0 0.0
        %1630 = vmatprep.subr.mxu0 0.0
        %1631 = vmatpush1.msra.mxu0 0.0
        %1632 = vmatprep.subr.mxu0 0.0
        %1633 = vmatpush1.msra.mxu0 0.0
        %1634 = vmatprep.subr.mxu0 0.0
        %1635 = vmatpush1.msra.mxu0 0.0
        %1636 = vmatprep.subr.mxu0 0.0
        %1637 = vmatpush1.msra.mxu0 0.0
        %1638 = vmatprep.mubr.f32.mxu0 0.0
        %1639 = vmatmul.mubr.f32.gmra.mrb[0].mxu0 %v1572
        %v1640 = vpop.f32.mrb[0].mxu0
        %v1641 = vadd.f32 0.0, %v1640
        %v1642 = vpop.f32.mrb[0].mxu0
        %1643 = vdwg.mxu0
        %v1644 = vadd.f32 %v1115, %v1641
        %v1645 = vld [vmem:[#allocation15] sm:$0x1]
        %v1647 = vlaneseq
        %v1648 = vshrl.u32 %v1647, 7
        %v1649 = vsub.s32 0, %v1648
        %v1650 = vrot.slane %v1645, %v1649
        %v1652 = vadd.f32 %v1644, %v1650
        %v1653 = vld [vmem:[#allocation16] sm:$0x1]
        %v1654 = vmul.f32 %v1652, %v1652
        %v1655 = vsel %vm1118, %v1654, 0.0
        %1656 = vadd.xlane.f32.xlu0 %v1655
        %v1657 = vpop.xlane.xlu0 %1656
        %v1658 = vmul.f32 %v1657, %v1122
        %v1659 = vadd.f32 %v1658, 1e-05
        %v1660 = vrsqrt.pop %v1659
        %v1661 = vmul.f32 %v1652, %v1660
        %v1663 = vlaneseq
        %v1664 = vshrl.u32 %v1663, 7
        %v1665 = vsub.s32 0, %v1664
        %v1666 = vrot.slane %v1653, %v1665
        %v1668 = vmul.f32 %v1661, %v1666
        %v1669 = vld [vmem:[#allocation18] sm:$0xff]
        %v1670 = vld [vmem:[#allocation18 + $0x8] sm:$0xff]
        %v1671 = vld [vmem:[#allocation18 + $0x10] sm:$0xff]
        %v1672 = vld [vmem:[#allocation18 + $0x18] sm:$0xff]
        %v1673 = vld [vmem:[#allocation18 + $0x20] sm:$0xff]
        %v1674 = vld [vmem:[#allocation18 + $0x28] sm:$0xff]
        %v1675 = vld [vmem:[#allocation18 + $0x30] sm:$0xff]
        %v1676 = vld [vmem:[#allocation18 + $0x38] sm:$0xff]
        %v1678 = vsel %vm1118, %v1668, 0
        %1680 = vmatprep.subr.mxu0 0.0
        %1681 = vmatpush1.msra.mxu0 %v1669
        %1682 = vmatprep.subr.mxu0 0.0
        %1683 = vmatpush1.msra.mxu0 %v1670
        %1684 = vmatprep.subr.mxu0 0.0
        %1685 = vmatpush1.msra.mxu0 %v1671
        %1686 = vmatprep.subr.mxu0 0.0
        %1687 = vmatpush1.msra.mxu0 %v1672
        %1688 = vmatprep.subr.mxu0 0.0
        %1689 = vmatpush1.msra.mxu0 %v1673
        %1690 = vmatprep.subr.mxu0 0.0
        %1691 = vmatpush1.msra.mxu0 %v1674
        %1692 = vmatprep.subr.mxu0 0.0
        %1693 = vmatpush1.msra.mxu0 %v1675
        %1694 = vmatprep.subr.mxu0 0.0
        %1695 = vmatpush1.msra.mxu0 %v1676
        %1696 = vmatprep.subr.mxu0 0.0
        %1697 = vmatpush1.msra.mxu0 0.0
        %1698 = vmatprep.subr.mxu0 0.0
        %1699 = vmatpush1.msra.mxu0 0.0
        %1700 = vmatprep.subr.mxu0 0.0
        %1701 = vmatpush1.msra.mxu0 0.0
        %1702 = vmatprep.subr.mxu0 0.0
        %1703 = vmatpush1.msra.mxu0 0.0
        %1704 = vmatprep.subr.mxu0 0.0
        %1705 = vmatpush1.msra.mxu0 0.0
        %1706 = vmatprep.subr.mxu0 0.0
        %1707 = vmatpush1.msra.mxu0 0.0
        %1708 = vmatprep.subr.mxu0 0.0
        %1709 = vmatpush1.msra.mxu0 0.0
        %1710 = vmatprep.subr.mxu0 0.0
        %1711 = vmatpush1.msra.mxu0 0.0
        %1712 = vmatprep.subr.mxu0 0.0
        %1713 = vmatpush1.msra.mxu0 0.0
        %1714 = vmatprep.subr.mxu0 0.0
        %1715 = vmatpush1.msra.mxu0 0.0
        %1716 = vmatprep.subr.mxu0 0.0
        %1717 = vmatpush1.msra.mxu0 0.0
        %1718 = vmatprep.subr.mxu0 0.0
        %1719 = vmatpush1.msra.mxu0 0.0
        %1720 = vmatprep.subr.mxu0 0.0
        %1721 = vmatpush1.msra.mxu0 0.0
        %1722 = vmatprep.subr.mxu0 0.0
        %1723 = vmatpush1.msra.mxu0 0.0
        %1724 = vmatprep.subr.mxu0 0.0
        %1725 = vmatpush1.msra.mxu0 0.0
        %1726 = vmatprep.subr.mxu0 0.0
        %1727 = vmatpush1.msra.mxu0 0.0
        %1728 = vmatprep.subr.mxu0 0.0
        %1729 = vmatpush1.msra.mxu0 0.0
        %1730 = vmatprep.subr.mxu0 0.0
        %1731 = vmatpush1.msra.mxu0 0.0
        %1732 = vmatprep.subr.mxu0 0.0
        %1733 = vmatpush1.msra.mxu0 0.0
        %1734 = vmatprep.subr.mxu0 0.0
        %1735 = vmatpush1.msra.mxu0 0.0
        %1736 = vmatprep.subr.mxu0 0.0
        %1737 = vmatpush1.msra.mxu0 0.0
        %1738 = vmatprep.subr.mxu0 0.0
        %1739 = vmatpush1.msra.mxu0 0.0
        %1740 = vmatprep.subr.mxu0 0.0
        %1741 = vmatpush1.msra.mxu0 0.0
        %1742 = vmatprep.subr.mxu0 0.0
        %1743 = vmatpush1.msra.mxu0 0.0
        %1744 = vmatprep.mubr.f32.mxu0 0.0
        %1745 = vmatmul.mubr.f32.gmra.mrb[0].mxu0 %v1678
        %v1746 = vpop.f32.mrb[0].mxu0
        %v1747 = vadd.f32 0.0, %v1746
        %v1748 = vpop.f32.mrb[0].mxu0
        %1749 = vdwg.mxu0
        %1751 = vrot.lane.b32.xlu0 %v1747, 96
        %v1752 = vpop.permute.xlu0 %1751
        %v1753 = vld [vmem:[#allocation3] sm:$0xff]
        %v1754 = vld [vmem:[#allocation3 + $0x8] sm:$0xff]
        %v1755 = vld [vmem:[#allocation3 + $0x10] sm:$0xff]
        %v1756 = vld [vmem:[#allocation3 + $0x18] sm:$0xff]
        %v1757 = vsel %vm1226, %v1747, 0
        %v1760 = vsel %vm1226, %v1753, 0
        %1762 = vmatprep.subr.mxu0 0.0
        %1763 = vmatpush1.xpose.msra.mxu0 %v1760
        %1764 = vmatprep.subr.mxu0 0.0
        %1765 = vmatpush1.xpose.msra.mxu0 0.0
        %1766 = vmatprep.subr.mxu0 0.0
        %1767 = vmatpush1.xpose.msra.mxu0 0.0
        %1768 = vmatprep.subr.mxu0 0.0
        %1769 = vmatpush1.xpose.msra.mxu0 0.0
        %1770 = vmatprep.subr.mxu0 0.0
        %1771 = vmatpush1.xpose.msra.mxu0 0.0
        %1772 = vmatprep.subr.mxu0 0.0
        %1773 = vmatpush1.xpose.msra.mxu0 0.0
        %1774 = vmatprep.subr.mxu0 0.0
        %1775 = vmatpush1.xpose.msra.mxu0 0.0
        %1776 = vmatprep.subr.mxu0 0.0
        %1777 = vmatpush1.xpose.msra.mxu0 0.0
        %1778 = vmatprep.subr.mxu0 0.0
        %1779 = vmatpush1.xpose.msra.mxu0 0.0
        %1780 = vmatprep.subr.mxu0 0.0
        %1781 = vmatpush1.xpose.msra.mxu0 0.0
        %1782 = vmatprep.subr.mxu0 0.0
        %1783 = vmatpush1.xpose.msra.mxu0 0.0
        %1784 = vmatprep.subr.mxu0 0.0
        %1785 = vmatpush1.xpose.msra.mxu0 0.0
        %1786 = vmatprep.subr.mxu0 0.0
        %1787 = vmatpush1.xpose.msra.mxu0 0.0
        %1788 = vmatprep.subr.mxu0 0.0
        %1789 = vmatpush1.xpose.msra.mxu0 0.0
        %1790 = vmatprep.subr.mxu0 0.0
        %1791 = vmatpush1.xpose.msra.mxu0 0.0
        %1792 = vmatprep.subr.mxu0 0.0
        %1793 = vmatpush1.xpose.msra.mxu0 0.0
        %1794 = vmatprep.subr.mxu0 0.0
        %1795 = vmatpush1.xpose.msra.mxu0 0.0
        %1796 = vmatprep.subr.mxu0 0.0
        %1797 = vmatpush1.xpose.msra.mxu0 0.0
        %1798 = vmatprep.subr.mxu0 0.0
        %1799 = vmatpush1.xpose.msra.mxu0 0.0
        %1800 = vmatprep.subr.mxu0 0.0
        %1801 = vmatpush1.xpose.msra.mxu0 0.0
        %1802 = vmatprep.subr.mxu0 0.0
        %1803 = vmatpush1.xpose.msra.mxu0 0.0
        %1804 = vmatprep.subr.mxu0 0.0
        %1805 = vmatpush1.xpose.msra.mxu0 0.0
        %1806 = vmatprep.subr.mxu0 0.0
        %1807 = vmatpush1.xpose.msra.mxu0 0.0
        %1808 = vmatprep.subr.mxu0 0.0
        %1809 = vmatpush1.xpose.msra.mxu0 0.0
        %1810 = vmatprep.subr.mxu0 0.0
        %1811 = vmatpush1.xpose.msra.mxu0 0.0
        %1812 = vmatprep.subr.mxu0 0.0
        %1813 = vmatpush1.xpose.msra.mxu0 0.0
        %1814 = vmatprep.subr.mxu0 0.0
        %1815 = vmatpush1.xpose.msra.mxu0 0.0
        %1816 = vmatprep.subr.mxu0 0.0
        %1817 = vmatpush1.xpose.msra.mxu0 0.0
        %1818 = vmatprep.subr.mxu0 0.0
        %1819 = vmatpush1.xpose.msra.mxu0 0.0
        %1820 = vmatprep.subr.mxu0 0.0
        %1821 = vmatpush1.xpose.msra.mxu0 0.0
        %1822 = vmatprep.subr.mxu0 0.0
        %1823 = vmatpush1.xpose.msra.mxu0 0.0
        %1824 = vmatprep.subr.mxu0 0.0
        %1825 = vmatpush1.xpose.msra.mxu0 0.0
        %1826 = vmatprep.mubr.f32.mxu0 0.0
        %1827 = vmatmul.mubr.f32.gmra.mrb[0].mxu0 %v1757
        %v1828 = vpop.f32.mrb[0].mxu0
        %v1829 = vadd.f32 0.0, %v1828
        %v1830 = vpop.f32.mrb[0].mxu0
        %1831 = vdwg.mxu0
        %v1832 = vsel %vm1226, %v1752, 0
        %v1835 = vsel %vm1226, %v1754, 0
        %1837 = vmatprep.subr.mxu0 0.0
        %1838 = vmatpush1.xpose.msra.mxu0 %v1835
        %1839 = vmatprep.subr.mxu0 0.0
        %1840 = vmatpush1.xpose.msra.mxu0 0.0
        %1841 = vmatprep.subr.mxu0 0.0
        %1842 = vmatpush1.xpose.msra.mxu0 0.0
        %1843 = vmatprep.subr.mxu0 0.0
        %1844 = vmatpush1.xpose.msra.mxu0 0.0
        %1845 = vmatprep.subr.mxu0 0.0
        %1846 = vmatpush1.xpose.msra.mxu0 0.0
        %1847 = vmatprep.subr.mxu0 0.0
        %1848 = vmatpush1.xpose.msra.mxu0 0.0
        %1849 = vmatprep.subr.mxu0 0.0
        %1850 = vmatpush1.xpose.msra.mxu0 0.0
        %1851 = vmatprep.subr.mxu0 0.0
        %1852 = vmatpush1.xpose.msra.mxu0 0.0
        %1853 = vmatprep.subr.mxu0 0.0
        %1854 = vmatpush1.xpose.msra.mxu0 0.0
        %1855 = vmatprep.subr.mxu0 0.0
        %1856 = vmatpush1.xpose.msra.mxu0 0.0
        %1857 = vmatprep.subr.mxu0 0.0
        %1858 = vmatpush1.xpose.msra.mxu0 0.0
        %1859 = vmatprep.subr.mxu0 0.0
        %1860 = vmatpush1.xpose.msra.mxu0 0.0
        %1861 = vmatprep.subr.mxu0 0.0
        %1862 = vmatpush1.xpose.msra.mxu0 0.0
        %1863 = vmatprep.subr.mxu0 0.0
        %1864 = vmatpush1.xpose.msra.mxu0 0.0
        %1865 = vmatprep.subr.mxu0 0.0
        %1866 = vmatpush1.xpose.msra.mxu0 0.0
        %1867 = vmatprep.subr.mxu0 0.0
        %1868 = vmatpush1.xpose.msra.mxu0 0.0
        %1869 = vmatprep.subr.mxu0 0.0
        %1870 = vmatpush1.xpose.msra.mxu0 0.0
        %1871 = vmatprep.subr.mxu0 0.0
        %1872 = vmatpush1.xpose.msra.mxu0 0.0
        %1873 = vmatprep.subr.mxu0 0.0
        %1874 = vmatpush1.xpose.msra.mxu0 0.0
        %1875 = vmatprep.subr.mxu0 0.0
        %1876 = vmatpush1.xpose.msra.mxu0 0.0
        %1877 = vmatprep.subr.mxu0 0.0
        %1878 = vmatpush1.xpose.msra.mxu0 0.0
        %1879 = vmatprep.subr.mxu0 0.0
        %1880 = vmatpush1.xpose.msra.mxu0 0.0
        %1881 = vmatprep.subr.mxu0 0.0
        %1882 = vmatpush1.xpose.msra.mxu0 0.0
        %1883 = vmatprep.subr.mxu0 0.0
        %1884 = vmatpush1.xpose.msra.mxu0 0.0
        %1885 = vmatprep.subr.mxu0 0.0
        %1886 = vmatpush1.xpose.msra.mxu0 0.0
        %1887 = vmatprep.subr.mxu0 0.0
        %1888 = vmatpush1.xpose.msra.mxu0 0.0
        %1889 = vmatprep.subr.mxu0 0.0
        %1890 = vmatpush1.xpose.msra.mxu0 0.0
        %1891 = vmatprep.subr.mxu0 0.0
        %1892 = vmatpush1.xpose.msra.mxu0 0.0
        %1893 = vmatprep.subr.mxu0 0.0
        %1894 = vmatpush1.xpose.msra.mxu0 0.0
        %1895 = vmatprep.subr.mxu0 0.0
        %1896 = vmatpush1.xpose.msra.mxu0 0.0
        %1897 = vmatprep.subr.mxu0 0.0
        %1898 = vmatpush1.xpose.msra.mxu0 0.0
        %1899 = vmatprep.subr.mxu0 0.0
        %1900 = vmatpush1.xpose.msra.mxu0 0.0
        %1901 = vmatprep.mubr.f32.mxu0 0.0
        %1902 = vmatmul.mubr.f32.gmra.mrb[0].mxu0 %v1832
        %v1903 = vpop.f32.mrb[0].mxu0
        %v1904 = vadd.f32 0.0, %v1903
        %v1905 = vpop.f32.mrb[0].mxu0
        %1906 = vdwg.mxu0
        %vm1907 = vcmask 64512
        %v1908 = vsel %vm1907, %v1829, -inf
        %1909 = vmax.xlane.f32.xlu0 %v1908
        %v1910 = vpop.xlane.xlu0 %1909
        %v1911 = vsel %vm1907, %v1904, -inf
        %1912 = vmax.xlane.f32.xlu0 %v1911
        %v1913 = vpop.xlane.xlu0 %1912
        %v1914 = vsub.f32 %v1829, %v1910
        %v1915 = vsub.f32 %v1904, %v1913
        %v1916 = vmul.f32 %v1914, 1.442695
        %v1917 = vpow.pop %v1916
        %v1918 = vmul.f32 %v1915, 1.442695
        %v1919 = vpow.pop %v1918
        %v1920 = vsel %vm1907, %v1917, 0.0
        %1921 = vadd.xlane.f32.xlu0 %v1920
        %v1922 = vpop.xlane.xlu0 %1921
        %v1923 = vsel %vm1907, %v1919, 0.0
        %1924 = vadd.xlane.f32.xlu0 %v1923
        %v1925 = vpop.xlane.xlu0 %1924
        %v1926 = vrcp.pop %v1922
        %v1927 = vrcp.pop %v1925
        %v1928 = vmul.f32 %v1922, %v1926
        %v1929 = vmul.f32 %v1925, %v1927
        %v1930 = vsub.f32 2.0, %v1928
        %v1931 = vsub.f32 2.0, %v1929
        %v1932 = vmul.f32 %v1926, %v1930
        %v1933 = vmul.f32 %v1927, %v1931
        %v1935 = vsel %vm1907, %v1917, 0
        %1937 = vmatprep.subr.mxu0 0.0
        %1938 = vmatpush1.msra.mxu0 %v1755
        %1939 = vmatprep.subr.mxu0 0.0
        %1940 = vmatpush1.msra.mxu0 0.0
        %1941 = vmatprep.subr.mxu0 0.0
        %1942 = vmatpush1.msra.mxu0 0.0
        %1943 = vmatprep.subr.mxu0 0.0
        %1944 = vmatpush1.msra.mxu0 0.0
        %1945 = vmatprep.subr.mxu0 0.0
        %1946 = vmatpush1.msra.mxu0 0.0
        %1947 = vmatprep.subr.mxu0 0.0
        %1948 = vmatpush1.msra.mxu0 0.0
        %1949 = vmatprep.subr.mxu0 0.0
        %1950 = vmatpush1.msra.mxu0 0.0
        %1951 = vmatprep.subr.mxu0 0.0
        %1952 = vmatpush1.msra.mxu0 0.0
        %1953 = vmatprep.subr.mxu0 0.0
        %1954 = vmatpush1.msra.mxu0 0.0
        %1955 = vmatprep.subr.mxu0 0.0
        %1956 = vmatpush1.msra.mxu0 0.0
        %1957 = vmatprep.subr.mxu0 0.0
        %1958 = vmatpush1.msra.mxu0 0.0
        %1959 = vmatprep.subr.mxu0 0.0
        %1960 = vmatpush1.msra.mxu0 0.0
        %1961 = vmatprep.subr.mxu0 0.0
        %1962 = vmatpush1.msra.mxu0 0.0
        %1963 = vmatprep.subr.mxu0 0.0
        %1964 = vmatpush1.msra.mxu0 0.0
        %1965 = vmatprep.subr.mxu0 0.0
        %1966 = vmatpush1.msra.mxu0 0.0
        %1967 = vmatprep.subr.mxu0 0.0
        %1968 = vmatpush1.msra.mxu0 0.0
        %1969 = vmatprep.subr.mxu0 0.0
        %1970 = vmatpush1.msra.mxu0 0.0
        %1971 = vmatprep.subr.mxu0 0.0
        %1972 = vmatpush1.msra.mxu0 0.0
        %1973 = vmatprep.subr.mxu0 0.0
        %1974 = vmatpush1.msra.mxu0 0.0
        %1975 = vmatprep.subr.mxu0 0.0
        %1976 = vmatpush1.msra.mxu0 0.0
        %1977 = vmatprep.subr.mxu0 0.0
        %1978 = vmatpush1.msra.mxu0 0.0
        %1979 = vmatprep.subr.mxu0 0.0
        %1980 = vmatpush1.msra.mxu0 0.0
        %1981 = vmatprep.subr.mxu0 0.0
        %1982 = vmatpush1.msra.mxu0 0.0
        %1983 = vmatprep.subr.mxu0 0.0
        %1984 = vmatpush1.msra.mxu0 0.0
        %1985 = vmatprep.subr.mxu0 0.0
        %1986 = vmatpush1.msra.mxu0 0.0
        %1987 = vmatprep.subr.mxu0 0.0
        %1988 = vmatpush1.msra.mxu0 0.0
        %1989 = vmatprep.subr.mxu0 0.0
        %1990 = vmatpush1.msra.mxu0 0.0
        %1991 = vmatprep.subr.mxu0 0.0
        %1992 = vmatpush1.msra.mxu0 0.0
        %1993 = vmatprep.subr.mxu0 0.0
        %1994 = vmatpush1.msra.mxu0 0.0
        %1995 = vmatprep.subr.mxu0 0.0
        %1996 = vmatpush1.msra.mxu0 0.0
        %1997 = vmatprep.subr.mxu0 0.0
        %1998 = vmatpush1.msra.mxu0 0.0
        %1999 = vmatprep.subr.mxu0 0.0
        %2000 = vmatpush1.msra.mxu0 0.0
        %2001 = vmatprep.mubr.f32.mxu0 0.0
        %2002 = vmatmul.mubr.f32.gmra.mrb[0].mxu0 %v1935
        %v2003 = vpop.f32.mrb[0].mxu0
        %v2004 = vadd.f32 0.0, %v2003
        %v2005 = vpop.f32.mrb[0].mxu0
        %2006 = vdwg.mxu0
        %v2008 = vsel %vm1907, %v1919, 0
        %2010 = vmatprep.subr.mxu0 0.0
        %2011 = vmatpush1.msra.mxu0 %v1756
        %2012 = vmatprep.subr.mxu0 0.0
        %2013 = vmatpush1.msra.mxu0 0.0
        %2014 = vmatprep.subr.mxu0 0.0
        %2015 = vmatpush1.msra.mxu0 0.0
        %2016 = vmatprep.subr.mxu0 0.0
        %2017 = vmatpush1.msra.mxu0 0.0
        %2018 = vmatprep.subr.mxu0 0.0
        %2019 = vmatpush1.msra.mxu0 0.0
        %2020 = vmatprep.subr.mxu0 0.0
        %2021 = vmatpush1.msra.mxu0 0.0
        %2022 = vmatprep.subr.mxu0 0.0
        %2023 = vmatpush1.msra.mxu0 0.0
        %2024 = vmatprep.subr.mxu0 0.0
        %2025 = vmatpush1.msra.mxu0 0.0
        %2026 = vmatprep.subr.mxu0 0.0
        %2027 = vmatpush1.msra.mxu0 0.0
        %2028 = vmatprep.subr.mxu0 0.0
        %2029 = vmatpush1.msra.mxu0 0.0
        %2030 = vmatprep.subr.mxu0 0.0
        %2031 = vmatpush1.msra.mxu0 0.0
        %2032 = vmatprep.subr.mxu0 0.0
        %2033 = vmatpush1.msra.mxu0 0.0
        %2034 = vmatprep.subr.mxu0 0.0
        %2035 = vmatpush1.msra.mxu0 0.0
        %2036 = vmatprep.subr.mxu0 0.0
        %2037 = vmatpush1.msra.mxu0 0.0
        %2038 = vmatprep.subr.mxu0 0.0
        %2039 = vmatpush1.msra.mxu0 0.0
        %2040 = vmatprep.subr.mxu0 0.0
        %2041 = vmatpush1.msra.mxu0 0.0
        %2042 = vmatprep.subr.mxu0 0.0
        %2043 = vmatpush1.msra.mxu0 0.0
        %2044 = vmatprep.subr.mxu0 0.0
        %2045 = vmatpush1.msra.mxu0 0.0
        %2046 = vmatprep.subr.mxu0 0.0
        %2047 = vmatpush1.msra.mxu0 0.0
        %2048 = vmatprep.subr.mxu0 0.0
        %2049 = vmatpush1.msra.mxu0 0.0
        %2050 = vmatprep.subr.mxu0 0.0
        %2051 = vmatpush1.msra.mxu0 0.0
        %2052 = vmatprep.subr.mxu0 0.0
        %2053 = vmatpush1.msra.mxu0 0.0
        %2054 = vmatprep.subr.mxu0 0.0
        %2055 = vmatpush1.msra.mxu0 0.0
        %2056 = vmatprep.subr.mxu0 0.0
        %2057 = vmatpush1.msra.mxu0 0.0
        %2058 = vmatprep.subr.mxu0 0.0
        %2059 = vmatpush1.msra.mxu0 0.0
        %2060 = vmatprep.subr.mxu0 0.0
        %2061 = vmatpush1.msra.mxu0 0.0
        %2062 = vmatprep.subr.mxu0 0.0
        %2063 = vmatpush1.msra.mxu0 0.0
        %2064 = vmatprep.subr.mxu0 0.0
        %2065 = vmatpush1.msra.mxu0 0.0
        %2066 = vmatprep.subr.mxu0 0.0
        %2067 = vmatpush1.msra.mxu0 0.0
        %2068 = vmatprep.subr.mxu0 0.0
        %2069 = vmatpush1.msra.mxu0 0.0
        %2070 = vmatprep.subr.mxu0 0.0
        %2071 = vmatpush1.msra.mxu0 0.0
        %2072 = vmatprep.subr.mxu0 0.0
        %2073 = vmatpush1.msra.mxu0 0.0
        %2074 = vmatprep.mubr.f32.mxu0 0.0
        %2075 = vmatmul.mubr.f32.gmra.mrb[0].mxu0 %v2008
        %v2076 = vpop.f32.mrb[0].mxu0
        %v2077 = vadd.f32 0.0, %v2076
        %v2078 = vpop.f32.mrb[0].mxu0
        %2079 = vdwg.mxu0
        %v2080 = vmul.f32 %v2004, %v1932
        %v2081 = vmul.f32 %v2077, %v1933
        %2083 = vrot.lane.b32.xlu0 %v2081, 32
        %v2084 = vpop.permute.xlu0 %2083
        %v2086 = vsel %vm1226, %v2080, %v2084
        %v2087 = vld [vmem:[#allocation21] sm:$0xff]
        %v2088 = vld [vmem:[#allocation21 + $0x8] sm:$0xff]
        %v2089 = vld [vmem:[#allocation21 + $0x10] sm:$0xff]
        %v2090 = vld [vmem:[#allocation21 + $0x18] sm:$0xff]
        %v2091 = vld [vmem:[#allocation21 + $0x20] sm:$0xff]
        %v2092 = vld [vmem:[#allocation21 + $0x28] sm:$0xff]
        %v2093 = vld [vmem:[#allocation21 + $0x30] sm:$0xff]
        %v2094 = vld [vmem:[#allocation21 + $0x38] sm:$0xff]
        %v2096 = vsel %vm1118, %v2086, 0
        %2098 = vmatprep.subr.mxu0 0.0
        %2099 = vmatpush1.msra.mxu0 %v2087
        %2100 = vmatprep.subr.mxu0 0.0
        %2101 = vmatpush1.msra.mxu0 %v2088
        %2102 = vmatprep.subr.mxu0 0.0
        %2103 = vmatpush1.msra.mxu0 %v2089
        %2104 = vmatprep.subr.mxu0 0.0
        %2105 = vmatpush1.msra.mxu0 %v2090
        %2106 = vmatprep.subr.mxu0 0.0
        %2107 = vmatpush1.msra.mxu0 %v2091
        %2108 = vmatprep.subr.mxu0 0.0
        %2109 = vmatpush1.msra.mxu0 %v2092
        %2110 = vmatprep.subr.mxu0 0.0
        %2111 = vmatpush1.msra.mxu0 %v2093
        %2112 = vmatprep.subr.mxu0 0.0
        %2113 = vmatpush1.msra.mxu0 %v2094
        %2114 = vmatprep.subr.mxu0 0.0
        %2115 = vmatpush1.msra.mxu0 0.0
        %2116 = vmatprep.subr.mxu0 0.0
        %2117 = vmatpush1.msra.mxu0 0.0
        %2118 = vmatprep.subr.mxu0 0.0
        %2119 = vmatpush1.msra.mxu0 0.0
        %2120 = vmatprep.subr.mxu0 0.0
        %2121 = vmatpush1.msra.mxu0 0.0
        %2122 = vmatprep.subr.mxu0 0.0
        %2123 = vmatpush1.msra.mxu0 0.0
        %2124 = vmatprep.subr.mxu0 0.0
        %2125 = vmatpush1.msra.mxu0 0.0
        %2126 = vmatprep.subr.mxu0 0.0
        %2127 = vmatpush1.msra.mxu0 0.0
        %2128 = vmatprep.subr.mxu0 0.0
        %2129 = vmatpush1.msra.mxu0 0.0
        %2130 = vmatprep.subr.mxu0 0.0
        %2131 = vmatpush1.msra.mxu0 0.0
        %2132 = vmatprep.subr.mxu0 0.0
        %2133 = vmatpush1.msra.mxu0 0.0
        %2134 = vmatprep.subr.mxu0 0.0
        %2135 = vmatpush1.msra.mxu0 0.0
        %2136 = vmatprep.subr.mxu0 0.0
        %2137 = vmatpush1.msra.mxu0 0.0
        %2138 = vmatprep.subr.mxu0 0.0
        %2139 = vmatpush1.msra.mxu0 0.0
        %2140 = vmatprep.subr.mxu0 0.0
        %2141 = vmatpush1.msra.mxu0 0.0
        %2142 = vmatprep.subr.mxu0 0.0
        %2143 = vmatpush1.msra.mxu0 0.0
        %2144 = vmatprep.subr.mxu0 0.0
        %2145 = vmatpush1.msra.mxu0 0.0
        %2146 = vmatprep.subr.mxu0 0.0
        %2147 = vmatpush1.msra.mxu0 0.0
        %2148 = vmatprep.subr.mxu0 0.0
        %2149 = vmatpush1.msra.mxu0 0.0
        %2150 = vmatprep.subr.mxu0 0.0
        %2151 = vmatpush1.msra.mxu0 0.0
        %2152 = vmatprep.subr.mxu0 0.0
        %2153 = vmatpush1.msra.mxu0 0.0
        %2154 = vmatprep.subr.mxu0 0.0
        %2155 = vmatpush1.msra.mxu0 0.0
        %2156 = vmatprep.subr.mxu0 0.0
        %2157 = vmatpush1.msra.mxu0 0.0
        %2158 = vmatprep.subr.mxu0 0.0
        %2159 = vmatpush1.msra.mxu0 0.0
        %2160 = vmatprep.subr.mxu0 0.0
        %2161 = vmatpush1.msra.mxu0 0.0
        %2162 = vmatprep.mubr.f32.mxu0 0.0
        %2163 = vmatmul.mubr.f32.gmra.mrb[0].mxu0 %v2096
        %v2164 = vpop.f32.mrb[0].mxu0
        %v2165 = vadd.f32 0.0, %v2164
        %v2166 = vpop.f32.mrb[0].mxu0
        %2167 = vdwg.mxu0
        %v2168 = vadd.f32 %v1652, %v2165
        %v2169 = vld [vmem:[#allocation22] sm:$0x1]
        %v2171 = vlaneseq
        %v2172 = vshrl.u32 %v2171, 7
        %v2173 = vsub.s32 0, %v2172
        %v2174 = vrot.slane %v2169, %v2173
        %v2176 = vadd.f32 %v2168, %v2174
        %v2177 = vsel %vm1118, %v2176, 0.0
        %2178 = vadd.xlane.f32.xlu0 %v2177
        %v2179 = vpop.xlane.xlu0 %2178
        %v2180 = vmul.f32 %v2179, %v1122
        %v2181 = vsub.f32 %v2176, %v2180
        %v2182 = vmul.f32 %v2181, %v2181
        %v2183 = vsel %vm1118, %v2182, 0.0
        %2184 = vadd.xlane.f32.xlu0 %v2183
        %v2185 = vpop.xlane.xlu0 %2184
        %v2186 = vmul.f32 %v2185, %v1122
        %v2187 = vadd.f32 %v2186, 1e-05
        %v2188 = vrsqrt.pop %v2187
        %v2189 = vmul.f32 %v2181, %v2188
        %v2190 = vld [vmem:[#allocation24] sm:$0x1]
        %v2192 = vlaneseq
        %v2193 = vshrl.u32 %v2192, 7
        %v2194 = vsub.s32 0, %v2193
        %v2195 = vrot.slane %v2190, %v2194
        %v2197 = vmul.f32 %v2189, %v2195
        %v2198 = vld [vmem:[#allocation25] sm:$0x1]
        %v2200 = vlaneseq
        %v2201 = vshrl.u32 %v2200, 7
        %v2202 = vsub.s32 0, %v2201
        %v2203 = vrot.slane %v2198, %v2202
        %v2205 = vadd.f32 %v2197, %v2203
        %v2206 = vld [vmem:[#allocation27] sm:$0xff]
        %v2207 = vld [vmem:[#allocation27 + $0x8] sm:$0xff]
        %v2208 = vld [vmem:[#allocation27 + $0x10] sm:$0xff]
        %v2209 = vld [vmem:[#allocation27 + $0x18] sm:$0xff]
        %v2210 = vld [vmem:[#allocation27 + $0x20] sm:$0xff]
        %v2211 = vld [vmem:[#allocation27 + $0x28] sm:$0xff]
        %v2212 = vld [vmem:[#allocation27 + $0x30] sm:$0xff]
        %v2213 = vld [vmem:[#allocation27 + $0x38] sm:$0xff]
        %v2214 = vld [vmem:[#allocation27 + $0x40] sm:$0xff]
        %v2215 = vld [vmem:[#allocation27 + $0x48] sm:$0xff]
        %v2216 = vld [vmem:[#allocation27 + $0x50] sm:$0xff]
        %v2217 = vld [vmem:[#allocation27 + $0x58] sm:$0xff]
        %v2218 = vld [vmem:[#allocation27 + $0x60] sm:$0xff]
        %v2219 = vld [vmem:[#allocation27 + $0x68] sm:$0xff]
        %v2220 = vld [vmem:[#allocation27 + $0x70] sm:$0xff]
        %v2221 = vld [vmem:[#allocation27 + $0x78] sm:$0xff]
        %v2222 = vld [vmem:[#allocation27 + $0x80] sm:$0xff]
        %v2223 = vld [vmem:[#allocation27 + $0x88] sm:$0xff]
        %v2224 = vld [vmem:[#allocation27 + $0x90] sm:$0xff]
        %v2225 = vld [vmem:[#allocation27 + $0x98] sm:$0xff]
        %v2226 = vld [vmem:[#allocation27 + $0xa0] sm:$0xff]
        %v2227 = vld [vmem:[#allocation27 + $0xa8] sm:$0xff]
        %v2228 = vld [vmem:[#allocation27 + $0xb0] sm:$0xff]
        %v2229 = vld [vmem:[#allocation27 + $0xb8] sm:$0xff]
        %v2230 = vld [vmem:[#allocation27 + $0xc0] sm:$0xff]
        %v2231 = vld [vmem:[#allocation27 + $0xc8] sm:$0xff]
        %v2232 = vld [vmem:[#allocation27 + $0xd0] sm:$0xff]
        %v2233 = vld [vmem:[#allocation27 + $0xd8] sm:$0xff]
        %v2234 = vld [vmem:[#allocation27 + $0xe0] sm:$0xff]
        %v2235 = vld [vmem:[#allocation27 + $0xe8] sm:$0xff]
        %v2236 = vld [vmem:[#allocation27 + $0xf0] sm:$0xff]
        %v2237 = vld [vmem:[#allocation27 + $0xf8] sm:$0xff]
        %v2238 = vld [vmem:[#allocation28] sm:$0xf]
        %v2240 = vlaneseq
        %v2241 = vshrl.u32 %v2240, 7
        %v2242 = vsub.s32 0, %v2241
        %v2243 = vrot.slane %v2238, %v2242
        %v2244 = vlaneseq
        %v2245 = vshrl.u32 %v2244, 7
        %v2246 = vsub.s32 1, %v2245
        %v2247 = vrot.slane %v2238, %v2246
        %v2248 = vlaneseq
        %v2249 = vshrl.u32 %v2248, 7
        %v2250 = vsub.s32 2, %v2249
        %v2251 = vrot.slane %v2238, %v2250
        %v2252 = vlaneseq
        %v2253 = vshrl.u32 %v2252, 7
        %v2254 = vsub.s32 3, %v2253
        %v2255 = vrot.slane %v2238, %v2254
        %v2261 = vsel %vm1118, %v2205, 0
        %2263 = vmatprep.subr.mxu0 %v2207
        %2264 = vmatpush1.msra.mxu0 %v2206
        %2265 = vmatprep.subr.mxu0 %v2211
        %2266 = vmatpush1.msra.mxu0 %v2210
        %2267 = vmatprep.subr.mxu0 %v2215
        %2268 = vmatpush1.msra.mxu0 %v2214
        %2269 = vmatprep.subr.mxu0 %v2219
        %2270 = vmatpush1.msra.mxu0 %v2218
        %2271 = vmatprep.subr.mxu0 %v2223
        %2272 = vmatpush1.msra.mxu0 %v2222
        %2273 = vmatprep.subr.mxu0 %v2227
        %2274 = vmatpush1.msra.mxu0 %v2226
        %2275 = vmatprep.subr.mxu0 %v2231
        %2276 = vmatpush1.msra.mxu0 %v2230
        %2277 = vmatprep.subr.mxu0 %v2235
        %2278 = vmatpush1.msra.mxu0 %v2234
        %2279 = vmatprep.subr.mxu0 0.0
        %2280 = vmatpush1.msra.mxu0 0.0
        %2281 = vmatprep.subr.mxu0 0.0
        %2282 = vmatpush1.msra.mxu0 0.0
        %2283 = vmatprep.subr.mxu0 0.0
        %2284 = vmatpush1.msra.mxu0 0.0
        %2285 = vmatprep.subr.mxu0 0.0
        %2286 = vmatpush1.msra.mxu0 0.0
        %2287 = vmatprep.subr.mxu0 0.0
        %2288 = vmatpush1.msra.mxu0 0.0
        %2289 = vmatprep.subr.mxu0 0.0
        %2290 = vmatpush1.msra.mxu0 0.0
        %2291 = vmatprep.subr.mxu0 0.0
        %2292 = vmatpush1.msra.mxu0 0.0
        %2293 = vmatprep.subr.mxu0 0.0
        %2294 = vmatpush1.msra.mxu0 0.0
        %2295 = vmatprep.subr.mxu0 0.0
        %2296 = vmatpush1.msra.mxu0 0.0
        %2297 = vmatprep.subr.mxu0 0.0
        %2298 = vmatpush1.msra.mxu0 0.0
        %2299 = vmatprep.subr.mxu0 0.0
        %2300 = vmatpush1.msra.mxu0 0.0
        %2301 = vmatprep.subr.mxu0 0.0
        %2302 = vmatpush1.msra.mxu0 0.0
        %2303 = vmatprep.subr.mxu0 0.0
        %2304 = vmatpush1.msra.mxu0 0.0
        %2305 = vmatprep.subr.mxu0 0.0
        %2306 = vmatpush1.msra.mxu0 0.0
        %2307 = vmatprep.subr.mxu0 0.0
        %2308 = vmatpush1.msra.mxu0 0.0
        %2309 = vmatprep.subr.mxu0 0.0
        %2310 = vmatpush1.msra.mxu0 0.0
        %2311 = vmatprep.subr.mxu0 0.0
        %2312 = vmatpush1.msra.mxu0 0.0
        %2313 = vmatprep.subr.mxu0 0.0
        %2314 = vmatpush1.msra.mxu0 0.0
        %2315 = vmatprep.subr.mxu0 0.0
        %2316 = vmatpush1.msra.mxu0 0.0
        %2317 = vmatprep.subr.mxu0 0.0
        %2318 = vmatpush1.msra.mxu0 0.0
        %2319 = vmatprep.subr.mxu0 0.0
        %2320 = vmatpush1.msra.mxu0 0.0
        %2321 = vmatprep.subr.mxu0 0.0
        %2322 = vmatpush1.msra.mxu0 0.0
        %2323 = vmatprep.subr.mxu0 0.0
        %2324 = vmatpush1.msra.mxu0 0.0
        %2325 = vmatprep.subr.mxu0 0.0
        %2326 = vmatpush1.msra.mxu0 0.0
        %2327 = vmatprep.mubr.f32.mxu0 0.0
        %2328 = vmatmul.mubr.f32.gmra.mrb[0].mxu0 %v2261
        %v2329 = vpop.f32.mrb[0].mxu0
        %v2330 = vadd.f32 %v2243, %v2329
        %v2331 = vpop.f32.mrb[0].mxu0
        %v2332 = vadd.f32 %v2247, %v2331
        %2333 = vdwg.mxu0
        %2334 = vmatprep.subr.mxu0 %v2209
        %2335 = vmatpush1.msra.mxu0 %v2208
        %2336 = vmatprep.subr.mxu0 %v2213
        %2337 = vmatpush1.msra.mxu0 %v2212
        %2338 = vmatprep.subr.mxu0 %v2217
        %2339 = vmatpush1.msra.mxu0 %v2216
        %2340 = vmatprep.subr.mxu0 %v2221
        %2341 = vmatpush1.msra.mxu0 %v2220
        %2342 = vmatprep.subr.mxu0 %v2225
        %2343 = vmatpush1.msra.mxu0 %v2224
        %2344 = vmatprep.subr.mxu0 %v2229
        %2345 = vmatpush1.msra.mxu0 %v2228
        %2346 = vmatprep.subr.mxu0 %v2233
        %2347 = vmatpush1.msra.mxu0 %v2232
        %2348 = vmatprep.subr.mxu0 %v2237
        %2349 = vmatpush1.msra.mxu0 %v2236
        %2350 = vmatprep.subr.mxu0 0.0
        %2351 = vmatpush1.msra.mxu0 0.0
        %2352 = vmatprep.subr.mxu0 0.0
        %2353 = vmatpush1.msra.mxu0 0.0
        %2354 = vmatprep.subr.mxu0 0.0
        %2355 = vmatpush1.msra.mxu0 0.0
        %2356 = vmatprep.subr.mxu0 0.0
        %2357 = vmatpush1.msra.mxu0 0.0
        %2358 = vmatprep.subr.mxu0 0.0
        %2359 = vmatpush1.msra.mxu0 0.0
        %2360 = vmatprep.subr.mxu0 0.0
        %2361 = vmatpush1.msra.mxu0 0.0
        %2362 = vmatprep.subr.mxu0 0.0
        %2363 = vmatpush1.msra.mxu0 0.0
        %2364 = vmatprep.subr.mxu0 0.0
        %2365 = vmatpush1.msra.mxu0 0.0
        %2366 = vmatprep.subr.mxu0 0.0
        %2367 = vmatpush1.msra.mxu0 0.0
        %2368 = vmatprep.subr.mxu0 0.0
        %2369 = vmatpush1.msra.mxu0 0.0
        %2370 = vmatprep.subr.mxu0 0.0
        %2371 = vmatpush1.msra.mxu0 0.0
        %2372 = vmatprep.subr.mxu0 0.0
        %2373 = vmatpush1.msra.mxu0 0.0
        %2374 = vmatprep.subr.mxu0 0.0
        %2375 = vmatpush1.msra.mxu0 0.0
        %2376 = vmatprep.subr.mxu0 0.0
        %2377 = vmatpush1.msra.mxu0 0.0
        %2378 = vmatprep.subr.mxu0 0.0
        %2379 = vmatpush1.msra.mxu0 0.0
        %2380 = vmatprep.subr.mxu0 0.0
        %2381 = vmatpush1.msra.mxu0 0.0
        %2382 = vmatprep.subr.mxu0 0.0
        %2383 = vmatpush1.msra.mxu0 0.0
        %2384 = vmatprep.subr.mxu0 0.0
        %2385 = vmatpush1.msra.mxu0 0.0
        %2386 = vmatprep.subr.mxu0 0.0
        %2387 = vmatpush1.msra.mxu0 0.0
        %2388 = vmatprep.subr.mxu0 0.0
        %2389 = vmatpush1.msra.mxu0 0.0
        %2390 = vmatprep.subr.mxu0 0.0
        %2391 = vmatpush1.msra.mxu0 0.0
        %2392 = vmatprep.subr.mxu0 0.0
        %2393 = vmatpush1.msra.mxu0 0.0
        %2394 = vmatprep.subr.mxu0 0.0
        %2395 = vmatpush1.msra.mxu0 0.0
        %2396 = vmatprep.subr.mxu0 0.0
        %2397 = vmatpush1.msra.mxu0 0.0
        %2398 = vmatprep.mubr.f32.mxu0 0.0
        %2399 = vmatmul.mubr.f32.gmra.mrb[0].mxu0 %v2261
        %v2400 = vpop.f32.mrb[0].mxu0
        %v2401 = vadd.f32 %v2251, %v2400
        %v2402 = vpop.f32.mrb[0].mxu0
        %v2403 = vadd.f32 %v2255, %v2402
        %2404 = vdwg.mxu0
        %v2405 = vmul.f32 %v2401, 0.5
        %v2406 = vmul.f32 %v2403, 0.5
        %v2407 = vmul.f32 %v2401, 0.70710677
        %v2408 = vmul.f32 %v2403, 0.70710677
        %vm2409 = vcmp.lt.f32.partialorder %v2407, 0.0
        %vm2410 = vcmp.lt.f32.partialorder %v2408, 0.0
        %v2411 = vsel %vm2409, -1.0, 1.0
        %v2412 = vsel %vm2410, -1.0, 1.0
        %v2413 = vand.u32 2147483647, %v2407
        %v2414 = vand.u32 2147483647, %v2408
        %v2415 = vmul.f32 %v2413, 0.3275911
        %v2416 = vmul.f32 %v2414, 0.3275911
        %v2417 = vadd.f32 %v2415, 1.0
        %v2418 = vadd.f32 %v2416, 1.0
        %v2419 = vrcp.pop %v2417
        %v2420 = vrcp.pop %v2418
        %v2421 = vmul.f32 %v2417, %v2419
        %v2422 = vmul.f32 %v2418, %v2420
        %v2423 = vsub.f32 2.0, %v2421
        %v2424 = vsub.f32 2.0, %v2422
        %v2425 = vmul.f32 %v2419, %v2423
        %v2426 = vmul.f32 %v2420, %v2424
        %v2427 = vmul.f32 %v2425, 1.0614054
        %v2428 = vmul.f32 %v2426, 1.0614054
        %v2429 = vadd.f32 %v2427, -1.4531521
        %v2430 = vadd.f32 %v2428, -1.4531521
        %v2431 = vmul.f32 %v2429, %v2425
        %v2432 = vmul.f32 %v2430, %v2426
        %v2433 = vadd.f32 %v2431, 1.4214138
        %v2434 = vadd.f32 %v2432, 1.4214138
        %v2435 = vmul.f32 %v2433, %v2425
        %v2436 = vmul.f32 %v2434, %v2426
        %v2437 = vadd.f32 %v2435, -0.28449672
        %v2438 = vadd.f32 %v2436, -0.28449672
        %v2439 = vmul.f32 %v2437, %v2425
        %v2440 = vmul.f32 %v2438, %v2426
        %v2441 = vadd.f32 %v2439, 0.2548296
        %v2442 = vadd.f32 %v2440, 0.2548296
        %v2443 = vmul.f32 %v2441, %v2425
        %v2444 = vmul.f32 %v2442, %v2426
        %v2445 = vsub.f32 0.0, %v2413
        %v2446 = vsub.f32 0.0, %v2414
        %v2447 = vmul.f32 %v2445, %v2413
        %v2448 = vmul.f32 %v2446, %v2414
        %v2449 = vmul.f32 %v2447, 1.442695
        %v2450 = vpow.pop %v2449
        %v2451 = vmul.f32 %v2448, 1.442695
        %v2452 = vpow.pop %v2451
        %v2453 = vmul.f32 %v2443, %v2450
        %v2454 = vmul.f32 %v2444, %v2452
        %v2455 = vsub.f32 1.0, %v2453
        %v2456 = vsub.f32 1.0, %v2454
        %v2457 = vmul.f32 %v2411, %v2455
        %v2458 = vmul.f32 %v2412, %v2456
        %v2459 = vadd.f32 %v2457, 1.0
        %v2460 = vadd.f32 %v2458, 1.0
        %v2461 = vmul.f32 %v2405, %v2459
        %v2462 = vmul.f32 %v2406, %v2460
        %v2463 = vmul.f32 %v2330, %v2461
        %v2464 = vmul.f32 %v2332, %v2462
        %v2465 = vld [vmem:[#allocation30] sm:$0xff]
        %v2466 = vld [vmem:[#allocation30 + $0x8] sm:$0xff]
        %v2467 = vld [vmem:[#allocation30 + $0x10] sm:$0xff]
        %v2468 = vld [vmem:[#allocation30 + $0x18] sm:$0xff]
        %v2469 = vld [vmem:[#allocation30 + $0x20] sm:$0xff]
        %v2470 = vld [vmem:[#allocation30 + $0x28] sm:$0xff]
        %v2471 = vld [vmem:[#allocation30 + $0x30] sm:$0xff]
        %v2472 = vld [vmem:[#allocation30 + $0x38] sm:$0xff]
        %v2473 = vld [vmem:[#allocation30 + $0x40] sm:$0xff]
        %v2474 = vld [vmem:[#allocation30 + $0x48] sm:$0xff]
        %v2475 = vld [vmem:[#allocation30 + $0x50] sm:$0xff]
        %v2476 = vld [vmem:[#allocation30 + $0x58] sm:$0xff]
        %v2477 = vld [vmem:[#allocation30 + $0x60] sm:$0xff]
        %v2478 = vld [vmem:[#allocation30 + $0x68] sm:$0xff]
        %v2479 = vld [vmem:[#allocation30 + $0x70] sm:$0xff]
        %v2480 = vld [vmem:[#allocation30 + $0x78] sm:$0xff]
        %v2481 = vld [vmem:[#allocation30 + $0x80] sm:$0xff]
        %v2482 = vld [vmem:[#allocation30 + $0x88] sm:$0xff]
        %v2483 = vld [vmem:[#allocation30 + $0x90] sm:$0xff]
        %v2484 = vld [vmem:[#allocation30 + $0x98] sm:$0xff]
        %v2485 = vld [vmem:[#allocation30 + $0xa0] sm:$0xff]
        %v2486 = vld [vmem:[#allocation30 + $0xa8] sm:$0xff]
        %v2487 = vld [vmem:[#allocation30 + $0xb0] sm:$0xff]
        %v2488 = vld [vmem:[#allocation30 + $0xb8] sm:$0xff]
        %v2489 = vld [vmem:[#allocation30 + $0xc0] sm:$0xff]
        %v2490 = vld [vmem:[#allocation30 + $0xc8] sm:$0xff]
        %v2491 = vld [vmem:[#allocation30 + $0xd0] sm:$0xff]
        %v2492 = vld [vmem:[#allocation30 + $0xd8] sm:$0xff]
        %v2493 = vld [vmem:[#allocation30 + $0xe0] sm:$0xff]
        %v2494 = vld [vmem:[#allocation30 + $0xe8] sm:$0xff]
        %v2495 = vld [vmem:[#allocation30 + $0xf0] sm:$0xff]
        %v2496 = vld [vmem:[#allocation30 + $0xf8] sm:$0xff]
        %v2497 = vld [vmem:[#allocation31] sm:$0x1]
        %v2499 = vlaneseq
        %v2500 = vshrl.u32 %v2499, 7
        %v2501 = vsub.s32 0, %v2500
        %v2502 = vrot.slane %v2497, %v2501
        %2504 = vmatprep.subr.mxu0 0.0
        %2505 = vmatpush1.msra.mxu0 %v2465
        %2506 = vmatprep.subr.mxu0 0.0
        %2507 = vmatpush1.msra.mxu0 %v2466
        %2508 = vmatprep.subr.mxu0 0.0
        %2509 = vmatpush1.msra.mxu0 %v2467
        %2510 = vmatprep.subr.mxu0 0.0
        %2511 = vmatpush1.msra.mxu0 %v2468
        %2512 = vmatprep.subr.mxu0 0.0
        %2513 = vmatpush1.msra.mxu0 %v2469
        %2514 = vmatprep.subr.mxu0 0.0
        %2515 = vmatpush1.msra.mxu0 %v2470
        %2516 = vmatprep.subr.mxu0 0.0
        %2517 = vmatpush1.msra.mxu0 %v2471
        %2518 = vmatprep.subr.mxu0 0.0
        %2519 = vmatpush1.msra.mxu0 %v2472
        %2520 = vmatprep.subr.mxu0 0.0
        %2521 = vmatpush1.msra.mxu0 %v2473
        %2522 = vmatprep.subr.mxu0 0.0
        %2523 = vmatpush1.msra.mxu0 %v2474
        %2524 = vmatprep.subr.mxu0 0.0
        %2525 = vmatpush1.msra.mxu0 %v2475
        %2526 = vmatprep.subr.mxu0 0.0
        %2527 = vmatpush1.msra.mxu0 %v2476
        %2528 = vmatprep.subr.mxu0 0.0
        %2529 = vmatpush1.msra.mxu0 %v2477
        %2530 = vmatprep.subr.mxu0 0.0
        %2531 = vmatpush1.msra.mxu0 %v2478
        %2532 = vmatprep.subr.mxu0 0.0
        %2533 = vmatpush1.msra.mxu0 %v2479
        %2534 = vmatprep.subr.mxu0 0.0
        %2535 = vmatpush1.msra.mxu0 %v2480
        %2536 = vmatprep.subr.mxu0 0.0
        %2537 = vmatpush1.msra.mxu0 %v2481
        %2538 = vmatprep.subr.mxu0 0.0
        %2539 = vmatpush1.msra.mxu0 %v2482
        %2540 = vmatprep.subr.mxu0 0.0
        %2541 = vmatpush1.msra.mxu0 %v2483
        %2542 = vmatprep.subr.mxu0 0.0
        %2543 = vmatpush1.msra.mxu0 %v2484
        %2544 = vmatprep.subr.mxu0 0.0
        %2545 = vmatpush1.msra.mxu0 %v2485
        %2546 = vmatprep.subr.mxu0 0.0
        %2547 = vmatpush1.msra.mxu0 %v2486
        %2548 = vmatprep.subr.mxu0 0.0
        %2549 = vmatpush1.msra.mxu0 %v2487
        %2550 = vmatprep.subr.mxu0 0.0
        %2551 = vmatpush1.msra.mxu0 %v2488
        %2552 = vmatprep.subr.mxu0 0.0
        %2553 = vmatpush1.msra.mxu0 %v2489
        %2554 = vmatprep.subr.mxu0 0.0
        %2555 = vmatpush1.msra.mxu0 %v2490
        %2556 = vmatprep.subr.mxu0 0.0
        %2557 = vmatpush1.msra.mxu0 %v2491
        %2558 = vmatprep.subr.mxu0 0.0
        %2559 = vmatpush1.msra.mxu0 %v2492
        %2560 = vmatprep.subr.mxu0 0.0
        %2561 = vmatpush1.msra.mxu0 %v2493
        %2562 = vmatprep.subr.mxu0 0.0
        %2563 = vmatpush1.msra.mxu0 %v2494
        %2564 = vmatprep.subr.mxu0 0.0
        %2565 = vmatpush1.msra.mxu0 %v2495
        %2566 = vmatprep.subr.mxu0 0.0
        %2567 = vmatpush1.msra.mxu0 %v2496
        %2568 = vmatprep.mubr.f32.mxu0 %v2464
        %2569 = vmatmul.mubr.f32.gmra.mrb[0].mxu0 %v2463
        %v2570 = vpop.f32.mrb[0].mxu0
        %v2571 = vadd.f32 %v2502, %v2570
        %v2572 = vpop.f32.mrb[0].mxu0
        %2573 = vdwg.mxu0
        %v2574 = vadd.f32 %v2176, %v2571
        %2575 = vst.msk [vmem:[%s860] sm:$0xff] %vm1118, %v2574
        %s2576 = sand.u32 %s456, 1
        %s2577 = scalar_lea.sflag [#allocation6], %s2576
        %s2578 = sand.u32 %s456, 1
        %s2579 = smul.addr %s2578, 8
        %s2580 = scalar_lea.vmem [#allocation33], %s2579
        // Predicated region
        $region169: #{tpu_custom_call.1} parent=91 // pred_check
          %p2581 = pneg %p466
        $region170: #{tpu_custom_call.1} parent=91 // pred_check_branch
          %2583 = sbr.rel (%p2581) target = $region172
        $region171: #{tpu_custom_call.1} parent=91 // pred_region
          %s2585 = ssub.s32 128, 128
          %2586 = vsyncadd %s2577, %s2585
          %s2587 = smul.addr %s50, 2
          %s2588 = sadd.s32 %s51, %s2587
          %s2589 = smul.addr %s2588, 128
          %s2590 = scalar_lea.hbm %s18, %s2589
          %s2592 = sshll.u32 %s2580, 4
          %s2593 = int_to_ptr.vmem [resolvable:$true] %s2592
          %2595 = dma.vmem_to_hbm [thread:$0]  %s2593, 128, %s2590, %s2577
        $region172: #{tpu_custom_call.1} parent=91 // pred_fallthru
          _
      $region92: #{tpu_custom_call.1} parent=5 // pred_fallthru
        _
      %p2596 = scmp.le.s32.totalorder 2, %s41
      // Predicated region
      $region173: #{tpu_custom_call.1} parent=5 // pred_check
        %p2597 = pneg %p2596
      $region174: #{tpu_custom_call.1} parent=5 // pred_check_branch
        %2599 = sbr.rel (%p2597) target = $region176
      $region175: #{tpu_custom_call.1} parent=5 // pred_region
        %s2600 = ssub.s32 %s41, 2
        // Predicated region
        $region177: #{tpu_custom_call.1} parent=175 // pred_check
          %p2601 = pneg %p472
        $region178: #{tpu_custom_call.1} parent=175 // pred_check_branch
          %2603 = sbr.rel (%p2601) target = $region180
        $region179: #{tpu_custom_call.1} parent=175 // pred_region
          %s2604 = sand.u32 %s457, 1
          %s2605 = scalar_lea.sflag [#allocation6], %s2604
          %s2606 = sand.u32 %s457, 1
          %s2607 = smul.addr %s2606, 8
          %s2608 = scalar_lea.vmem [#allocation33], %s2607
          %2609 = dma.done %s2605, 128
        $region180: #{tpu_custom_call.1} parent=175 // pred_fallthru
          _
      $region176: #{tpu_custom_call.1} parent=5 // pred_fallthru
        _
    $region6: #{tpu_custom_call.1} parent=1 // loop_footer
      %s45 = sadd.s32 1, %s41
    $region7: #{tpu_custom_call.1} parent=1 // loop_footer_branch
      %40 = sbr.rel target = $region3
    $region8: #{tpu_custom_call.1} parent=1 // loop_exit
      _
    %2610 = vsyncpa [#allocation5], 1
    %s2611 = scalar_lea.sflag [#allocation5], 1
    %2612 = vsyncpa %s2611, 1
    %2613 = vsyncpa [#allocation8], 1
    %s2614 = scalar_lea.sflag [#allocation8], 1
    %2615 = vsyncpa %s2614, 1
    %2616 = vsyncpa [#allocation11], 1
    %2617 = vsyncpa [#allocation14], 1
    %2618 = vsyncpa [#allocation17], 1
    %2619 = vsyncpa [#allocation20], 1
    %2620 = vsyncpa [#allocation23], 1
    %2621 = vsyncpa [#allocation26], 1
    %2622 = vsyncpa [#allocation29], 1
    %2623 = vsyncpa [#allocation32], 1
    %2624 = vsyncpa [#allocation6], 1
    %s2625 = scalar_lea.sflag [#allocation6], 1
    %2626 = vsyncpa %s2625, 1

</llo_original>
